<compile_context>
chip_gen: v7x
topology: tpu7x:2x2x1
jax: 0.10.0
libtpu: 0.0.40
codegen_flags: <defaults>
</compile_context>

<pallas_src>
import numpy as np
import jax
import jax.numpy as jnp
from jax import lax
from jax.experimental import pallas as pl
from jax.experimental.pallas import tpu as pltpu

# Small, self-consistent sizes.
B, T, V, E, H = 2, 8, 16, 32, 32


def gains_kernel(x_ids_ref, y_ids_ref,
                 enc_emb_ref, dec_emb_ref,
                 w_ih_ref, b_ih_ref, enc_w_hh_ref,
                 mlp_w_ref, mlp_b_ref,
                 dec_w_hc_ref, w_c_x_ref, dec_w_o_ref, dec_b_o_ref,
                 attn_bias_ref,
                 pred_ref, dec_out_ref, seq_ref):
    """Fused GAINS forward: embed + encoder LSTM + value MLP + attn decoder."""
    f32 = jnp.float32

    # ------------- Embedding gather, fused in-kernel (one-hot on the MXU) ----
    # ids are passed t-major as (T*B, 1) int32: row r = t*B + b.
    v_iota = lax.broadcasted_iota(jnp.int32, (T * B, V), 1)
    oh_x = (x_ids_ref[...] == v_iota).astype(f32)                  # (T*B, V)
    oh_y = (y_ids_ref[...] == v_iota).astype(f32)                  # (T*B, V)
    x_emb = jnp.dot(oh_x, enc_emb_ref[...], preferred_element_type=f32)
    y_emb = jnp.dot(oh_y, dec_emb_ref[...], preferred_element_type=f32)

    # ------------- Fused encoder+decoder input projections --------------------
    # [x_emb; y_emb] (2*T*B, E) x [enc_W_ih | dec_W_ih] (E, 8H): one MXU push.
    xy_emb = jnp.concatenate([x_emb, y_emb], axis=0)               # (2TB, E)
    proj = (jnp.dot(xy_emb, w_ih_ref[...], preferred_element_type=f32)
            + b_ih_ref[...])                                       # (2TB, 8H)
    x_proj = proj[:T * B, :4 * H]                                  # (TB, 4H)
    y_proj = proj[T * B:, 4 * H:]                                  # (TB, 4H)

    # ------------------------------ Encoder ----------------------------------
    # Gate order [i, f, o | g]: one sigmoid on (B,3H), one tanh on (B,H).
    enc_w_hh = enc_w_hh_ref[...]                                   # (H, 4H)
    h = jnp.zeros((B, H), f32)
    c = jnp.zeros((B, H), f32)
    acc = jnp.zeros((B, H), f32)
    enc_h = []
    for t in range(T):                                             # static unroll
        gates = x_proj[t * B:(t + 1) * B, :] + jnp.dot(
            h, enc_w_hh, preferred_element_type=f32)               # (B, 4H)
        ifo = jax.nn.sigmoid(gates[:, :3 * H])
        g = jnp.tanh(gates[:, 3 * H:])
        c = ifo[:, H:2 * H] * c + ifo[:, :H] * g
        h = ifo[:, 2 * H:3 * H] * jnp.tanh(c)                      # (B, H)
        enc_h.append(h)
        acc = acc + h

    # feat_emb = F.normalize(mean_t(h_t), p=2, dim=-1)
    mean_h = acc * (1.0 / T)
    sumsq = jnp.sum(mean_h * mean_h, axis=-1, keepdims=True)
    feat = mean_h * lax.rsqrt(jnp.maximum(sumsq, 1e-24))           # (B, H)

    # predict_value = sigmoid(Linear(feat_emb))
    pred_ref[...] = jax.nn.sigmoid(
        jnp.dot(feat, mlp_w_ref[...], preferred_element_type=f32)
        + mlp_b_ref[...])                                          # (B, 1)

    # Encoder output slab (T*B, H), row t*B+b, built once (no (B,T,H) stack).
    enc_all = jnp.concatenate(enc_h, axis=0)                       # (T*B, H)
    enc_allT = enc_all.T                                           # (H, T*B)
    # Fold ctx @ W_c_x into a pre-loop projection of the encoder slab.
    enc_proj = jnp.dot(enc_all, w_c_x_ref[...],
                       preferred_element_type=f32)                 # (T*B, H)
    # Fused per-step RHS: [W_hh | W_c_h | enc^T]  ->  (H, 5H + T*B)
    w_step = jnp.concatenate([dec_w_hc_ref[...], enc_allT], axis=1)

    # Hoisted loop invariants.
    w_o = dec_w_o_ref[...]                                         # (H, V)
    b_o_b = jnp.broadcast_to(dec_b_o_ref[...], (B, V))             # (B, V)
    attn_bias = attn_bias_ref[...]                                 # (B, T*B)
    idx = lax.broadcasted_iota(jnp.int32, (B, V), 1)               # (B, V)

    # ------------------------------ Decoder ----------------------------------
    # decoder_hidden = (feat_emb, feat_emb)
    h = feat
    c = feat
    hh = jnp.dot(h, w_step, preferred_element_type=f32)[:, :4 * H]  # h0 @ W_hh
    logp_parts = []
    seq_parts = []
    for t in range(T):                                             # static unroll
        gates = y_proj[t * B:(t + 1) * B, :] + hh                  # (B, 4H)
        ifo = jax.nn.sigmoid(gates[:, :3 * H])
        g = jnp.tanh(gates[:, 3 * H:])
        c = ifo[:, H:2 * H] * c + ifo[:, :H] * g
        h = ifo[:, 2 * H:3 * H] * jnp.tanh(c)                      # (B, H)

        # One fused matmul: next-step W_hh contribution, W_c_h part of
        # 'combined', and the attention scores against all encoder steps.
        step_out = jnp.dot(h, w_step, preferred_element_type=f32)  # (B, 5H+TB)
        hh = step_out[:, :4 * H]
        comb_h = step_out[:, 4 * H:5 * H]                          # (B, H)
        scores = step_out[:, 5 * H:] + attn_bias                   # (B, T*B)

        # Softmax over the T valid (same-batch) columns; cross-batch columns
        # carry a -1e30 additive bias -> exp() == 0. Exact normalization.
        m = jnp.max(scores, axis=-1, keepdims=True)
        e = jnp.exp(scores - m)
        attn = e / jnp.sum(e, axis=-1, keepdims=True)              # (B, T*B)
        comb_x = jnp.dot(attn, enc_proj,
                         preferred_element_type=f32)               # (B, H)

        combined = jnp.tanh(comb_h + comb_x)                       # (B, H)
        logits = jnp.dot(combined, w_o,
                         preferred_element_type=f32) + b_o_b       # (B, V)

        # log_softmax
        lmax = jnp.max(logits, axis=-1, keepdims=True)
        lse = jnp.log(jnp.sum(jnp.exp(logits - lmax), axis=-1,
                              keepdims=True)) + lmax
        logp_parts.append(logits - lse)

        # First-max index (torch.topk(1) indices semantics).
        seq_parts.append(jnp.min(jnp.where(logits >= lmax, idx, jnp.int32(V)),
                                 axis=-1, keepdims=True))          # (B, 1)

    # One-shot lane-dense output stores.
    dec_out_ref[...] = jnp.concatenate(logp_parts, axis=-1)        # (B, T*V)
    seq_ref[...] = jnp.concatenate(seq_parts, axis=-1)             # (B, T)


def init_params(key):
    ks = jax.random.split(key, 9)
    s = 0.1
    # LSTM weights pre-transposed to (in_features, 4H), gate order [i,f,o,g].
    # NOTE: PyTorch nn.LSTM uses [i,f,g,o]; permute columns when porting
    # real checkpoints.
    enc_w_ih = s * jax.random.normal(ks[2], (E, 4 * H), jnp.float32)
    dec_w_ih = s * jax.random.normal(ks[5], (E, 4 * H), jnp.float32)
    dec_w_hh = s * jax.random.normal(ks[6], (H, 4 * H), jnp.float32)
    att_w_c = s * jax.random.normal(ks[7], (2 * H, H), jnp.float32)

    # Additive cross-batch attention mask for the (B, T*B) score slab:
    # column t*B + b' is valid for row b iff b' == b.
    attn_bias = np.full((B, T * B), -1e30, dtype=np.float32)
    for b in range(B):
        attn_bias[b, b::B] = 0.0

    return {
        'enc_emb':   s * jax.random.normal(ks[0], (V, E), jnp.float32),
        'dec_emb':   s * jax.random.normal(ks[1], (V, E), jnp.float32),
        # Fused [enc_W_ih | dec_W_ih] (E, 8H) and bias (1, 8H), built at init
        # (no per-call XLA concat).
        'w_ih_fused': jnp.concatenate([enc_w_ih, dec_w_ih], axis=1),
        'b_ih_fused': jnp.zeros((1, 8 * H), jnp.float32),
        'enc_w_hh':  s * jax.random.normal(ks[3], (H, 4 * H), jnp.float32),
        'mlp_w':     s * jax.random.normal(ks[4], (H, 1), jnp.float32),
        'mlp_b':     jnp.zeros((1, 1), jnp.float32),
        # Fused decoder per-step static weights [W_hh | W_c_h]  (H, 5H).
        'dec_w_hc':  jnp.concatenate([dec_w_hh, att_w_c[:H, :]], axis=1),
        'w_c_x':     att_w_c[H:, :],                               # (H, H)
        'dec_w_o':   s * jax.random.normal(ks[8], (H, V), jnp.float32),
        'dec_b_o':   jnp.zeros((1, V), jnp.float32),
        'attn_bias': jnp.asarray(attn_bias),                       # (B, T*B)
    }


def gains_forward(params, input_variable, target_variable):
    """Returns (predict_value (B,1), decoder_outputs (B,T,V), feat (B,T,1))."""
    # Only glue: tiny (B,T) int32 index re-layout to t-major (T*B, 1) columns.
    # The embedding gather itself is fused into the kernel.
    x_ids = input_variable.T.reshape(T * B, 1).astype(jnp.int32)
    y_ids = target_variable.T.reshape(T * B, 1).astype(jnp.int32)

    vmem = pl.BlockSpec(memory_space=pltpu.MemorySpace.VMEM)

    predict_value, dec_out_flat, seq = pl.pallas_call(
        gains_kernel,
        out_shape=(jax.ShapeDtypeStruct((B, 1), jnp.float32),
                   jax.ShapeDtypeStruct((B, T * V), jnp.float32),
                   jax.ShapeDtypeStruct((B, T), jnp.int32)),
        in_specs=[vmem] * 14,
        out_specs=(vmem, vmem, vmem),
    )(x_ids, y_ids,
      params['enc_emb'], params['dec_emb'],
      params['w_ih_fused'], params['b_ih_fused'], params['enc_w_hh'],
      params['mlp_w'], params['mlp_b'],
      params['dec_w_hc'], params['w_c_x'], params['dec_w_o'], params['dec_b_o'],
      params['attn_bias'])

    decoder_outputs = dec_out_flat.reshape(B, T, V)     # log-probs, (B, T, V)
    # NOTE: named `feat` only to match GAINS.forward's return; it is the int32
    # argmax token sequence (ret['sequence']), not a feature tensor.
    feat = seq[:, :, None]                              # (B, T, 1) int32
    return predict_value, decoder_outputs, feat


if __name__ == "__main__":
    key = jax.random.PRNGKey(0)
    pkey, ikey, tkey = jax.random.split(key, 3)
    params = init_params(pkey)
    input_ids = jax.random.randint(ikey, (B, T), 0, V)    # input_variable
    target_ids = jax.random.randint(tkey, (B, T), 0, V)   # target_variable

    predict_value, decoder_outputs, feat = jax.jit(gains_forward)(
        params, input_ids, target_ids)
    jax.block_until_ready((predict_value, decoder_outputs, feat))

    assert predict_value.shape == (B, 1)
    assert decoder_outputs.shape == (B, T, V)
    assert feat.shape == (B, T, 1)
    assert bool(jnp.all(jnp.isfinite(predict_value)))
    assert bool(jnp.all(jnp.isfinite(decoder_outputs)))
    assert bool(jnp.all((feat >= 0) & (feat < V)))
    print("KERNEL_OK")
</pallas_src>

<mosaic_0001>
module attributes {stable_mosaic.version = 11 : i64} {
  func.func @gains_kernel(%arg0: memref<16x1xi32, #tpu.memory_space<vmem>>, %arg1: memref<16x1xi32, #tpu.memory_space<vmem>>, %arg2: memref<16x32xf32, #tpu.memory_space<vmem>>, %arg3: memref<16x32xf32, #tpu.memory_space<vmem>>, %arg4: memref<32x256xf32, #tpu.memory_space<vmem>>, %arg5: memref<1x256xf32, #tpu.memory_space<vmem>>, %arg6: memref<32x128xf32, #tpu.memory_space<vmem>>, %arg7: memref<32x1xf32, #tpu.memory_space<vmem>>, %arg8: memref<1x1xf32, #tpu.memory_space<vmem>>, %arg9: memref<32x160xf32, #tpu.memory_space<vmem>>, %arg10: memref<32x32xf32, #tpu.memory_space<vmem>>, %arg11: memref<32x16xf32, #tpu.memory_space<vmem>>, %arg12: memref<1x16xf32, #tpu.memory_space<vmem>>, %arg13: memref<2x16xf32, #tpu.memory_space<vmem>>, %arg14: memref<2x1xf32, #tpu.memory_space<vmem>>, %arg15: memref<2x128xf32, #tpu.memory_space<vmem>>, %arg16: memref<2x8xi32, #tpu.memory_space<vmem>>) attributes {dimension_semantics = [], scalar_prefetch = 0 : i64, scratch_operands = 0 : i64, tpu.core_type = #tpu.core_type<tc>} {
    %0 = tpu.iota {dimensions = array<i32: 1>} : vector<16x16xi32>
    %c0 = arith.constant 0 : index
    %c0_0 = arith.constant 0 : index
    %1 = vector.load %arg0[%c0, %c0_0] : memref<16x1xi32, #tpu.memory_space<vmem>>, vector<16x1xi32>
    %2 = vector.broadcast %1 : vector<16x1xi32> to vector<16x16xi32>
    %3 = arith.cmpi eq, %2, %0 : vector<16x16xi32>
    %4 = arith.extui %3 : vector<16x16xi1> to vector<16x16xi32>
    %5 = arith.sitofp %4 : vector<16x16xi32> to vector<16x16xf32>
    %c0_1 = arith.constant 0 : index
    %c0_2 = arith.constant 0 : index
    %6 = vector.load %arg1[%c0_1, %c0_2] : memref<16x1xi32, #tpu.memory_space<vmem>>, vector<16x1xi32>
    %7 = vector.broadcast %6 : vector<16x1xi32> to vector<16x16xi32>
    %8 = arith.cmpi eq, %7, %0 : vector<16x16xi32>
    %9 = arith.extui %8 : vector<16x16xi1> to vector<16x16xi32>
    %10 = arith.sitofp %9 : vector<16x16xi32> to vector<16x16xf32>
    %c0_3 = arith.constant 0 : index
    %c0_4 = arith.constant 0 : index
    %11 = vector.load %arg2[%c0_3, %c0_4] : memref<16x32xf32, #tpu.memory_space<vmem>>, vector<16x32xf32>
    %cst = arith.constant dense<0.000000e+00> : vector<16x32xf32>
    %12 = tpu.matmul %5, %11, %cst {dimension_numbers = #tpu.dot_dimension_numbers<[1], [0], [0], [1], [0, 0, 1, 1], [], []>} : vector<16x16xf32>, vector<16x32xf32>, vector<16x32xf32> -> vector<16x32xf32>
    %c0_5 = arith.constant 0 : index
    %c0_6 = arith.constant 0 : index
    %13 = vector.load %arg3[%c0_5, %c0_6] : memref<16x32xf32, #tpu.memory_space<vmem>>, vector<16x32xf32>
    %cst_7 = arith.constant dense<0.000000e+00> : vector<16x32xf32>
    %14 = tpu.matmul %10, %13, %cst_7 {dimension_numbers = #tpu.dot_dimension_numbers<[1], [0], [0], [1], [0, 0, 1, 1], [], []>} : vector<16x16xf32>, vector<16x32xf32>, vector<16x32xf32> -> vector<16x32xf32>
    %15 = tpu.concatenate %12, %14 in 0 : vector<16x32xf32>, vector<16x32xf32> -> vector<32x32xf32>
    %c0_8 = arith.constant 0 : index
    %c0_9 = arith.constant 0 : index
    %16 = vector.load %arg4[%c0_8, %c0_9] : memref<32x256xf32, #tpu.memory_space<vmem>>, vector<32x256xf32>
    %cst_10 = arith.constant dense<0.000000e+00> : vector<32x256xf32>
    %17 = tpu.matmul %15, %16, %cst_10 {dimension_numbers = #tpu.dot_dimension_numbers<[1], [0], [0], [1], [0, 0, 1, 1], [], []>} : vector<32x32xf32>, vector<32x256xf32>, vector<32x256xf32> -> vector<32x256xf32>
    %c0_11 = arith.constant 0 : index
    %c0_12 = arith.constant 0 : index
    %18 = vector.load %arg5[%c0_11, %c0_12] : memref<1x256xf32, #tpu.memory_space<vmem>>, vector<1x256xf32>
    %19 = vector.broadcast %18 : vector<1x256xf32> to vector<32x256xf32>
    %20 = arith.addf %17, %19 : vector<32x256xf32>
    %21 = vector.extract_strided_slice %20 {offsets = [0, 0], sizes = [16, 128], strides = [1, 1]} : vector<32x256xf32> to vector<16x128xf32>
    %22 = vector.extract_strided_slice %20 {offsets = [16, 128], sizes = [16, 128], strides = [1, 1]} : vector<32x256xf32> to vector<16x128xf32>
    %c0_13 = arith.constant 0 : index
    %c0_14 = arith.constant 0 : index
    %23 = vector.load %arg6[%c0_13, %c0_14] : memref<32x128xf32, #tpu.memory_space<vmem>>, vector<32x128xf32>
    %cst_15 = arith.constant 0.000000e+00 : f32
    %24 = vector.broadcast %cst_15 : f32 to vector<2x32xf32>
    %cst_16 = arith.constant 0.000000e+00 : f32
    %25 = vector.broadcast %cst_16 : f32 to vector<2x32xf32>
    %cst_17 = arith.constant 0.000000e+00 : f32
    %26 = vector.broadcast %cst_17 : f32 to vector<2x32xf32>
    %27 = vector.extract_strided_slice %21 {offsets = [0, 0], sizes = [2, 128], strides = [1, 1]} : vector<16x128xf32> to vector<2x128xf32>
    %cst_18 = arith.constant dense<0.000000e+00> : vector<2x128xf32>
    %28 = tpu.matmul %24, %23, %cst_18 {dimension_numbers = #tpu.dot_dimension_numbers<[1], [0], [0], [1], [0, 0, 1, 1], [], []>} : vector<2x32xf32>, vector<32x128xf32>, vector<2x128xf32> -> vector<2x128xf32>
    %29 = arith.addf %27, %28 : vector<2x128xf32>
    %30 = vector.extract_strided_slice %29 {offsets = [0, 0], sizes = [2, 96], strides = [1, 1]} : vector<2x128xf32> to vector<2x96xf32>
    %31 = arith.negf %30 : vector<2x96xf32>
    %32 = math.exp %31 : vector<2x96xf32>
    %cst_19 = arith.constant 1.000000e+00 : f32
    %33 = vector.broadcast %cst_19 : f32 to vector<2x96xf32>
    %34 = arith.addf %33, %32 : vector<2x96xf32>
    %35 = arith.divf %33, %34 : vector<2x96xf32>
    %36 = vector.extract_strided_slice %29 {offsets = [0, 96], sizes = [2, 32], strides = [1, 1]} : vector<2x128xf32> to vector<2x32xf32>
    %37 = math.tanh %36 : vector<2x32xf32>
    %38 = vector.extract_strided_slice %35 {offsets = [0, 32], sizes = [2, 32], strides = [1, 1]} : vector<2x96xf32> to vector<2x32xf32>
    %39 = arith.mulf %38, %25 : vector<2x32xf32>
    %40 = vector.extract_strided_slice %35 {offsets = [0, 0], sizes = [2, 32], strides = [1, 1]} : vector<2x96xf32> to vector<2x32xf32>
    %41 = arith.mulf %40, %37 : vector<2x32xf32>
    %42 = arith.addf %39, %41 : vector<2x32xf32>
    %43 = vector.extract_strided_slice %35 {offsets = [0, 64], sizes = [2, 32], strides = [1, 1]} : vector<2x96xf32> to vector<2x32xf32>
    %44 = math.tanh %42 : vector<2x32xf32>
    %45 = arith.mulf %43, %44 : vector<2x32xf32>
    %46 = arith.addf %26, %45 : vector<2x32xf32>
    %47 = vector.extract_strided_slice %21 {offsets = [2, 0], sizes = [2, 128], strides = [1, 1]} : vector<16x128xf32> to vector<2x128xf32>
    %cst_20 = arith.constant dense<0.000000e+00> : vector<2x128xf32>
    %48 = tpu.matmul %45, %23, %cst_20 {dimension_numbers = #tpu.dot_dimension_numbers<[1], [0], [0], [1], [0, 0, 1, 1], [], []>} : vector<2x32xf32>, vector<32x128xf32>, vector<2x128xf32> -> vector<2x128xf32>
    %49 = arith.addf %47, %48 : vector<2x128xf32>
    %50 = vector.extract_strided_slice %49 {offsets = [0, 0], sizes = [2, 96], strides = [1, 1]} : vector<2x128xf32> to vector<2x96xf32>
    %51 = arith.negf %50 : vector<2x96xf32>
    %52 = math.exp %51 : vector<2x96xf32>
    %cst_21 = arith.constant 1.000000e+00 : f32
    %53 = vector.broadcast %cst_21 : f32 to vector<2x96xf32>
    %54 = arith.addf %53, %52 : vector<2x96xf32>
    %55 = arith.divf %53, %54 : vector<2x96xf32>
    %56 = vector.extract_strided_slice %49 {offsets = [0, 96], sizes = [2, 32], strides = [1, 1]} : vector<2x128xf32> to vector<2x32xf32>
    %57 = math.tanh %56 : vector<2x32xf32>
    %58 = vector.extract_strided_slice %55 {offsets = [0, 32], sizes = [2, 32], strides = [1, 1]} : vector<2x96xf32> to vector<2x32xf32>
    %59 = arith.mulf %58, %42 : vector<2x32xf32>
    %60 = vector.extract_strided_slice %55 {offsets = [0, 0], sizes = [2, 32], strides = [1, 1]} : vector<2x96xf32> to vector<2x32xf32>
    %61 = arith.mulf %60, %57 : vector<2x32xf32>
    %62 = arith.addf %59, %61 : vector<2x32xf32>
    %63 = vector.extract_strided_slice %55 {offsets = [0, 64], sizes = [2, 32], strides = [1, 1]} : vector<2x96xf32> to vector<2x32xf32>
    %64 = math.tanh %62 : vector<2x32xf32>
    %65 = arith.mulf %63, %64 : vector<2x32xf32>
    %66 = arith.addf %46, %65 : vector<2x32xf32>
    %67 = vector.extract_strided_slice %21 {offsets = [4, 0], sizes = [2, 128], strides = [1, 1]} : vector<16x128xf32> to vector<2x128xf32>
    %cst_22 = arith.constant dense<0.000000e+00> : vector<2x128xf32>
    %68 = tpu.matmul %65, %23, %cst_22 {dimension_numbers = #tpu.dot_dimension_numbers<[1], [0], [0], [1], [0, 0, 1, 1], [], []>} : vector<2x32xf32>, vector<32x128xf32>, vector<2x128xf32> -> vector<2x128xf32>
    %69 = arith.addf %67, %68 : vector<2x128xf32>
    %70 = vector.extract_strided_slice %69 {offsets = [0, 0], sizes = [2, 96], strides = [1, 1]} : vector<2x128xf32> to vector<2x96xf32>
    %71 = arith.negf %70 : vector<2x96xf32>
    %72 = math.exp %71 : vector<2x96xf32>
    %cst_23 = arith.constant 1.000000e+00 : f32
    %73 = vector.broadcast %cst_23 : f32 to vector<2x96xf32>
    %74 = arith.addf %73, %72 : vector<2x96xf32>
    %75 = arith.divf %73, %74 : vector<2x96xf32>
    %76 = vector.extract_strided_slice %69 {offsets = [0, 96], sizes = [2, 32], strides = [1, 1]} : vector<2x128xf32> to vector<2x32xf32>
    %77 = math.tanh %76 : vector<2x32xf32>
    %78 = vector.extract_strided_slice %75 {offsets = [0, 32], sizes = [2, 32], strides = [1, 1]} : vector<2x96xf32> to vector<2x32xf32>
    %79 = arith.mulf %78, %62 : vector<2x32xf32>
    %80 = vector.extract_strided_slice %75 {offsets = [0, 0], sizes = [2, 32], strides = [1, 1]} : vector<2x96xf32> to vector<2x32xf32>
    %81 = arith.mulf %80, %77 : vector<2x32xf32>
    %82 = arith.addf %79, %81 : vector<2x32xf32>
    %83 = vector.extract_strided_slice %75 {offsets = [0, 64], sizes = [2, 32], strides = [1, 1]} : vector<2x96xf32> to vector<2x32xf32>
    %84 = math.tanh %82 : vector<2x32xf32>
    %85 = arith.mulf %83, %84 : vector<2x32xf32>
    %86 = arith.addf %66, %85 : vector<2x32xf32>
    %87 = vector.extract_strided_slice %21 {offsets = [6, 0], sizes = [2, 128], strides = [1, 1]} : vector<16x128xf32> to vector<2x128xf32>
    %cst_24 = arith.constant dense<0.000000e+00> : vector<2x128xf32>
    %88 = tpu.matmul %85, %23, %cst_24 {dimension_numbers = #tpu.dot_dimension_numbers<[1], [0], [0], [1], [0, 0, 1, 1], [], []>} : vector<2x32xf32>, vector<32x128xf32>, vector<2x128xf32> -> vector<2x128xf32>
    %89 = arith.addf %87, %88 : vector<2x128xf32>
    %90 = vector.extract_strided_slice %89 {offsets = [0, 0], sizes = [2, 96], strides = [1, 1]} : vector<2x128xf32> to vector<2x96xf32>
    %91 = arith.negf %90 : vector<2x96xf32>
    %92 = math.exp %91 : vector<2x96xf32>
    %cst_25 = arith.constant 1.000000e+00 : f32
    %93 = vector.broadcast %cst_25 : f32 to vector<2x96xf32>
    %94 = arith.addf %93, %92 : vector<2x96xf32>
    %95 = arith.divf %93, %94 : vector<2x96xf32>
    %96 = vector.extract_strided_slice %89 {offsets = [0, 96], sizes = [2, 32], strides = [1, 1]} : vector<2x128xf32> to vector<2x32xf32>
    %97 = math.tanh %96 : vector<2x32xf32>
    %98 = vector.extract_strided_slice %95 {offsets = [0, 32], sizes = [2, 32], strides = [1, 1]} : vector<2x96xf32> to vector<2x32xf32>
    %99 = arith.mulf %98, %82 : vector<2x32xf32>
    %100 = vector.extract_strided_slice %95 {offsets = [0, 0], sizes = [2, 32], strides = [1, 1]} : vector<2x96xf32> to vector<2x32xf32>
    %101 = arith.mulf %100, %97 : vector<2x32xf32>
    %102 = arith.addf %99, %101 : vector<2x32xf32>
    %103 = vector.extract_strided_slice %95 {offsets = [0, 64], sizes = [2, 32], strides = [1, 1]} : vector<2x96xf32> to vector<2x32xf32>
    %104 = math.tanh %102 : vector<2x32xf32>
    %105 = arith.mulf %103, %104 : vector<2x32xf32>
    %106 = arith.addf %86, %105 : vector<2x32xf32>
    %107 = vector.extract_strided_slice %21 {offsets = [8, 0], sizes = [2, 128], strides = [1, 1]} : vector<16x128xf32> to vector<2x128xf32>
    %cst_26 = arith.constant dense<0.000000e+00> : vector<2x128xf32>
    %108 = tpu.matmul %105, %23, %cst_26 {dimension_numbers = #tpu.dot_dimension_numbers<[1], [0], [0], [1], [0, 0, 1, 1], [], []>} : vector<2x32xf32>, vector<32x128xf32>, vector<2x128xf32> -> vector<2x128xf32>
    %109 = arith.addf %107, %108 : vector<2x128xf32>
    %110 = vector.extract_strided_slice %109 {offsets = [0, 0], sizes = [2, 96], strides = [1, 1]} : vector<2x128xf32> to vector<2x96xf32>
    %111 = arith.negf %110 : vector<2x96xf32>
    %112 = math.exp %111 : vector<2x96xf32>
    %cst_27 = arith.constant 1.000000e+00 : f32
    %113 = vector.broadcast %cst_27 : f32 to vector<2x96xf32>
    %114 = arith.addf %113, %112 : vector<2x96xf32>
    %115 = arith.divf %113, %114 : vector<2x96xf32>
    %116 = vector.extract_strided_slice %109 {offsets = [0, 96], sizes = [2, 32], strides = [1, 1]} : vector<2x128xf32> to vector<2x32xf32>
    %117 = math.tanh %116 : vector<2x32xf32>
    %118 = vector.extract_strided_slice %115 {offsets = [0, 32], sizes = [2, 32], strides = [1, 1]} : vector<2x96xf32> to vector<2x32xf32>
    %119 = arith.mulf %118, %102 : vector<2x32xf32>
    %120 = vector.extract_strided_slice %115 {offsets = [0, 0], sizes = [2, 32], strides = [1, 1]} : vector<2x96xf32> to vector<2x32xf32>
    %121 = arith.mulf %120, %117 : vector<2x32xf32>
    %122 = arith.addf %119, %121 : vector<2x32xf32>
    %123 = vector.extract_strided_slice %115 {offsets = [0, 64], sizes = [2, 32], strides = [1, 1]} : vector<2x96xf32> to vector<2x32xf32>
    %124 = math.tanh %122 : vector<2x32xf32>
    %125 = arith.mulf %123, %124 : vector<2x32xf32>
    %126 = arith.addf %106, %125 : vector<2x32xf32>
    %127 = vector.extract_strided_slice %21 {offsets = [10, 0], sizes = [2, 128], strides = [1, 1]} : vector<16x128xf32> to vector<2x128xf32>
    %cst_28 = arith.constant dense<0.000000e+00> : vector<2x128xf32>
    %128 = tpu.matmul %125, %23, %cst_28 {dimension_numbers = #tpu.dot_dimension_numbers<[1], [0], [0], [1], [0, 0, 1, 1], [], []>} : vector<2x32xf32>, vector<32x128xf32>, vector<2x128xf32> -> vector<2x128xf32>
    %129 = arith.addf %127, %128 : vector<2x128xf32>
    %130 = vector.extract_strided_slice %129 {offsets = [0, 0], sizes = [2, 96], strides = [1, 1]} : vector<2x128xf32> to vector<2x96xf32>
    %131 = arith.negf %130 : vector<2x96xf32>
    %132 = math.exp %131 : vector<2x96xf32>
    %cst_29 = arith.constant 1.000000e+00 : f32
    %133 = vector.broadcast %cst_29 : f32 to vector<2x96xf32>
    %134 = arith.addf %133, %132 : vector<2x96xf32>
    %135 = arith.divf %133, %134 : vector<2x96xf32>
    %136 = vector.extract_strided_slice %129 {offsets = [0, 96], sizes = [2, 32], strides = [1, 1]} : vector<2x128xf32> to vector<2x32xf32>
    %137 = math.tanh %136 : vector<2x32xf32>
    %138 = vector.extract_strided_slice %135 {offsets = [0, 32], sizes = [2, 32], strides = [1, 1]} : vector<2x96xf32> to vector<2x32xf32>
    %139 = arith.mulf %138, %122 : vector<2x32xf32>
    %140 = vector.extract_strided_slice %135 {offsets = [0, 0], sizes = [2, 32], strides = [1, 1]} : vector<2x96xf32> to vector<2x32xf32>
    %141 = arith.mulf %140, %137 : vector<2x32xf32>
    %142 = arith.addf %139, %141 : vector<2x32xf32>
    %143 = vector.extract_strided_slice %135 {offsets = [0, 64], sizes = [2, 32], strides = [1, 1]} : vector<2x96xf32> to vector<2x32xf32>
    %144 = math.tanh %142 : vector<2x32xf32>
    %145 = arith.mulf %143, %144 : vector<2x32xf32>
    %146 = arith.addf %126, %145 : vector<2x32xf32>
    %147 = vector.extract_strided_slice %21 {offsets = [12, 0], sizes = [2, 128], strides = [1, 1]} : vector<16x128xf32> to vector<2x128xf32>
    %cst_30 = arith.constant dense<0.000000e+00> : vector<2x128xf32>
    %148 = tpu.matmul %145, %23, %cst_30 {dimension_numbers = #tpu.dot_dimension_numbers<[1], [0], [0], [1], [0, 0, 1, 1], [], []>} : vector<2x32xf32>, vector<32x128xf32>, vector<2x128xf32> -> vector<2x128xf32>
    %149 = arith.addf %147, %148 : vector<2x128xf32>
    %150 = vector.extract_strided_slice %149 {offsets = [0, 0], sizes = [2, 96], strides = [1, 1]} : vector<2x128xf32> to vector<2x96xf32>
    %151 = arith.negf %150 : vector<2x96xf32>
    %152 = math.exp %151 : vector<2x96xf32>
    %cst_31 = arith.constant 1.000000e+00 : f32
    %153 = vector.broadcast %cst_31 : f32 to vector<2x96xf32>
    %154 = arith.addf %153, %152 : vector<2x96xf32>
    %155 = arith.divf %153, %154 : vector<2x96xf32>
    %156 = vector.extract_strided_slice %149 {offsets = [0, 96], sizes = [2, 32], strides = [1, 1]} : vector<2x128xf32> to vector<2x32xf32>
    %157 = math.tanh %156 : vector<2x32xf32>
    %158 = vector.extract_strided_slice %155 {offsets = [0, 32], sizes = [2, 32], strides = [1, 1]} : vector<2x96xf32> to vector<2x32xf32>
    %159 = arith.mulf %158, %142 : vector<2x32xf32>
    %160 = vector.extract_strided_slice %155 {offsets = [0, 0], sizes = [2, 32], strides = [1, 1]} : vector<2x96xf32> to vector<2x32xf32>
    %161 = arith.mulf %160, %157 : vector<2x32xf32>
    %162 = arith.addf %159, %161 : vector<2x32xf32>
    %163 = vector.extract_strided_slice %155 {offsets = [0, 64], sizes = [2, 32], strides = [1, 1]} : vector<2x96xf32> to vector<2x32xf32>
    %164 = math.tanh %162 : vector<2x32xf32>
    %165 = arith.mulf %163, %164 : vector<2x32xf32>
    %166 = arith.addf %146, %165 : vector<2x32xf32>
    %167 = vector.extract_strided_slice %21 {offsets = [14, 0], sizes = [2, 128], strides = [1, 1]} : vector<16x128xf32> to vector<2x128xf32>
    %cst_32 = arith.constant dense<0.000000e+00> : vector<2x128xf32>
    %168 = tpu.matmul %165, %23, %cst_32 {dimension_numbers = #tpu.dot_dimension_numbers<[1], [0], [0], [1], [0, 0, 1, 1], [], []>} : vector<2x32xf32>, vector<32x128xf32>, vector<2x128xf32> -> vector<2x128xf32>
    %169 = arith.addf %167, %168 : vector<2x128xf32>
    %170 = vector.extract_strided_slice %169 {offsets = [0, 0], sizes = [2, 96], strides = [1, 1]} : vector<2x128xf32> to vector<2x96xf32>
    %171 = arith.negf %170 : vector<2x96xf32>
    %172 = math.exp %171 : vector<2x96xf32>
    %cst_33 = arith.constant 1.000000e+00 : f32
    %173 = vector.broadcast %cst_33 : f32 to vector<2x96xf32>
    %174 = arith.addf %173, %172 : vector<2x96xf32>
    %175 = arith.divf %173, %174 : vector<2x96xf32>
    %176 = vector.extract_strided_slice %169 {offsets = [0, 96], sizes = [2, 32], strides = [1, 1]} : vector<2x128xf32> to vector<2x32xf32>
    %177 = math.tanh %176 : vector<2x32xf32>
    %178 = vector.extract_strided_slice %175 {offsets = [0, 32], sizes = [2, 32], strides = [1, 1]} : vector<2x96xf32> to vector<2x32xf32>
    %179 = arith.mulf %178, %162 : vector<2x32xf32>
    %180 = vector.extract_strided_slice %175 {offsets = [0, 0], sizes = [2, 32], strides = [1, 1]} : vector<2x96xf32> to vector<2x32xf32>
    %181 = arith.mulf %180, %177 : vector<2x32xf32>
    %182 = arith.addf %179, %181 : vector<2x32xf32>
    %183 = vector.extract_strided_slice %175 {offsets = [0, 64], sizes = [2, 32], strides = [1, 1]} : vector<2x96xf32> to vector<2x32xf32>
    %184 = math.tanh %182 : vector<2x32xf32>
    %185 = arith.mulf %183, %184 : vector<2x32xf32>
    %186 = arith.addf %166, %185 : vector<2x32xf32>
    %cst_34 = arith.constant 1.250000e-01 : f32
    %187 = vector.broadcast %cst_34 : f32 to vector<2x32xf32>
    %188 = arith.mulf %186, %187 : vector<2x32xf32>
    %189 = arith.mulf %188, %188 : vector<2x32xf32>
    %cst_35 = arith.constant dense<0.000000e+00> : vector<2xf32>
    %190 = vector.multi_reduction <add>, %189, %cst_35 [1] : vector<2x32xf32> to vector<2xf32>
    %191 = vector.shape_cast %190 : vector<2xf32> to vector<2x1xf32>
    %cst_36 = arith.constant 1.000000e-24 : f32
    %192 = vector.broadcast %cst_36 : f32 to vector<2x1xf32>
    %193 = arith.maximumf %191, %192 : vector<2x1xf32>
    %194 = math.rsqrt %193 : vector<2x1xf32>
    %195 = vector.broadcast %194 : vector<2x1xf32> to vector<2x32xf32>
    %196 = arith.mulf %188, %195 : vector<2x32xf32>
    %c0_37 = arith.constant 0 : index
    %c0_38 = arith.constant 0 : index
    %197 = vector.load %arg7[%c0_37, %c0_38] : memref<32x1xf32, #tpu.memory_space<vmem>>, vector<32x1xf32>
    %cst_39 = arith.constant dense<0.000000e+00> : vector<2x1xf32>
    %198 = tpu.matmul %196, %197, %cst_39 {dimension_numbers = #tpu.dot_dimension_numbers<[1], [0], [0], [1], [0, 0, 1, 1], [], []>} : vector<2x32xf32>, vector<32x1xf32>, vector<2x1xf32> -> vector<2x1xf32>
    %c0_40 = arith.constant 0 : index
    %c0_41 = arith.constant 0 : index
    %199 = vector.load %arg8[%c0_40, %c0_41] : memref<1x1xf32, #tpu.memory_space<vmem>>, vector<1x1xf32>
    %200 = vector.broadcast %199 : vector<1x1xf32> to vector<2x1xf32>
    %201 = arith.addf %198, %200 : vector<2x1xf32>
    %202 = arith.negf %201 : vector<2x1xf32>
    %203 = math.exp %202 : vector<2x1xf32>
    %cst_42 = arith.constant 1.000000e+00 : f32
    %204 = vector.broadcast %cst_42 : f32 to vector<2x1xf32>
    %205 = arith.addf %204, %203 : vector<2x1xf32>
    %206 = arith.divf %204, %205 : vector<2x1xf32>
    %c0_43 = arith.constant 0 : index
    %c0_44 = arith.constant 0 : index
    %207 = vector.load %arg14[%c0_43, %c0_44] : memref<2x1xf32, #tpu.memory_space<vmem>>, vector<2x1xf32>
    tpu.vector_store %arg14[%c0_43, %c0_44], %206 {strides = array<i32>} : memref<2x1xf32, #tpu.memory_space<vmem>>, vector<2x1xf32>,
    %208 = tpu.concatenate %45, %65, %85, %105, %125, %145, %165, %185 in 0 : vector<2x32xf32>, vector<2x32xf32>, vector<2x32xf32>, vector<2x32xf32>, vector<2x32xf32>, vector<2x32xf32>, vector<2x32xf32>, vector<2x32xf32> -> vector<16x32xf32>
    %209 = tpu.transpose %208, [1, 0] : vector<16x32xf32> -> vector<32x16xf32>
    %c0_45 = arith.constant 0 : index
    %c0_46 = arith.constant 0 : index
    %210 = vector.load %arg10[%c0_45, %c0_46] : memref<32x32xf32, #tpu.memory_space<vmem>>, vector<32x32xf32>
    %cst_47 = arith.constant dense<0.000000e+00> : vector<16x32xf32>
    %211 = tpu.matmul %208, %210, %cst_47 {dimension_numbers = #tpu.dot_dimension_numbers<[1], [0], [0], [1], [0, 0, 1, 1], [], []>} : vector<16x32xf32>, vector<32x32xf32>, vector<16x32xf32> -> vector<16x32xf32>
    %c0_48 = arith.constant 0 : index
    %c0_49 = arith.constant 0 : index
    %212 = vector.load %arg9[%c0_48, %c0_49] : memref<32x160xf32, #tpu.memory_space<vmem>>, vector<32x160xf32>
    %213 = tpu.concatenate %212, %209 in 1 : vector<32x160xf32>, vector<32x16xf32> -> vector<32x176xf32>
    %c0_50 = arith.constant 0 : index
    %c0_51 = arith.constant 0 : index
    %214 = vector.load %arg11[%c0_50, %c0_51] : memref<32x16xf32, #tpu.memory_space<vmem>>, vector<32x16xf32>
    %c0_52 = arith.constant 0 : index
    %c0_53 = arith.constant 0 : index
    %215 = vector.load %arg12[%c0_52, %c0_53] : memref<1x16xf32, #tpu.memory_space<vmem>>, vector<1x16xf32>
    %216 = vector.shape_cast %215 : vector<1x16xf32> to vector<1x16xf32>
    %217 = vector.broadcast %216 : vector<1x16xf32> to vector<2x16xf32>
    %c0_54 = arith.constant 0 : index
    %c0_55 = arith.constant 0 : index
    %218 = vector.load %arg13[%c0_54, %c0_55] : memref<2x16xf32, #tpu.memory_space<vmem>>, vector<2x16xf32>
    %219 = tpu.iota {dimensions = array<i32: 1>} : vector<2x16xi32>
    %cst_56 = arith.constant dense<0.000000e+00> : vector<2x176xf32>
    %220 = tpu.matmul %196, %213, %cst_56 {dimension_numbers = #tpu.dot_dimension_numbers<[1], [0], [0], [1], [0, 0, 1, 1], [], []>} : vector<2x32xf32>, vector<32x176xf32>, vector<2x176xf32> -> vector<2x176xf32>
    %221 = vector.extract_strided_slice %220 {offsets = [0, 0], sizes = [2, 128], strides = [1, 1]} : vector<2x176xf32> to vector<2x128xf32>
    %222 = vector.extract_strided_slice %22 {offsets = [0, 0], sizes = [2, 128], strides = [1, 1]} : vector<16x128xf32> to vector<2x128xf32>
    %223 = arith.addf %222, %221 : vector<2x128xf32>
    %224 = vector.extract_strided_slice %223 {offsets = [0, 0], sizes = [2, 96], strides = [1, 1]} : vector<2x128xf32> to vector<2x96xf32>
    %225 = arith.negf %224 : vector<2x96xf32>
    %226 = math.exp %225 : vector<2x96xf32>
    %cst_57 = arith.constant 1.000000e+00 : f32
    %227 = vector.broadcast %cst_57 : f32 to vector<2x96xf32>
    %228 = arith.addf %227, %226 : vector<2x96xf32>
    %229 = arith.divf %227, %228 : vector<2x96xf32>
    %230 = vector.extract_strided_slice %223 {offsets = [0, 96], sizes = [2, 32], strides = [1, 1]} : vector<2x128xf32> to vector<2x32xf32>
    %231 = math.tanh %230 : vector<2x32xf32>
    %232 = vector.extract_strided_slice %229 {offsets = [0, 32], sizes = [2, 32], strides = [1, 1]} : vector<2x96xf32> to vector<2x32xf32>
    %233 = arith.mulf %232, %196 : vector<2x32xf32>
    %234 = vector.extract_strided_slice %229 {offsets = [0, 0], sizes = [2, 32], strides = [1, 1]} : vector<2x96xf32> to vector<2x32xf32>
    %235 = arith.mulf %234, %231 : vector<2x32xf32>
    %236 = arith.addf %233, %235 : vector<2x32xf32>
    %237 = vector.extract_strided_slice %229 {offsets = [0, 64], sizes = [2, 32], strides = [1, 1]} : vector<2x96xf32> to vector<2x32xf32>
    %238 = math.tanh %236 : vector<2x32xf32>
    %239 = arith.mulf %237, %238 : vector<2x32xf32>
    %cst_58 = arith.constant dense<0.000000e+00> : vector<2x176xf32>
    %240 = tpu.matmul %239, %213, %cst_58 {dimension_numbers = #tpu.dot_dimension_numbers<[1], [0], [0], [1], [0, 0, 1, 1], [], []>} : vector<2x32xf32>, vector<32x176xf32>, vector<2x176xf32> -> vector<2x176xf32>
    %241 = vector.extract_strided_slice %240 {offsets = [0, 0], sizes = [2, 128], strides = [1, 1]} : vector<2x176xf32> to vector<2x128xf32>
    %242 = vector.extract_strided_slice %240 {offsets = [0, 128], sizes = [2, 32], strides = [1, 1]} : vector<2x176xf32> to vector<2x32xf32>
    %243 = vector.extract_strided_slice %240 {offsets = [0, 160], sizes = [2, 16], strides = [1, 1]} : vector<2x176xf32> to vector<2x16xf32>
    %244 = arith.addf %243, %218 : vector<2x16xf32>
    %cst_59 = arith.constant dense<0xFF800000> : vector<2xf32>
    %245 = vector.multi_reduction <maximumf>, %244, %cst_59 [1] : vector<2x16xf32> to vector<2xf32>
    %246 = vector.shape_cast %245 : vector<2xf32> to vector<2x1xf32>
    %247 = vector.broadcast %246 : vector<2x1xf32> to vector<2x16xf32>
    %248 = arith.subf %244, %247 : vector<2x16xf32>
    %249 = math.exp %248 : vector<2x16xf32>
    %cst_60 = arith.constant dense<0.000000e+00> : vector<2xf32>
    %250 = vector.multi_reduction <add>, %249, %cst_60 [1] : vector<2x16xf32> to vector<2xf32>
    %251 = vector.shape_cast %250 : vector<2xf32> to vector<2x1xf32>
    %252 = vector.broadcast %251 : vector<2x1xf32> to vector<2x16xf32>
    %253 = arith.divf %249, %252 : vector<2x16xf32>
    %cst_61 = arith.constant dense<0.000000e+00> : vector<2x32xf32>
    %254 = tpu.matmul %253, %211, %cst_61 {dimension_numbers = #tpu.dot_dimension_numbers<[1], [0], [0], [1], [0, 0, 1, 1], [], []>} : vector<2x16xf32>, vector<16x32xf32>, vector<2x32xf32> -> vector<2x32xf32>
    %255 = arith.addf %242, %254 : vector<2x32xf32>
    %256 = math.tanh %255 : vector<2x32xf32>
    %cst_62 = arith.constant dense<0.000000e+00> : vector<2x16xf32>
    %257 = tpu.matmul %256, %214, %cst_62 {dimension_numbers = #tpu.dot_dimension_numbers<[1], [0], [0], [1], [0, 0, 1, 1], [], []>} : vector<2x32xf32>, vector<32x16xf32>, vector<2x16xf32> -> vector<2x16xf32>
    %258 = arith.addf %257, %217 : vector<2x16xf32>
    %cst_63 = arith.constant dense<0xFF800000> : vector<2xf32>
    %259 = vector.multi_reduction <maximumf>, %258, %cst_63 [1] : vector<2x16xf32> to vector<2xf32>
    %260 = vector.shape_cast %259 : vector<2xf32> to vector<2x1xf32>
    %261 = vector.broadcast %260 : vector<2x1xf32> to vector<2x16xf32>
    %262 = arith.subf %258, %261 : vector<2x16xf32>
    %263 = math.exp %262 : vector<2x16xf32>
    %cst_64 = arith.constant dense<0.000000e+00> : vector<2xf32>
    %264 = vector.multi_reduction <add>, %263, %cst_64 [1] : vector<2x16xf32> to vector<2xf32>
    %265 = vector.shape_cast %264 : vector<2xf32> to vector<2x1xf32>
    %266 = math.log %265 : vector<2x1xf32>
    %267 = arith.addf %266, %260 : vector<2x1xf32>
    %268 = vector.broadcast %267 : vector<2x1xf32> to vector<2x16xf32>
    %269 = arith.subf %258, %268 : vector<2x16xf32>
    %270 = vector.broadcast %260 : vector<2x1xf32> to vector<2x16xf32>
    %271 = arith.cmpf oge, %258, %270 : vector<2x16xf32>
    %c16_i32 = arith.constant 16 : i32
    %272 = vector.broadcast %c16_i32 : i32 to vector<2x16xi32>
    %273 = arith.select %271, %219, %272 : vector<2x16xi1>, vector<2x16xi32>
    %cst_65 = arith.constant dense<2147483647> : vector<2xi32>
    %274 = vector.multi_reduction <minsi>, %273, %cst_65 [1] : vector<2x16xi32> to vector<2xi32>
    %275 = vector.shape_cast %274 : vector<2xi32> to vector<2x1xi32>
    %276 = vector.extract_strided_slice %22 {offsets = [2, 0], sizes = [2, 128], strides = [1, 1]} : vector<16x128xf32> to vector<2x128xf32>
    %277 = arith.addf %276, %241 : vector<2x128xf32>
    %278 = vector.extract_strided_slice %277 {offsets = [0, 0], sizes = [2, 96], strides = [1, 1]} : vector<2x128xf32> to vector<2x96xf32>
    %279 = arith.negf %278 : vector<2x96xf32>
    %280 = math.exp %279 : vector<2x96xf32>
    %cst_66 = arith.constant 1.000000e+00 : f32
    %281 = vector.broadcast %cst_66 : f32 to vector<2x96xf32>
    %282 = arith.addf %281, %280 : vector<2x96xf32>
    %283 = arith.divf %281, %282 : vector<2x96xf32>
    %284 = vector.extract_strided_slice %277 {offsets = [0, 96], sizes = [2, 32], strides = [1, 1]} : vector<2x128xf32> to vector<2x32xf32>
    %285 = math.tanh %284 : vector<2x32xf32>
    %286 = vector.extract_strided_slice %283 {offsets = [0, 32], sizes = [2, 32], strides = [1, 1]} : vector<2x96xf32> to vector<2x32xf32>
    %287 = arith.mulf %286, %236 : vector<2x32xf32>
    %288 = vector.extract_strided_slice %283 {offsets = [0, 0], sizes = [2, 32], strides = [1, 1]} : vector<2x96xf32> to vector<2x32xf32>
    %289 = arith.mulf %288, %285 : vector<2x32xf32>
    %290 = arith.addf %287, %289 : vector<2x32xf32>
    %291 = vector.extract_strided_slice %283 {offsets = [0, 64], sizes = [2, 32], strides = [1, 1]} : vector<2x96xf32> to vector<2x32xf32>
    %292 = math.tanh %290 : vector<2x32xf32>
    %293 = arith.mulf %291, %292 : vector<2x32xf32>
    %cst_67 = arith.constant dense<0.000000e+00> : vector<2x176xf32>
    %294 = tpu.matmul %293, %213, %cst_67 {dimension_numbers = #tpu.dot_dimension_numbers<[1], [0], [0], [1], [0, 0, 1, 1], [], []>} : vector<2x32xf32>, vector<32x176xf32>, vector<2x176xf32> -> vector<2x176xf32>
    %295 = vector.extract_strided_slice %294 {offsets = [0, 0], sizes = [2, 128], strides = [1, 1]} : vector<2x176xf32> to vector<2x128xf32>
    %296 = vector.extract_strided_slice %294 {offsets = [0, 128], sizes = [2, 32], strides = [1, 1]} : vector<2x176xf32> to vector<2x32xf32>
    %297 = vector.extract_strided_slice %294 {offsets = [0, 160], sizes = [2, 16], strides = [1, 1]} : vector<2x176xf32> to vector<2x16xf32>
    %298 = arith.addf %297, %218 : vector<2x16xf32>
    %cst_68 = arith.constant dense<0xFF800000> : vector<2xf32>
    %299 = vector.multi_reduction <maximumf>, %298, %cst_68 [1] : vector<2x16xf32> to vector<2xf32>
    %300 = vector.shape_cast %299 : vector<2xf32> to vector<2x1xf32>
    %301 = vector.broadcast %300 : vector<2x1xf32> to vector<2x16xf32>
    %302 = arith.subf %298, %301 : vector<2x16xf32>
    %303 = math.exp %302 : vector<2x16xf32>
    %cst_69 = arith.constant dense<0.000000e+00> : vector<2xf32>
    %304 = vector.multi_reduction <add>, %303, %cst_69 [1] : vector<2x16xf32> to vector<2xf32>
    %305 = vector.shape_cast %304 : vector<2xf32> to vector<2x1xf32>
    %306 = vector.broadcast %305 : vector<2x1xf32> to vector<2x16xf32>
    %307 = arith.divf %303, %306 : vector<2x16xf32>
    %cst_70 = arith.constant dense<0.000000e+00> : vector<2x32xf32>
    %308 = tpu.matmul %307, %211, %cst_70 {dimension_numbers = #tpu.dot_dimension_numbers<[1], [0], [0], [1], [0, 0, 1, 1], [], []>} : vector<2x16xf32>, vector<16x32xf32>, vector<2x32xf32> -> vector<2x32xf32>
    %309 = arith.addf %296, %308 : vector<2x32xf32>
    %310 = math.tanh %309 : vector<2x32xf32>
    %cst_71 = arith.constant dense<0.000000e+00> : vector<2x16xf32>
    %311 = tpu.matmul %310, %214, %cst_71 {dimension_numbers = #tpu.dot_dimension_numbers<[1], [0], [0], [1], [0, 0, 1, 1], [], []>} : vector<2x32xf32>, vector<32x16xf32>, vector<2x16xf32> -> vector<2x16xf32>
    %312 = arith.addf %311, %217 : vector<2x16xf32>
    %cst_72 = arith.constant dense<0xFF800000> : vector<2xf32>
    %313 = vector.multi_reduction <maximumf>, %312, %cst_72 [1] : vector<2x16xf32> to vector<2xf32>
    %314 = vector.shape_cast %313 : vector<2xf32> to vector<2x1xf32>
    %315 = vector.broadcast %314 : vector<2x1xf32> to vector<2x16xf32>
    %316 = arith.subf %312, %315 : vector<2x16xf32>
    %317 = math.exp %316 : vector<2x16xf32>
    %cst_73 = arith.constant dense<0.000000e+00> : vector<2xf32>
    %318 = vector.multi_reduction <add>, %317, %cst_73 [1] : vector<2x16xf32> to vector<2xf32>
    %319 = vector.shape_cast %318 : vector<2xf32> to vector<2x1xf32>
    %320 = math.log %319 : vector<2x1xf32>
    %321 = arith.addf %320, %314 : vector<2x1xf32>
    %322 = vector.broadcast %321 : vector<2x1xf32> to vector<2x16xf32>
    %323 = arith.subf %312, %322 : vector<2x16xf32>
    %324 = vector.broadcast %314 : vector<2x1xf32> to vector<2x16xf32>
    %325 = arith.cmpf oge, %312, %324 : vector<2x16xf32>
    %c16_i32_74 = arith.constant 16 : i32
    %326 = vector.broadcast %c16_i32_74 : i32 to vector<2x16xi32>
    %327 = arith.select %325, %219, %326 : vector<2x16xi1>, vector<2x16xi32>
    %cst_75 = arith.constant dense<2147483647> : vector<2xi32>
    %328 = vector.multi_reduction <minsi>, %327, %cst_75 [1] : vector<2x16xi32> to vector<2xi32>
    %329 = vector.shape_cast %328 : vector<2xi32> to vector<2x1xi32>
    %330 = vector.extract_strided_slice %22 {offsets = [4, 0], sizes = [2, 128], strides = [1, 1]} : vector<16x128xf32> to vector<2x128xf32>
    %331 = arith.addf %330, %295 : vector<2x128xf32>
    %332 = vector.extract_strided_slice %331 {offsets = [0, 0], sizes = [2, 96], strides = [1, 1]} : vector<2x128xf32> to vector<2x96xf32>
    %333 = arith.negf %332 : vector<2x96xf32>
    %334 = math.exp %333 : vector<2x96xf32>
    %cst_76 = arith.constant 1.000000e+00 : f32
    %335 = vector.broadcast %cst_76 : f32 to vector<2x96xf32>
    %336 = arith.addf %335, %334 : vector<2x96xf32>
    %337 = arith.divf %335, %336 : vector<2x96xf32>
    %338 = vector.extract_strided_slice %331 {offsets = [0, 96], sizes = [2, 32], strides = [1, 1]} : vector<2x128xf32> to vector<2x32xf32>
    %339 = math.tanh %338 : vector<2x32xf32>
    %340 = vector.extract_strided_slice %337 {offsets = [0, 32], sizes = [2, 32], strides = [1, 1]} : vector<2x96xf32> to vector<2x32xf32>
    %341 = arith.mulf %340, %290 : vector<2x32xf32>
    %342 = vector.extract_strided_slice %337 {offsets = [0, 0], sizes = [2, 32], strides = [1, 1]} : vector<2x96xf32> to vector<2x32xf32>
    %343 = arith.mulf %342, %339 : vector<2x32xf32>
    %344 = arith.addf %341, %343 : vector<2x32xf32>
    %345 = vector.extract_strided_slice %337 {offsets = [0, 64], sizes = [2, 32], strides = [1, 1]} : vector<2x96xf32> to vector<2x32xf32>
    %346 = math.tanh %344 : vector<2x32xf32>
    %347 = arith.mulf %345, %346 : vector<2x32xf32>
    %cst_77 = arith.constant dense<0.000000e+00> : vector<2x176xf32>
    %348 = tpu.matmul %347, %213, %cst_77 {dimension_numbers = #tpu.dot_dimension_numbers<[1], [0], [0], [1], [0, 0, 1, 1], [], []>} : vector<2x32xf32>, vector<32x176xf32>, vector<2x176xf32> -> vector<2x176xf32>
    %349 = vector.extract_strided_slice %348 {offsets = [0, 0], sizes = [2, 128], strides = [1, 1]} : vector<2x176xf32> to vector<2x128xf32>
    %350 = vector.extract_strided_slice %348 {offsets = [0, 128], sizes = [2, 32], strides = [1, 1]} : vector<2x176xf32> to vector<2x32xf32>
    %351 = vector.extract_strided_slice %348 {offsets = [0, 160], sizes = [2, 16], strides = [1, 1]} : vector<2x176xf32> to vector<2x16xf32>
    %352 = arith.addf %351, %218 : vector<2x16xf32>
    %cst_78 = arith.constant dense<0xFF800000> : vector<2xf32>
    %353 = vector.multi_reduction <maximumf>, %352, %cst_78 [1] : vector<2x16xf32> to vector<2xf32>
    %354 = vector.shape_cast %353 : vector<2xf32> to vector<2x1xf32>
    %355 = vector.broadcast %354 : vector<2x1xf32> to vector<2x16xf32>
    %356 = arith.subf %352, %355 : vector<2x16xf32>
    %357 = math.exp %356 : vector<2x16xf32>
    %cst_79 = arith.constant dense<0.000000e+00> : vector<2xf32>
    %358 = vector.multi_reduction <add>, %357, %cst_79 [1] : vector<2x16xf32> to vector<2xf32>
    %359 = vector.shape_cast %358 : vector<2xf32> to vector<2x1xf32>
    %360 = vector.broadcast %359 : vector<2x1xf32> to vector<2x16xf32>
    %361 = arith.divf %357, %360 : vector<2x16xf32>
    %cst_80 = arith.constant dense<0.000000e+00> : vector<2x32xf32>
    %362 = tpu.matmul %361, %211, %cst_80 {dimension_numbers = #tpu.dot_dimension_numbers<[1], [0], [0], [1], [0, 0, 1, 1], [], []>} : vector<2x16xf32>, vector<16x32xf32>, vector<2x32xf32> -> vector<2x32xf32>
    %363 = arith.addf %350, %362 : vector<2x32xf32>
    %364 = math.tanh %363 : vector<2x32xf32>
    %cst_81 = arith.constant dense<0.000000e+00> : vector<2x16xf32>
    %365 = tpu.matmul %364, %214, %cst_81 {dimension_numbers = #tpu.dot_dimension_numbers<[1], [0], [0], [1], [0, 0, 1, 1], [], []>} : vector<2x32xf32>, vector<32x16xf32>, vector<2x16xf32> -> vector<2x16xf32>
    %366 = arith.addf %365, %217 : vector<2x16xf32>
    %cst_82 = arith.constant dense<0xFF800000> : vector<2xf32>
    %367 = vector.multi_reduction <maximumf>, %366, %cst_82 [1] : vector<2x16xf32> to vector<2xf32>
    %368 = vector.shape_cast %367 : vector<2xf32> to vector<2x1xf32>
    %369 = vector.broadcast %368 : vector<2x1xf32> to vector<2x16xf32>
    %370 = arith.subf %366, %369 : vector<2x16xf32>
    %371 = math.exp %370 : vector<2x16xf32>
    %cst_83 = arith.constant dense<0.000000e+00> : vector<2xf32>
    %372 = vector.multi_reduction <add>, %371, %cst_83 [1] : vector<2x16xf32> to vector<2xf32>
    %373 = vector.shape_cast %372 : vector<2xf32> to vector<2x1xf32>
    %374 = math.log %373 : vector<2x1xf32>
    %375 = arith.addf %374, %368 : vector<2x1xf32>
    %376 = vector.broadcast %375 : vector<2x1xf32> to vector<2x16xf32>
    %377 = arith.subf %366, %376 : vector<2x16xf32>
    %378 = vector.broadcast %368 : vector<2x1xf32> to vector<2x16xf32>
    %379 = arith.cmpf oge, %366, %378 : vector<2x16xf32>
    %c16_i32_84 = arith.constant 16 : i32
    %380 = vector.broadcast %c16_i32_84 : i32 to vector<2x16xi32>
    %381 = arith.select %379, %219, %380 : vector<2x16xi1>, vector<2x16xi32>
    %cst_85 = arith.constant dense<2147483647> : vector<2xi32>
    %382 = vector.multi_reduction <minsi>, %381, %cst_85 [1] : vector<2x16xi32> to vector<2xi32>
    %383 = vector.shape_cast %382 : vector<2xi32> to vector<2x1xi32>
    %384 = vector.extract_strided_slice %22 {offsets = [6, 0], sizes = [2, 128], strides = [1, 1]} : vector<16x128xf32> to vector<2x128xf32>
    %385 = arith.addf %384, %349 : vector<2x128xf32>
    %386 = vector.extract_strided_slice %385 {offsets = [0, 0], sizes = [2, 96], strides = [1, 1]} : vector<2x128xf32> to vector<2x96xf32>
    %387 = arith.negf %386 : vector<2x96xf32>
    %388 = math.exp %387 : vector<2x96xf32>
    %cst_86 = arith.constant 1.000000e+00 : f32
    %389 = vector.broadcast %cst_86 : f32 to vector<2x96xf32>
    %390 = arith.addf %389, %388 : vector<2x96xf32>
    %391 = arith.divf %389, %390 : vector<2x96xf32>
    %392 = vector.extract_strided_slice %385 {offsets = [0, 96], sizes = [2, 32], strides = [1, 1]} : vector<2x128xf32> to vector<2x32xf32>
    %393 = math.tanh %392 : vector<2x32xf32>
    %394 = vector.extract_strided_slice %391 {offsets = [0, 32], sizes = [2, 32], strides = [1, 1]} : vector<2x96xf32> to vector<2x32xf32>
    %395 = arith.mulf %394, %344 : vector<2x32xf32>
    %396 = vector.extract_strided_slice %391 {offsets = [0, 0], sizes = [2, 32], strides = [1, 1]} : vector<2x96xf32> to vector<2x32xf32>
    %397 = arith.mulf %396, %393 : vector<2x32xf32>
    %398 = arith.addf %395, %397 : vector<2x32xf32>
    %399 = vector.extract_strided_slice %391 {offsets = [0, 64], sizes = [2, 32], strides = [1, 1]} : vector<2x96xf32> to vector<2x32xf32>
    %400 = math.tanh %398 : vector<2x32xf32>
    %401 = arith.mulf %399, %400 : vector<2x32xf32>
    %cst_87 = arith.constant dense<0.000000e+00> : vector<2x176xf32>
    %402 = tpu.matmul %401, %213, %cst_87 {dimension_numbers = #tpu.dot_dimension_numbers<[1], [0], [0], [1], [0, 0, 1, 1], [], []>} : vector<2x32xf32>, vector<32x176xf32>, vector<2x176xf32> -> vector<2x176xf32>
    %403 = vector.extract_strided_slice %402 {offsets = [0, 0], sizes = [2, 128], strides = [1, 1]} : vector<2x176xf32> to vector<2x128xf32>
    %404 = vector.extract_strided_slice %402 {offsets = [0, 128], sizes = [2, 32], strides = [1, 1]} : vector<2x176xf32> to vector<2x32xf32>
    %405 = vector.extract_strided_slice %402 {offsets = [0, 160], sizes = [2, 16], strides = [1, 1]} : vector<2x176xf32> to vector<2x16xf32>
    %406 = arith.addf %405, %218 : vector<2x16xf32>
    %cst_88 = arith.constant dense<0xFF800000> : vector<2xf32>
    %407 = vector.multi_reduction <maximumf>, %406, %cst_88 [1] : vector<2x16xf32> to vector<2xf32>
    %408 = vector.shape_cast %407 : vector<2xf32> to vector<2x1xf32>
    %409 = vector.broadcast %408 : vector<2x1xf32> to vector<2x16xf32>
    %410 = arith.subf %406, %409 : vector<2x16xf32>
    %411 = math.exp %410 : vector<2x16xf32>
    %cst_89 = arith.constant dense<0.000000e+00> : vector<2xf32>
    %412 = vector.multi_reduction <add>, %411, %cst_89 [1] : vector<2x16xf32> to vector<2xf32>
    %413 = vector.shape_cast %412 : vector<2xf32> to vector<2x1xf32>
    %414 = vector.broadcast %413 : vector<2x1xf32> to vector<2x16xf32>
    %415 = arith.divf %411, %414 : vector<2x16xf32>
    %cst_90 = arith.constant dense<0.000000e+00> : vector<2x32xf32>
    %416 = tpu.matmul %415, %211, %cst_90 {dimension_numbers = #tpu.dot_dimension_numbers<[1], [0], [0], [1], [0, 0, 1, 1], [], []>} : vector<2x16xf32>, vector<16x32xf32>, vector<2x32xf32> -> vector<2x32xf32>
    %417 = arith.addf %404, %416 : vector<2x32xf32>
    %418 = math.tanh %417 : vector<2x32xf32>
    %cst_91 = arith.constant dense<0.000000e+00> : vector<2x16xf32>
    %419 = tpu.matmul %418, %214, %cst_91 {dimension_numbers = #tpu.dot_dimension_numbers<[1], [0], [0], [1], [0, 0, 1, 1], [], []>} : vector<2x32xf32>, vector<32x16xf32>, vector<2x16xf32> -> vector<2x16xf32>
    %420 = arith.addf %419, %217 : vector<2x16xf32>
    %cst_92 = arith.constant dense<0xFF800000> : vector<2xf32>
    %421 = vector.multi_reduction <maximumf>, %420, %cst_92 [1] : vector<2x16xf32> to vector<2xf32>
    %422 = vector.shape_cast %421 : vector<2xf32> to vector<2x1xf32>
    %423 = vector.broadcast %422 : vector<2x1xf32> to vector<2x16xf32>
    %424 = arith.subf %420, %423 : vector<2x16xf32>
    %425 = math.exp %424 : vector<2x16xf32>
    %cst_93 = arith.constant dense<0.000000e+00> : vector<2xf32>
    %426 = vector.multi_reduction <add>, %425, %cst_93 [1] : vector<2x16xf32> to vector<2xf32>
    %427 = vector.shape_cast %426 : vector<2xf32> to vector<2x1xf32>
    %428 = math.log %427 : vector<2x1xf32>
    %429 = arith.addf %428, %422 : vector<2x1xf32>
    %430 = vector.broadcast %429 : vector<2x1xf32> to vector<2x16xf32>
    %431 = arith.subf %420, %430 : vector<2x16xf32>
    %432 = vector.broadcast %422 : vector<2x1xf32> to vector<2x16xf32>
    %433 = arith.cmpf oge, %420, %432 : vector<2x16xf32>
    %c16_i32_94 = arith.constant 16 : i32
    %434 = vector.broadcast %c16_i32_94 : i32 to vector<2x16xi32>
    %435 = arith.select %433, %219, %434 : vector<2x16xi1>, vector<2x16xi32>
    %cst_95 = arith.constant dense<2147483647> : vector<2xi32>
    %436 = vector.multi_reduction <minsi>, %435, %cst_95 [1] : vector<2x16xi32> to vector<2xi32>
    %437 = vector.shape_cast %436 : vector<2xi32> to vector<2x1xi32>
    %438 = vector.extract_strided_slice %22 {offsets = [8, 0], sizes = [2, 128], strides = [1, 1]} : vector<16x128xf32> to vector<2x128xf32>
    %439 = arith.addf %438, %403 : vector<2x128xf32>
    %440 = vector.extract_strided_slice %439 {offsets = [0, 0], sizes = [2, 96], strides = [1, 1]} : vector<2x128xf32> to vector<2x96xf32>
    %441 = arith.negf %440 : vector<2x96xf32>
    %442 = math.exp %441 : vector<2x96xf32>
    %cst_96 = arith.constant 1.000000e+00 : f32
    %443 = vector.broadcast %cst_96 : f32 to vector<2x96xf32>
    %444 = arith.addf %443, %442 : vector<2x96xf32>
    %445 = arith.divf %443, %444 : vector<2x96xf32>
    %446 = vector.extract_strided_slice %439 {offsets = [0, 96], sizes = [2, 32], strides = [1, 1]} : vector<2x128xf32> to vector<2x32xf32>
    %447 = math.tanh %446 : vector<2x32xf32>
    %448 = vector.extract_strided_slice %445 {offsets = [0, 32], sizes = [2, 32], strides = [1, 1]} : vector<2x96xf32> to vector<2x32xf32>
    %449 = arith.mulf %448, %398 : vector<2x32xf32>
    %450 = vector.extract_strided_slice %445 {offsets = [0, 0], sizes = [2, 32], strides = [1, 1]} : vector<2x96xf32> to vector<2x32xf32>
    %451 = arith.mulf %450, %447 : vector<2x32xf32>
    %452 = arith.addf %449, %451 : vector<2x32xf32>
    %453 = vector.extract_strided_slice %445 {offsets = [0, 64], sizes = [2, 32], strides = [1, 1]} : vector<2x96xf32> to vector<2x32xf32>
    %454 = math.tanh %452 : vector<2x32xf32>
    %455 = arith.mulf %453, %454 : vector<2x32xf32>
    %cst_97 = arith.constant dense<0.000000e+00> : vector<2x176xf32>
    %456 = tpu.matmul %455, %213, %cst_97 {dimension_numbers = #tpu.dot_dimension_numbers<[1], [0], [0], [1], [0, 0, 1, 1], [], []>} : vector<2x32xf32>, vector<32x176xf32>, vector<2x176xf32> -> vector<2x176xf32>
    %457 = vector.extract_strided_slice %456 {offsets = [0, 0], sizes = [2, 128], strides = [1, 1]} : vector<2x176xf32> to vector<2x128xf32>
    %458 = vector.extract_strided_slice %456 {offsets = [0, 128], sizes = [2, 32], strides = [1, 1]} : vector<2x176xf32> to vector<2x32xf32>
    %459 = vector.extract_strided_slice %456 {offsets = [0, 160], sizes = [2, 16], strides = [1, 1]} : vector<2x176xf32> to vector<2x16xf32>
    %460 = arith.addf %459, %218 : vector<2x16xf32>
    %cst_98 = arith.constant dense<0xFF800000> : vector<2xf32>
    %461 = vector.multi_reduction <maximumf>, %460, %cst_98 [1] : vector<2x16xf32> to vector<2xf32>
    %462 = vector.shape_cast %461 : vector<2xf32> to vector<2x1xf32>
    %463 = vector.broadcast %462 : vector<2x1xf32> to vector<2x16xf32>
    %464 = arith.subf %460, %463 : vector<2x16xf32>
    %465 = math.exp %464 : vector<2x16xf32>
    %cst_99 = arith.constant dense<0.000000e+00> : vector<2xf32>
    %466 = vector.multi_reduction <add>, %465, %cst_99 [1] : vector<2x16xf32> to vector<2xf32>
    %467 = vector.shape_cast %466 : vector<2xf32> to vector<2x1xf32>
    %468 = vector.broadcast %467 : vector<2x1xf32> to vector<2x16xf32>
    %469 = arith.divf %465, %468 : vector<2x16xf32>
    %cst_100 = arith.constant dense<0.000000e+00> : vector<2x32xf32>
    %470 = tpu.matmul %469, %211, %cst_100 {dimension_numbers = #tpu.dot_dimension_numbers<[1], [0], [0], [1], [0, 0, 1, 1], [], []>} : vector<2x16xf32>, vector<16x32xf32>, vector<2x32xf32> -> vector<2x32xf32>
    %471 = arith.addf %458, %470 : vector<2x32xf32>
    %472 = math.tanh %471 : vector<2x32xf32>
    %cst_101 = arith.constant dense<0.000000e+00> : vector<2x16xf32>
    %473 = tpu.matmul %472, %214, %cst_101 {dimension_numbers = #tpu.dot_dimension_numbers<[1], [0], [0], [1], [0, 0, 1, 1], [], []>} : vector<2x32xf32>, vector<32x16xf32>, vector<2x16xf32> -> vector<2x16xf32>
    %474 = arith.addf %473, %217 : vector<2x16xf32>
    %cst_102 = arith.constant dense<0xFF800000> : vector<2xf32>
    %475 = vector.multi_reduction <maximumf>, %474, %cst_102 [1] : vector<2x16xf32> to vector<2xf32>
    %476 = vector.shape_cast %475 : vector<2xf32> to vector<2x1xf32>
    %477 = vector.broadcast %476 : vector<2x1xf32> to vector<2x16xf32>
    %478 = arith.subf %474, %477 : vector<2x16xf32>
    %479 = math.exp %478 : vector<2x16xf32>
    %cst_103 = arith.constant dense<0.000000e+00> : vector<2xf32>
    %480 = vector.multi_reduction <add>, %479, %cst_103 [1] : vector<2x16xf32> to vector<2xf32>
    %481 = vector.shape_cast %480 : vector<2xf32> to vector<2x1xf32>
    %482 = math.log %481 : vector<2x1xf32>
    %483 = arith.addf %482, %476 : vector<2x1xf32>
    %484 = vector.broadcast %483 : vector<2x1xf32> to vector<2x16xf32>
    %485 = arith.subf %474, %484 : vector<2x16xf32>
    %486 = vector.broadcast %476 : vector<2x1xf32> to vector<2x16xf32>
    %487 = arith.cmpf oge, %474, %486 : vector<2x16xf32>
    %c16_i32_104 = arith.constant 16 : i32
    %488 = vector.broadcast %c16_i32_104 : i32 to vector<2x16xi32>
    %489 = arith.select %487, %219, %488 : vector<2x16xi1>, vector<2x16xi32>
    %cst_105 = arith.constant dense<2147483647> : vector<2xi32>
    %490 = vector.multi_reduction <minsi>, %489, %cst_105 [1] : vector<2x16xi32> to vector<2xi32>
    %491 = vector.shape_cast %490 : vector<2xi32> to vector<2x1xi32>
    %492 = vector.extract_strided_slice %22 {offsets = [10, 0], sizes = [2, 128], strides = [1, 1]} : vector<16x128xf32> to vector<2x128xf32>
    %493 = arith.addf %492, %457 : vector<2x128xf32>
    %494 = vector.extract_strided_slice %493 {offsets = [0, 0], sizes = [2, 96], strides = [1, 1]} : vector<2x128xf32> to vector<2x96xf32>
    %495 = arith.negf %494 : vector<2x96xf32>
    %496 = math.exp %495 : vector<2x96xf32>
    %cst_106 = arith.constant 1.000000e+00 : f32
    %497 = vector.broadcast %cst_106 : f32 to vector<2x96xf32>
    %498 = arith.addf %497, %496 : vector<2x96xf32>
    %499 = arith.divf %497, %498 : vector<2x96xf32>
    %500 = vector.extract_strided_slice %493 {offsets = [0, 96], sizes = [2, 32], strides = [1, 1]} : vector<2x128xf32> to vector<2x32xf32>
    %501 = math.tanh %500 : vector<2x32xf32>
    %502 = vector.extract_strided_slice %499 {offsets = [0, 32], sizes = [2, 32], strides = [1, 1]} : vector<2x96xf32> to vector<2x32xf32>
    %503 = arith.mulf %502, %452 : vector<2x32xf32>
    %504 = vector.extract_strided_slice %499 {offsets = [0, 0], sizes = [2, 32], strides = [1, 1]} : vector<2x96xf32> to vector<2x32xf32>
    %505 = arith.mulf %504, %501 : vector<2x32xf32>
    %506 = arith.addf %503, %505 : vector<2x32xf32>
    %507 = vector.extract_strided_slice %499 {offsets = [0, 64], sizes = [2, 32], strides = [1, 1]} : vector<2x96xf32> to vector<2x32xf32>
    %508 = math.tanh %506 : vector<2x32xf32>
    %509 = arith.mulf %507, %508 : vector<2x32xf32>
    %cst_107 = arith.constant dense<0.000000e+00> : vector<2x176xf32>
    %510 = tpu.matmul %509, %213, %cst_107 {dimension_numbers = #tpu.dot_dimension_numbers<[1], [0], [0], [1], [0, 0, 1, 1], [], []>} : vector<2x32xf32>, vector<32x176xf32>, vector<2x176xf32> -> vector<2x176xf32>
    %511 = vector.extract_strided_slice %510 {offsets = [0, 0], sizes = [2, 128], strides = [1, 1]} : vector<2x176xf32> to vector<2x128xf32>
    %512 = vector.extract_strided_slice %510 {offsets = [0, 128], sizes = [2, 32], strides = [1, 1]} : vector<2x176xf32> to vector<2x32xf32>
    %513 = vector.extract_strided_slice %510 {offsets = [0, 160], sizes = [2, 16], strides = [1, 1]} : vector<2x176xf32> to vector<2x16xf32>
    %514 = arith.addf %513, %218 : vector<2x16xf32>
    %cst_108 = arith.constant dense<0xFF800000> : vector<2xf32>
    %515 = vector.multi_reduction <maximumf>, %514, %cst_108 [1] : vector<2x16xf32> to vector<2xf32>
    %516 = vector.shape_cast %515 : vector<2xf32> to vector<2x1xf32>
    %517 = vector.broadcast %516 : vector<2x1xf32> to vector<2x16xf32>
    %518 = arith.subf %514, %517 : vector<2x16xf32>
    %519 = math.exp %518 : vector<2x16xf32>
    %cst_109 = arith.constant dense<0.000000e+00> : vector<2xf32>
    %520 = vector.multi_reduction <add>, %519, %cst_109 [1] : vector<2x16xf32> to vector<2xf32>
    %521 = vector.shape_cast %520 : vector<2xf32> to vector<2x1xf32>
    %522 = vector.broadcast %521 : vector<2x1xf32> to vector<2x16xf32>
    %523 = arith.divf %519, %522 : vector<2x16xf32>
    %cst_110 = arith.constant dense<0.000000e+00> : vector<2x32xf32>
    %524 = tpu.matmul %523, %211, %cst_110 {dimension_numbers = #tpu.dot_dimension_numbers<[1], [0], [0], [1], [0, 0, 1, 1], [], []>} : vector<2x16xf32>, vector<16x32xf32>, vector<2x32xf32> -> vector<2x32xf32>
    %525 = arith.addf %512, %524 : vector<2x32xf32>
    %526 = math.tanh %525 : vector<2x32xf32>
    %cst_111 = arith.constant dense<0.000000e+00> : vector<2x16xf32>
    %527 = tpu.matmul %526, %214, %cst_111 {dimension_numbers = #tpu.dot_dimension_numbers<[1], [0], [0], [1], [0, 0, 1, 1], [], []>} : vector<2x32xf32>, vector<32x16xf32>, vector<2x16xf32> -> vector<2x16xf32>
    %528 = arith.addf %527, %217 : vector<2x16xf32>
    %cst_112 = arith.constant dense<0xFF800000> : vector<2xf32>
    %529 = vector.multi_reduction <maximumf>, %528, %cst_112 [1] : vector<2x16xf32> to vector<2xf32>
    %530 = vector.shape_cast %529 : vector<2xf32> to vector<2x1xf32>
    %531 = vector.broadcast %530 : vector<2x1xf32> to vector<2x16xf32>
    %532 = arith.subf %528, %531 : vector<2x16xf32>
    %533 = math.exp %532 : vector<2x16xf32>
    %cst_113 = arith.constant dense<0.000000e+00> : vector<2xf32>
    %534 = vector.multi_reduction <add>, %533, %cst_113 [1] : vector<2x16xf32> to vector<2xf32>
    %535 = vector.shape_cast %534 : vector<2xf32> to vector<2x1xf32>
    %536 = math.log %535 : vector<2x1xf32>
    %537 = arith.addf %536, %530 : vector<2x1xf32>
    %538 = vector.broadcast %537 : vector<2x1xf32> to vector<2x16xf32>
    %539 = arith.subf %528, %538 : vector<2x16xf32>
    %540 = vector.broadcast %530 : vector<2x1xf32> to vector<2x16xf32>
    %541 = arith.cmpf oge, %528, %540 : vector<2x16xf32>
    %c16_i32_114 = arith.constant 16 : i32
    %542 = vector.broadcast %c16_i32_114 : i32 to vector<2x16xi32>
    %543 = arith.select %541, %219, %542 : vector<2x16xi1>, vector<2x16xi32>
    %cst_115 = arith.constant dense<2147483647> : vector<2xi32>
    %544 = vector.multi_reduction <minsi>, %543, %cst_115 [1] : vector<2x16xi32> to vector<2xi32>
    %545 = vector.shape_cast %544 : vector<2xi32> to vector<2x1xi32>
    %546 = vector.extract_strided_slice %22 {offsets = [12, 0], sizes = [2, 128], strides = [1, 1]} : vector<16x128xf32> to vector<2x128xf32>
    %547 = arith.addf %546, %511 : vector<2x128xf32>
    %548 = vector.extract_strided_slice %547 {offsets = [0, 0], sizes = [2, 96], strides = [1, 1]} : vector<2x128xf32> to vector<2x96xf32>
    %549 = arith.negf %548 : vector<2x96xf32>
    %550 = math.exp %549 : vector<2x96xf32>
    %cst_116 = arith.constant 1.000000e+00 : f32
    %551 = vector.broadcast %cst_116 : f32 to vector<2x96xf32>
    %552 = arith.addf %551, %550 : vector<2x96xf32>
    %553 = arith.divf %551, %552 : vector<2x96xf32>
    %554 = vector.extract_strided_slice %547 {offsets = [0, 96], sizes = [2, 32], strides = [1, 1]} : vector<2x128xf32> to vector<2x32xf32>
    %555 = math.tanh %554 : vector<2x32xf32>
    %556 = vector.extract_strided_slice %553 {offsets = [0, 32], sizes = [2, 32], strides = [1, 1]} : vector<2x96xf32> to vector<2x32xf32>
    %557 = arith.mulf %556, %506 : vector<2x32xf32>
    %558 = vector.extract_strided_slice %553 {offsets = [0, 0], sizes = [2, 32], strides = [1, 1]} : vector<2x96xf32> to vector<2x32xf32>
    %559 = arith.mulf %558, %555 : vector<2x32xf32>
    %560 = arith.addf %557, %559 : vector<2x32xf32>
    %561 = vector.extract_strided_slice %553 {offsets = [0, 64], sizes = [2, 32], strides = [1, 1]} : vector<2x96xf32> to vector<2x32xf32>
    %562 = math.tanh %560 : vector<2x32xf32>
    %563 = arith.mulf %561, %562 : vector<2x32xf32>
    %cst_117 = arith.constant dense<0.000000e+00> : vector<2x176xf32>
    %564 = tpu.matmul %563, %213, %cst_117 {dimension_numbers = #tpu.dot_dimension_numbers<[1], [0], [0], [1], [0, 0, 1, 1], [], []>} : vector<2x32xf32>, vector<32x176xf32>, vector<2x176xf32> -> vector<2x176xf32>
    %565 = vector.extract_strided_slice %564 {offsets = [0, 0], sizes = [2, 128], strides = [1, 1]} : vector<2x176xf32> to vector<2x128xf32>
    %566 = vector.extract_strided_slice %564 {offsets = [0, 128], sizes = [2, 32], strides = [1, 1]} : vector<2x176xf32> to vector<2x32xf32>
    %567 = vector.extract_strided_slice %564 {offsets = [0, 160], sizes = [2, 16], strides = [1, 1]} : vector<2x176xf32> to vector<2x16xf32>
    %568 = arith.addf %567, %218 : vector<2x16xf32>
    %cst_118 = arith.constant dense<0xFF800000> : vector<2xf32>
    %569 = vector.multi_reduction <maximumf>, %568, %cst_118 [1] : vector<2x16xf32> to vector<2xf32>
    %570 = vector.shape_cast %569 : vector<2xf32> to vector<2x1xf32>
    %571 = vector.broadcast %570 : vector<2x1xf32> to vector<2x16xf32>
    %572 = arith.subf %568, %571 : vector<2x16xf32>
    %573 = math.exp %572 : vector<2x16xf32>
    %cst_119 = arith.constant dense<0.000000e+00> : vector<2xf32>
    %574 = vector.multi_reduction <add>, %573, %cst_119 [1] : vector<2x16xf32> to vector<2xf32>
    %575 = vector.shape_cast %574 : vector<2xf32> to vector<2x1xf32>
    %576 = vector.broadcast %575 : vector<2x1xf32> to vector<2x16xf32>
    %577 = arith.divf %573, %576 : vector<2x16xf32>
    %cst_120 = arith.constant dense<0.000000e+00> : vector<2x32xf32>
    %578 = tpu.matmul %577, %211, %cst_120 {dimension_numbers = #tpu.dot_dimension_numbers<[1], [0], [0], [1], [0, 0, 1, 1], [], []>} : vector<2x16xf32>, vector<16x32xf32>, vector<2x32xf32> -> vector<2x32xf32>
    %579 = arith.addf %566, %578 : vector<2x32xf32>
    %580 = math.tanh %579 : vector<2x32xf32>
    %cst_121 = arith.constant dense<0.000000e+00> : vector<2x16xf32>
    %581 = tpu.matmul %580, %214, %cst_121 {dimension_numbers = #tpu.dot_dimension_numbers<[1], [0], [0], [1], [0, 0, 1, 1], [], []>} : vector<2x32xf32>, vector<32x16xf32>, vector<2x16xf32> -> vector<2x16xf32>
    %582 = arith.addf %581, %217 : vector<2x16xf32>
    %cst_122 = arith.constant dense<0xFF800000> : vector<2xf32>
    %583 = vector.multi_reduction <maximumf>, %582, %cst_122 [1] : vector<2x16xf32> to vector<2xf32>
    %584 = vector.shape_cast %583 : vector<2xf32> to vector<2x1xf32>
    %585 = vector.broadcast %584 : vector<2x1xf32> to vector<2x16xf32>
    %586 = arith.subf %582, %585 : vector<2x16xf32>
    %587 = math.exp %586 : vector<2x16xf32>
    %cst_123 = arith.constant dense<0.000000e+00> : vector<2xf32>
    %588 = vector.multi_reduction <add>, %587, %cst_123 [1] : vector<2x16xf32> to vector<2xf32>
    %589 = vector.shape_cast %588 : vector<2xf32> to vector<2x1xf32>
    %590 = math.log %589 : vector<2x1xf32>
    %591 = arith.addf %590, %584 : vector<2x1xf32>
    %592 = vector.broadcast %591 : vector<2x1xf32> to vector<2x16xf32>
    %593 = arith.subf %582, %592 : vector<2x16xf32>
    %594 = vector.broadcast %584 : vector<2x1xf32> to vector<2x16xf32>
    %595 = arith.cmpf oge, %582, %594 : vector<2x16xf32>
    %c16_i32_124 = arith.constant 16 : i32
    %596 = vector.broadcast %c16_i32_124 : i32 to vector<2x16xi32>
    %597 = arith.select %595, %219, %596 : vector<2x16xi1>, vector<2x16xi32>
    %cst_125 = arith.constant dense<2147483647> : vector<2xi32>
    %598 = vector.multi_reduction <minsi>, %597, %cst_125 [1] : vector<2x16xi32> to vector<2xi32>
    %599 = vector.shape_cast %598 : vector<2xi32> to vector<2x1xi32>
    %600 = vector.extract_strided_slice %22 {offsets = [14, 0], sizes = [2, 128], strides = [1, 1]} : vector<16x128xf32> to vector<2x128xf32>
    %601 = arith.addf %600, %565 : vector<2x128xf32>
    %602 = vector.extract_strided_slice %601 {offsets = [0, 0], sizes = [2, 96], strides = [1, 1]} : vector<2x128xf32> to vector<2x96xf32>
    %603 = arith.negf %602 : vector<2x96xf32>
    %604 = math.exp %603 : vector<2x96xf32>
    %cst_126 = arith.constant 1.000000e+00 : f32
    %605 = vector.broadcast %cst_126 : f32 to vector<2x96xf32>
    %606 = arith.addf %605, %604 : vector<2x96xf32>
    %607 = arith.divf %605, %606 : vector<2x96xf32>
    %608 = vector.extract_strided_slice %601 {offsets = [0, 96], sizes = [2, 32], strides = [1, 1]} : vector<2x128xf32> to vector<2x32xf32>
    %609 = math.tanh %608 : vector<2x32xf32>
    %610 = vector.extract_strided_slice %607 {offsets = [0, 32], sizes = [2, 32], strides = [1, 1]} : vector<2x96xf32> to vector<2x32xf32>
    %611 = arith.mulf %610, %560 : vector<2x32xf32>
    %612 = vector.extract_strided_slice %607 {offsets = [0, 0], sizes = [2, 32], strides = [1, 1]} : vector<2x96xf32> to vector<2x32xf32>
    %613 = arith.mulf %612, %609 : vector<2x32xf32>
    %614 = arith.addf %611, %613 : vector<2x32xf32>
    %615 = vector.extract_strided_slice %607 {offsets = [0, 64], sizes = [2, 32], strides = [1, 1]} : vector<2x96xf32> to vector<2x32xf32>
    %616 = math.tanh %614 : vector<2x32xf32>
    %617 = arith.mulf %615, %616 : vector<2x32xf32>
    %cst_127 = arith.constant dense<0.000000e+00> : vector<2x176xf32>
    %618 = tpu.matmul %617, %213, %cst_127 {dimension_numbers = #tpu.dot_dimension_numbers<[1], [0], [0], [1], [0, 0, 1, 1], [], []>} : vector<2x32xf32>, vector<32x176xf32>, vector<2x176xf32> -> vector<2x176xf32>
    %619 = vector.extract_strided_slice %618 {offsets = [0, 128], sizes = [2, 32], strides = [1, 1]} : vector<2x176xf32> to vector<2x32xf32>
    %620 = vector.extract_strided_slice %618 {offsets = [0, 160], sizes = [2, 16], strides = [1, 1]} : vector<2x176xf32> to vector<2x16xf32>
    %621 = arith.addf %620, %218 : vector<2x16xf32>
    %cst_128 = arith.constant dense<0xFF800000> : vector<2xf32>
    %622 = vector.multi_reduction <maximumf>, %621, %cst_128 [1] : vector<2x16xf32> to vector<2xf32>
    %623 = vector.shape_cast %622 : vector<2xf32> to vector<2x1xf32>
    %624 = vector.broadcast %623 : vector<2x1xf32> to vector<2x16xf32>
    %625 = arith.subf %621, %624 : vector<2x16xf32>
    %626 = math.exp %625 : vector<2x16xf32>
    %cst_129 = arith.constant dense<0.000000e+00> : vector<2xf32>
    %627 = vector.multi_reduction <add>, %626, %cst_129 [1] : vector<2x16xf32> to vector<2xf32>
    %628 = vector.shape_cast %627 : vector<2xf32> to vector<2x1xf32>
    %629 = vector.broadcast %628 : vector<2x1xf32> to vector<2x16xf32>
    %630 = arith.divf %626, %629 : vector<2x16xf32>
    %cst_130 = arith.constant dense<0.000000e+00> : vector<2x32xf32>
    %631 = tpu.matmul %630, %211, %cst_130 {dimension_numbers = #tpu.dot_dimension_numbers<[1], [0], [0], [1], [0, 0, 1, 1], [], []>} : vector<2x16xf32>, vector<16x32xf32>, vector<2x32xf32> -> vector<2x32xf32>
    %632 = arith.addf %619, %631 : vector<2x32xf32>
    %633 = math.tanh %632 : vector<2x32xf32>
    %cst_131 = arith.constant dense<0.000000e+00> : vector<2x16xf32>
    %634 = tpu.matmul %633, %214, %cst_131 {dimension_numbers = #tpu.dot_dimension_numbers<[1], [0], [0], [1], [0, 0, 1, 1], [], []>} : vector<2x32xf32>, vector<32x16xf32>, vector<2x16xf32> -> vector<2x16xf32>
    %635 = arith.addf %634, %217 : vector<2x16xf32>
    %cst_132 = arith.constant dense<0xFF800000> : vector<2xf32>
    %636 = vector.multi_reduction <maximumf>, %635, %cst_132 [1] : vector<2x16xf32> to vector<2xf32>
    %637 = vector.shape_cast %636 : vector<2xf32> to vector<2x1xf32>
    %638 = vector.broadcast %637 : vector<2x1xf32> to vector<2x16xf32>
    %639 = arith.subf %635, %638 : vector<2x16xf32>
    %640 = math.exp %639 : vector<2x16xf32>
    %cst_133 = arith.constant dense<0.000000e+00> : vector<2xf32>
    %641 = vector.multi_reduction <add>, %640, %cst_133 [1] : vector<2x16xf32> to vector<2xf32>
    %642 = vector.shape_cast %641 : vector<2xf32> to vector<2x1xf32>
    %643 = math.log %642 : vector<2x1xf32>
    %644 = arith.addf %643, %637 : vector<2x1xf32>
    %645 = vector.broadcast %644 : vector<2x1xf32> to vector<2x16xf32>
    %646 = arith.subf %635, %645 : vector<2x16xf32>
    %647 = vector.broadcast %637 : vector<2x1xf32> to vector<2x16xf32>
    %648 = arith.cmpf oge, %635, %647 : vector<2x16xf32>
    %c16_i32_134 = arith.constant 16 : i32
    %649 = vector.broadcast %c16_i32_134 : i32 to vector<2x16xi32>
    %650 = arith.select %648, %219, %649 : vector<2x16xi1>, vector<2x16xi32>
    %cst_135 = arith.constant dense<2147483647> : vector<2xi32>
    %651 = vector.multi_reduction <minsi>, %650, %cst_135 [1] : vector<2x16xi32> to vector<2xi32>
    %652 = vector.shape_cast %651 : vector<2xi32> to vector<2x1xi32>
    %653 = tpu.concatenate %269, %323, %377, %431, %485, %539, %593, %646 in 1 : vector<2x16xf32>, vector<2x16xf32>, vector<2x16xf32>, vector<2x16xf32>, vector<2x16xf32>, vector<2x16xf32>, vector<2x16xf32>, vector<2x16xf32> -> vector<2x128xf32>
    %c0_136 = arith.constant 0 : index
    %c0_137 = arith.constant 0 : index
    %654 = vector.load %arg15[%c0_136, %c0_137] : memref<2x128xf32, #tpu.memory_space<vmem>>, vector<2x128xf32>
    tpu.vector_store %arg15[%c0_136, %c0_137], %653 {strides = array<i32>} : memref<2x128xf32, #tpu.memory_space<vmem>>, vector<2x128xf32>,
    %655 = tpu.concatenate %275, %329, %383, %437, %491, %545, %599, %652 in 1 : vector<2x1xi32>, vector<2x1xi32>, vector<2x1xi32>, vector<2x1xi32>, vector<2x1xi32>, vector<2x1xi32>, vector<2x1xi32>, vector<2x1xi32> -> vector<2x8xi32>
    %c0_138 = arith.constant 0 : index
    %c0_139 = arith.constant 0 : index
    %656 = vector.load %arg16[%c0_138, %c0_139] : memref<2x8xi32, #tpu.memory_space<vmem>>, vector<2x8xi32>
    tpu.vector_store %arg16[%c0_138, %c0_139], %655 {strides = array<i32>} : memref<2x8xi32, #tpu.memory_space<vmem>>, vector<2x8xi32>,
    return
  }
}

</mosaic_0001>

<llo_original>
// kernel: gains_forward.1
$region0: #{gains_forward.1}
  #allocation0 [shape = 'u32[]', space=smem, size = 0x4, offset = 0x4, fixed_abs, tag = 'smem constant byte address 0x4 - core index']
  #allocation1 [shape = 'u32[144,128]{1,0:T(1,128)}', space=vmem, size = 0x12000, scoped, tag = 'internal scratch']
  #allocation2 [shape = 'f32[1,1]{1,0:T(1,128)S(1)}', space=vmem, size = 0x200, scoped, tag = 'scoped memory for gains_forward.1']
  %s0 = inlined_call_operand.vmem [shape: s32[16,1], index: 0, kind: input, shape index: {}]
  %s1 = inlined_call_operand.vmem [shape: s32[16,1], index: 1, kind: input, shape index: {}]
  %s2 = inlined_call_operand.hbm [shape: f32[16,32], index: 2, kind: input, shape index: {}]
  %s3 = inlined_call_operand.hbm [shape: f32[16,32], index: 3, kind: input, shape index: {}]
  %s4 = inlined_call_operand.vmem [shape: f32[32,256], index: 4, kind: input, shape index: {}]
  %s5 = inlined_call_operand.vmem [shape: f32[1,256], index: 5, kind: input, shape index: {}]
  %s6 = inlined_call_operand.vmem [shape: f32[32,128], index: 6, kind: input, shape index: {}]
  %s7 = inlined_call_operand.vmem [shape: f32[32,1], index: 7, kind: input, shape index: {}]
  %s8 = inlined_call_operand.<no memory space> [shape: f32[1,1], index: 8, kind: input, shape index: {}]
  %s9 = inlined_call_operand.vmem [shape: f32[32,160], index: 9, kind: input, shape index: {}]
  %s10 = inlined_call_operand.vmem [shape: f32[32,32], index: 10, kind: input, shape index: {}]
  %s11 = inlined_call_operand.vmem [shape: f32[32,16], index: 11, kind: input, shape index: {}]
  %s12 = inlined_call_operand.hbm [shape: f32[1,16], index: 12, kind: input, shape index: {}]
  %s13 = inlined_call_operand.hbm [shape: f32[2,16], index: 13, kind: input, shape index: {}]
  %s14 = inlined_call_operand.vmem [shape: f32[2,1], index: 14, kind: output, shape index: {0}]
  %s15 = inlined_call_operand.vmem [shape: f32[2,128], index: 15, kind: output, shape index: {1}]
  %s16 = inlined_call_operand.hbm [shape: s32[2,8], index: 16, kind: output, shape index: {2}]
  %17 = xla_tuple %s14, %s15, %s16
  %s18 = sld [smem:[#allocation0]]
  $region98: #{gains_forward.1} parent=0
    _
  %s20 = ssub.s32 1, %s18
  %s21 = scalar_select 0, %s20, %s18
  %v22 = vstv %s8
  %23 = vst [vmem:[#allocation2] sm:$0x1] %v22
  $region1: #{gains_forward.1} parent=0
    #allocation3 [shape = 'u8[8192]{0}', space=vmem, size = 0x2000, scoped, tag = 'input window, operand 2, single buffered']
    #allocation4 [shape = 's32[1]{0}', space=sflag, size = 0x4, scoped, tag = 'scoped memory for gains_forward.1']
    #allocation5 [shape = 's32[1]{0}', space=sflag, size = 0x4, scoped, tag = 'scoped memory for gains_forward.1']
    #allocation6 [shape = 'u8[8192]{0}', space=vmem, size = 0x2000, scoped, tag = 'input window, operand 3, single buffered']
    #allocation7 [shape = 's32[1]{0}', space=sflag, size = 0x4, scoped, tag = 'scoped memory for gains_forward.1']
    #allocation8 [shape = 'u8[512]{0}', space=vmem, size = 0x400, scoped, tag = 'input window, operand 12, single buffered']
    #allocation9 [shape = 'u8[1024]{0}', space=vmem, size = 0x400, scoped, tag = 'input window, operand 13, single buffered']
    #allocation10 [shape = 's32[1]{0}', space=sflag, size = 0x4, scoped, tag = 'scoped memory for gains_forward.1']
    #allocation11 [shape = 'u8[1024]{0}', space=vmem, size = 0x400, scoped, tag = 'output window, operand 2, single buffered']
    %24 = vsyncpa [#allocation4], 0
    %25 = vsyncpa [#allocation7], 0
    %26 = vsyncpa [#allocation10], 0
    %27 = vsyncpa [#allocation5], 0
    // Predicated region
    $region2: #{gains_forward.1} parent=1 // pred_check
      _
    $region3: #{gains_forward.1} parent=1 // pred_check_branch
      %29 = sbr.rel (0) target = $region5
    $region4: #{gains_forward.1} parent=1 // pred_region
      _
    $region5: #{gains_forward.1} parent=1 // pred_fallthru
      _
    // Predicated region
    $region6: #{gains_forward.1} parent=1 // pred_check
      _
    $region7: #{gains_forward.1} parent=1 // pred_check_branch
      %31 = sbr.rel (0) target = $region9
    $region8: #{gains_forward.1} parent=1 // pred_region
      _
    $region9: #{gains_forward.1} parent=1 // pred_fallthru
      _
    // Predicated region
    $region10: #{gains_forward.1} parent=1 // pred_check
      _
    $region11: #{gains_forward.1} parent=1 // pred_check_branch
      %33 = sbr.rel (0) target = $region13
    $region12: #{gains_forward.1} parent=1 // pred_region
      %s35 = ssub.s32 256, 256
      %36 = vsyncadd [#allocation4], %s35
      %s37 = sshll.u32 [#allocation3], 4
      %s38 = int_to_ptr.vmem [resolvable:$true] %s37
      %43 = dma.hbm_to_vmem [thread:$0]  %s2, 256, %s38, [#allocation4], 128, 128, 8
    $region13: #{gains_forward.1} parent=1 // pred_fallthru
      _
    // Predicated region
    $region14: #{gains_forward.1} parent=1 // pred_check
      _
    $region15: #{gains_forward.1} parent=1 // pred_check_branch
      %45 = sbr.rel (0) target = $region17
    $region16: #{gains_forward.1} parent=1 // pred_region
      %s47 = ssub.s32 256, 256
      %48 = vsyncadd [#allocation7], %s47
      %s49 = sshll.u32 [#allocation6], 4
      %s50 = int_to_ptr.vmem [resolvable:$true] %s49
      %55 = dma.hbm_to_vmem [thread:$0]  %s3, 256, %s50, [#allocation7], 128, 128, 8
    $region17: #{gains_forward.1} parent=1 // pred_fallthru
      _
    // Predicated region
    $region18: #{gains_forward.1} parent=1 // pred_check
      _
    $region19: #{gains_forward.1} parent=1 // pred_check_branch
      %57 = sbr.rel (0) target = $region21
    $region20: #{gains_forward.1} parent=1 // pred_region
      _
    $region21: #{gains_forward.1} parent=1 // pred_fallthru
      _
    // Predicated region
    $region22: #{gains_forward.1} parent=1 // pred_check
      _
    $region23: #{gains_forward.1} parent=1 // pred_check_branch
      %59 = sbr.rel (0) target = $region25
    $region24: #{gains_forward.1} parent=1 // pred_region
      _
    $region25: #{gains_forward.1} parent=1 // pred_fallthru
      _
    // Predicated region
    $region26: #{gains_forward.1} parent=1 // pred_check
      _
    $region27: #{gains_forward.1} parent=1 // pred_check_branch
      %61 = sbr.rel (0) target = $region29
    $region28: #{gains_forward.1} parent=1 // pred_region
      _
    $region29: #{gains_forward.1} parent=1 // pred_fallthru
      _
    // Predicated region
    $region30: #{gains_forward.1} parent=1 // pred_check
      _
    $region31: #{gains_forward.1} parent=1 // pred_check_branch
      %63 = sbr.rel (0) target = $region33
    $region32: #{gains_forward.1} parent=1 // pred_region
      _
    $region33: #{gains_forward.1} parent=1 // pred_fallthru
      _
    // Predicated region
    $region34: #{gains_forward.1} parent=1 // pred_check
      _
    $region35: #{gains_forward.1} parent=1 // pred_check_branch
      %65 = sbr.rel (0) target = $region37
    $region36: #{gains_forward.1} parent=1 // pred_region
      _
    $region37: #{gains_forward.1} parent=1 // pred_fallthru
      _
    // Predicated region
    $region38: #{gains_forward.1} parent=1 // pred_check
      _
    $region39: #{gains_forward.1} parent=1 // pred_check_branch
      %67 = sbr.rel (0) target = $region41
    $region40: #{gains_forward.1} parent=1 // pred_region
      _
    $region41: #{gains_forward.1} parent=1 // pred_fallthru
      _
    // Predicated region
    $region42: #{gains_forward.1} parent=1 // pred_check
      _
    $region43: #{gains_forward.1} parent=1 // pred_check_branch
      %69 = sbr.rel (0) target = $region45
    $region44: #{gains_forward.1} parent=1 // pred_region
      _
    $region45: #{gains_forward.1} parent=1 // pred_fallthru
      _
    // Predicated region
    $region46: #{gains_forward.1} parent=1 // pred_check
      _
    $region47: #{gains_forward.1} parent=1 // pred_check_branch
      %71 = sbr.rel (0) target = $region49
    $region48: #{gains_forward.1} parent=1 // pred_region
      _
    $region49: #{gains_forward.1} parent=1 // pred_fallthru
      _
    // Predicated region
    $region50: #{gains_forward.1} parent=1 // pred_check
      _
    $region51: #{gains_forward.1} parent=1 // pred_check_branch
      %73 = sbr.rel (0) target = $region53
    $region52: #{gains_forward.1} parent=1 // pred_region
      %s75 = ssub.s32 16, 16
      %76 = vsyncadd [#allocation7], %s75
      %s78 = sshll.u32 [#allocation8], 4
      %s79 = int_to_ptr.vmem [resolvable:$true] %s78
      %81 = dma.hbm_to_vmem [thread:$0]  %s12, 16, %s79, [#allocation7]
    $region53: #{gains_forward.1} parent=1 // pred_fallthru
      _
    // Predicated region
    $region54: #{gains_forward.1} parent=1 // pred_check
      _
    $region55: #{gains_forward.1} parent=1 // pred_check_branch
      %83 = sbr.rel (0) target = $region57
    $region56: #{gains_forward.1} parent=1 // pred_region
      %s85 = ssub.s32 32, 32
      %86 = vsyncadd [#allocation10], %s85
      %s88 = sshll.u32 [#allocation9], 4
      %s89 = int_to_ptr.vmem [resolvable:$true] %s88
      %91 = dma.hbm_to_vmem [thread:$0]  %s13, 32, %s89, [#allocation10]
    $region57: #{gains_forward.1} parent=1 // pred_fallthru
      _
    // Predicated region
    $region58: #{gains_forward.1} parent=1 // pred_check
      _
    $region59: #{gains_forward.1} parent=1 // pred_check_branch
      %93 = sbr.rel (0) target = $region61
    $region60: #{gains_forward.1} parent=1 // pred_region
      %94 = dma.done [#allocation4], 256
    $region61: #{gains_forward.1} parent=1 // pred_fallthru
      _
    // Predicated region
    $region62: #{gains_forward.1} parent=1 // pred_check
      _
    $region63: #{gains_forward.1} parent=1 // pred_check_branch
      %96 = sbr.rel (0) target = $region65
    $region64: #{gains_forward.1} parent=1 // pred_region
      %97 = dma.done [#allocation7], 256
    $region65: #{gains_forward.1} parent=1 // pred_fallthru
      _
    // Predicated region
    $region66: #{gains_forward.1} parent=1 // pred_check
      _
    $region67: #{gains_forward.1} parent=1 // pred_check_branch
      %99 = sbr.rel (0) target = $region69
    $region68: #{gains_forward.1} parent=1 // pred_region
      %100 = dma.done [#allocation7], 16
    $region69: #{gains_forward.1} parent=1 // pred_fallthru
      _
    // Predicated region
    $region70: #{gains_forward.1} parent=1 // pred_check
      _
    $region71: #{gains_forward.1} parent=1 // pred_check_branch
      %102 = sbr.rel (0) target = $region73
    $region72: #{gains_forward.1} parent=1 // pred_region
      %103 = dma.done [#allocation10], 32
    $region73: #{gains_forward.1} parent=1 // pred_fallthru
      _
    %v104 = vlaneseq
    %v105 = vand.u32 %v104, 127
    %v106 = vld [vmem:[%s0] sm:$0xff]
    %v107 = vld [vmem:[%s0 + $0x8] sm:$0xff]
    %108 = vset.pattern.permute.xlu0 0
    %109 = vperm.xlu0 %108, %v106
    %v110 = vpop.permute.xlu0 %109
    %111 = vset.pattern.permute.xlu0 0
    %112 = vperm.xlu0 %111, %v107
    %v113 = vpop.permute.xlu0 %112
    %vm114 = vcmp.eq.s32.totalorder %v110, %v105
    %vm115 = vcmp.eq.s32.totalorder %v113, %v105
    %v116 = vsel %vm114, 1, 0
    %v117 = vsel %vm115, 1, 0
    %v118 = vcvt.s32.f32 %v116
    %v119 = vcvt.s32.f32 %v117
    %v120 = vld [vmem:[%s1] sm:$0xff]
    %v121 = vld [vmem:[%s1 + $0x8] sm:$0xff]
    %122 = vset.pattern.permute.xlu0 0
    %123 = vperm.xlu0 %122, %v120
    %v124 = vpop.permute.xlu0 %123
    %125 = vset.pattern.permute.xlu0 0
    %126 = vperm.xlu0 %125, %v121
    %v127 = vpop.permute.xlu0 %126
    %vm128 = vcmp.eq.s32.totalorder %v124, %v105
    %vm129 = vcmp.eq.s32.totalorder %v127, %v105
    %v130 = vsel %vm128, 1, 0
    %v131 = vsel %vm129, 1, 0
    %v132 = vcvt.s32.f32 %v130
    %v133 = vcvt.s32.f32 %v131
    %v134 = vld [vmem:[#allocation3] sm:$0xff]
    %v135 = vld [vmem:[#allocation3 + $0x8] sm:$0xff]
    %vm136 = vcmask 130048
    %v138 = vsel %vm136, %v118, 0
    %v141 = vsel %vm136, %v119, 0
    %143 = vmatprep.subr.mxu0 0.0
    %144 = vmatpush1.msra.mxu0 %v134
    %145 = vmatprep.subr.mxu0 0.0
    %146 = vmatpush1.msra.mxu0 %v135
    %147 = vmatprep.subr.mxu0 0.0
    %148 = vmatpush1.msra.mxu0 0.0
    %149 = vmatprep.subr.mxu0 0.0
    %150 = vmatpush1.msra.mxu0 0.0
    %151 = vmatprep.subr.mxu0 0.0
    %152 = vmatpush1.msra.mxu0 0.0
    %153 = vmatprep.subr.mxu0 0.0
    %154 = vmatpush1.msra.mxu0 0.0
    %155 = vmatprep.subr.mxu0 0.0
    %156 = vmatpush1.msra.mxu0 0.0
    %157 = vmatprep.subr.mxu0 0.0
    %158 = vmatpush1.msra.mxu0 0.0
    %159 = vmatprep.subr.mxu0 0.0
    %160 = vmatpush1.msra.mxu0 0.0
    %161 = vmatprep.subr.mxu0 0.0
    %162 = vmatpush1.msra.mxu0 0.0
    %163 = vmatprep.subr.mxu0 0.0
    %164 = vmatpush1.msra.mxu0 0.0
    %165 = vmatprep.subr.mxu0 0.0
    %166 = vmatpush1.msra.mxu0 0.0
    %167 = vmatprep.subr.mxu0 0.0
    %168 = vmatpush1.msra.mxu0 0.0
    %169 = vmatprep.subr.mxu0 0.0
    %170 = vmatpush1.msra.mxu0 0.0
    %171 = vmatprep.subr.mxu0 0.0
    %172 = vmatpush1.msra.mxu0 0.0
    %173 = vmatprep.subr.mxu0 0.0
    %174 = vmatpush1.msra.mxu0 0.0
    %175 = vmatprep.subr.mxu0 0.0
    %176 = vmatpush1.msra.mxu0 0.0
    %177 = vmatprep.subr.mxu0 0.0
    %178 = vmatpush1.msra.mxu0 0.0
    %179 = vmatprep.subr.mxu0 0.0
    %180 = vmatpush1.msra.mxu0 0.0
    %181 = vmatprep.subr.mxu0 0.0
    %182 = vmatpush1.msra.mxu0 0.0
    %183 = vmatprep.subr.mxu0 0.0
    %184 = vmatpush1.msra.mxu0 0.0
    %185 = vmatprep.subr.mxu0 0.0
    %186 = vmatpush1.msra.mxu0 0.0
    %187 = vmatprep.subr.mxu0 0.0
    %188 = vmatpush1.msra.mxu0 0.0
    %189 = vmatprep.subr.mxu0 0.0
    %190 = vmatpush1.msra.mxu0 0.0
    %191 = vmatprep.subr.mxu0 0.0
    %192 = vmatpush1.msra.mxu0 0.0
    %193 = vmatprep.subr.mxu0 0.0
    %194 = vmatpush1.msra.mxu0 0.0
    %195 = vmatprep.subr.mxu0 0.0
    %196 = vmatpush1.msra.mxu0 0.0
    %197 = vmatprep.subr.mxu0 0.0
    %198 = vmatpush1.msra.mxu0 0.0
    %199 = vmatprep.subr.mxu0 0.0
    %200 = vmatpush1.msra.mxu0 0.0
    %201 = vmatprep.subr.mxu0 0.0
    %202 = vmatpush1.msra.mxu0 0.0
    %203 = vmatprep.subr.mxu0 0.0
    %204 = vmatpush1.msra.mxu0 0.0
    %205 = vmatprep.subr.mxu0 0.0
    %206 = vmatpush1.msra.mxu0 0.0
    %207 = vmatprep.mubr.f32.mxu0 0.0
    %208 = vmatmul.mubr.f32.gmra.mrb[0].mxu0 %v138
    %v209 = vpop.f32.mrb[0].mxu0
    %v210 = vadd.f32 0.0, %v209
    %v211 = vpop.f32.mrb[0].mxu0
    %212 = vmatprep.mubr.f32.mxu0 0.0
    %213 = vmatmul.mubr.f32.gmra.mrb[0].mxu0 %v141
    %v214 = vpop.f32.mrb[0].mxu0
    %v215 = vadd.f32 0.0, %v214
    %v216 = vpop.f32.mrb[0].mxu0
    %217 = vdwg.mxu0
    %v218 = vld [vmem:[#allocation6] sm:$0xff]
    %v219 = vld [vmem:[#allocation6 + $0x8] sm:$0xff]
    %v221 = vsel %vm136, %v132, 0
    %v224 = vsel %vm136, %v133, 0
    %226 = vmatprep.subr.mxu0 0.0
    %227 = vmatpush1.msra.mxu0 %v218
    %228 = vmatprep.subr.mxu0 0.0
    %229 = vmatpush1.msra.mxu0 %v219
    %230 = vmatprep.subr.mxu0 0.0
    %231 = vmatpush1.msra.mxu0 0.0
    %232 = vmatprep.subr.mxu0 0.0
    %233 = vmatpush1.msra.mxu0 0.0
    %234 = vmatprep.subr.mxu0 0.0
    %235 = vmatpush1.msra.mxu0 0.0
    %236 = vmatprep.subr.mxu0 0.0
    %237 = vmatpush1.msra.mxu0 0.0
    %238 = vmatprep.subr.mxu0 0.0
    %239 = vmatpush1.msra.mxu0 0.0
    %240 = vmatprep.subr.mxu0 0.0
    %241 = vmatpush1.msra.mxu0 0.0
    %242 = vmatprep.subr.mxu0 0.0
    %243 = vmatpush1.msra.mxu0 0.0
    %244 = vmatprep.subr.mxu0 0.0
    %245 = vmatpush1.msra.mxu0 0.0
    %246 = vmatprep.subr.mxu0 0.0
    %247 = vmatpush1.msra.mxu0 0.0
    %248 = vmatprep.subr.mxu0 0.0
    %249 = vmatpush1.msra.mxu0 0.0
    %250 = vmatprep.subr.mxu0 0.0
    %251 = vmatpush1.msra.mxu0 0.0
    %252 = vmatprep.subr.mxu0 0.0
    %253 = vmatpush1.msra.mxu0 0.0
    %254 = vmatprep.subr.mxu0 0.0
    %255 = vmatpush1.msra.mxu0 0.0
    %256 = vmatprep.subr.mxu0 0.0
    %257 = vmatpush1.msra.mxu0 0.0
    %258 = vmatprep.subr.mxu0 0.0
    %259 = vmatpush1.msra.mxu0 0.0
    %260 = vmatprep.subr.mxu0 0.0
    %261 = vmatpush1.msra.mxu0 0.0
    %262 = vmatprep.subr.mxu0 0.0
    %263 = vmatpush1.msra.mxu0 0.0
    %264 = vmatprep.subr.mxu0 0.0
    %265 = vmatpush1.msra.mxu0 0.0
    %266 = vmatprep.subr.mxu0 0.0
    %267 = vmatpush1.msra.mxu0 0.0
    %268 = vmatprep.subr.mxu0 0.0
    %269 = vmatpush1.msra.mxu0 0.0
    %270 = vmatprep.subr.mxu0 0.0
    %271 = vmatpush1.msra.mxu0 0.0
    %272 = vmatprep.subr.mxu0 0.0
    %273 = vmatpush1.msra.mxu0 0.0
    %274 = vmatprep.subr.mxu0 0.0
    %275 = vmatpush1.msra.mxu0 0.0
    %276 = vmatprep.subr.mxu0 0.0
    %277 = vmatpush1.msra.mxu0 0.0
    %278 = vmatprep.subr.mxu0 0.0
    %279 = vmatpush1.msra.mxu0 0.0
    %280 = vmatprep.subr.mxu0 0.0
    %281 = vmatpush1.msra.mxu0 0.0
    %282 = vmatprep.subr.mxu0 0.0
    %283 = vmatpush1.msra.mxu0 0.0
    %284 = vmatprep.subr.mxu0 0.0
    %285 = vmatpush1.msra.mxu0 0.0
    %286 = vmatprep.subr.mxu0 0.0
    %287 = vmatpush1.msra.mxu0 0.0
    %288 = vmatprep.subr.mxu0 0.0
    %289 = vmatpush1.msra.mxu0 0.0
    %290 = vmatprep.mubr.f32.mxu0 0.0
    %291 = vmatmul.mubr.f32.gmra.mrb[0].mxu0 %v221
    %v292 = vpop.f32.mrb[0].mxu0
    %v293 = vadd.f32 0.0, %v292
    %v294 = vpop.f32.mrb[0].mxu0
    %295 = vmatprep.mubr.f32.mxu0 0.0
    %296 = vmatmul.mubr.f32.gmra.mrb[0].mxu0 %v224
    %v297 = vpop.f32.mrb[0].mxu0
    %v298 = vadd.f32 0.0, %v297
    %v299 = vpop.f32.mrb[0].mxu0
    %300 = vdwg.mxu0
    %v301 = vld [vmem:[%s4] sm:$0xff]
    %v302 = vld [vmem:[%s4 + $0x8] sm:$0xff]
    %v303 = vld [vmem:[%s4 + $0x10] sm:$0xff]
    %v304 = vld [vmem:[%s4 + $0x18] sm:$0xff]
    %v305 = vld [vmem:[%s4 + $0x20] sm:$0xff]
    %v306 = vld [vmem:[%s4 + $0x28] sm:$0xff]
    %v307 = vld [vmem:[%s4 + $0x30] sm:$0xff]
    %v308 = vld [vmem:[%s4 + $0x38] sm:$0xff]
    %v309 = vld [vmem:[%s5] sm:$0x3]
    %v311 = vlaneseq
    %v312 = vshrl.u32 %v311, 7
    %v313 = vsub.s32 0, %v312
    %v314 = vrot.slane %v309, %v313
    %v315 = vlaneseq
    %v316 = vshrl.u32 %v315, 7
    %v317 = vsub.s32 1, %v316
    %v318 = vrot.slane %v309, %v317
    %vm321 = vcmask 261120
    %v323 = vsel %vm321, %v210, 0
    %v326 = vsel %vm321, %v215, 0
    %v329 = vsel %vm321, %v293, 0
    %v332 = vsel %vm321, %v298, 0
    %334 = vmatprep.subr.mxu0 %v302
    %335 = vmatpush1.msra.mxu0 %v301
    %336 = vmatprep.subr.mxu0 %v304
    %337 = vmatpush1.msra.mxu0 %v303
    %338 = vmatprep.subr.mxu0 %v306
    %339 = vmatpush1.msra.mxu0 %v305
    %340 = vmatprep.subr.mxu0 %v308
    %341 = vmatpush1.msra.mxu0 %v307
    %342 = vmatprep.subr.mxu0 0.0
    %343 = vmatpush1.msra.mxu0 0.0
    %344 = vmatprep.subr.mxu0 0.0
    %345 = vmatpush1.msra.mxu0 0.0
    %346 = vmatprep.subr.mxu0 0.0
    %347 = vmatpush1.msra.mxu0 0.0
    %348 = vmatprep.subr.mxu0 0.0
    %349 = vmatpush1.msra.mxu0 0.0
    %350 = vmatprep.subr.mxu0 0.0
    %351 = vmatpush1.msra.mxu0 0.0
    %352 = vmatprep.subr.mxu0 0.0
    %353 = vmatpush1.msra.mxu0 0.0
    %354 = vmatprep.subr.mxu0 0.0
    %355 = vmatpush1.msra.mxu0 0.0
    %356 = vmatprep.subr.mxu0 0.0
    %357 = vmatpush1.msra.mxu0 0.0
    %358 = vmatprep.subr.mxu0 0.0
    %359 = vmatpush1.msra.mxu0 0.0
    %360 = vmatprep.subr.mxu0 0.0
    %361 = vmatpush1.msra.mxu0 0.0
    %362 = vmatprep.subr.mxu0 0.0
    %363 = vmatpush1.msra.mxu0 0.0
    %364 = vmatprep.subr.mxu0 0.0
    %365 = vmatpush1.msra.mxu0 0.0
    %366 = vmatprep.subr.mxu0 0.0
    %367 = vmatpush1.msra.mxu0 0.0
    %368 = vmatprep.subr.mxu0 0.0
    %369 = vmatpush1.msra.mxu0 0.0
    %370 = vmatprep.subr.mxu0 0.0
    %371 = vmatpush1.msra.mxu0 0.0
    %372 = vmatprep.subr.mxu0 0.0
    %373 = vmatpush1.msra.mxu0 0.0
    %374 = vmatprep.subr.mxu0 0.0
    %375 = vmatpush1.msra.mxu0 0.0
    %376 = vmatprep.subr.mxu0 0.0
    %377 = vmatpush1.msra.mxu0 0.0
    %378 = vmatprep.subr.mxu0 0.0
    %379 = vmatpush1.msra.mxu0 0.0
    %380 = vmatprep.subr.mxu0 0.0
    %381 = vmatpush1.msra.mxu0 0.0
    %382 = vmatprep.subr.mxu0 0.0
    %383 = vmatpush1.msra.mxu0 0.0
    %384 = vmatprep.subr.mxu0 0.0
    %385 = vmatpush1.msra.mxu0 0.0
    %386 = vmatprep.subr.mxu0 0.0
    %387 = vmatpush1.msra.mxu0 0.0
    %388 = vmatprep.subr.mxu0 0.0
    %389 = vmatpush1.msra.mxu0 0.0
    %390 = vmatprep.subr.mxu0 0.0
    %391 = vmatpush1.msra.mxu0 0.0
    %392 = vmatprep.subr.mxu0 0.0
    %393 = vmatpush1.msra.mxu0 0.0
    %394 = vmatprep.subr.mxu0 0.0
    %395 = vmatpush1.msra.mxu0 0.0
    %396 = vmatprep.subr.mxu0 0.0
    %397 = vmatpush1.msra.mxu0 0.0
    %398 = vmatprep.mubr.f32.mxu0 0.0
    %399 = vmatmul.mubr.f32.gmra.mrb[0].mxu0 %v323
    %v400 = vpop.f32.mrb[0].mxu0
    %v401 = vadd.f32 %v314, %v400
    %v402 = vpop.f32.mrb[0].mxu0
    %403 = vmatprep.mubr.f32.mxu0 0.0
    %404 = vmatmul.mubr.f32.gmra.mrb[0].mxu0 %v326
    %v405 = vpop.f32.mrb[0].mxu0
    %v406 = vadd.f32 %v314, %v405
    %v407 = vpop.f32.mrb[0].mxu0
    %408 = vmatprep.mubr.f32.mxu0 0.0
    %409 = vmatmul.mubr.f32.gmra.mrb[0].mxu0 %v329
    %v410 = vpop.f32.mrb[0].mxu0
    %v411 = vpop.f32.mrb[0].mxu0
    %v412 = vadd.f32 %v318, %v411
    %413 = vmatprep.mubr.f32.mxu0 0.0
    %414 = vmatmul.mubr.f32.gmra.mrb[0].mxu0 %v332
    %v415 = vpop.f32.mrb[0].mxu0
    %v416 = vpop.f32.mrb[0].mxu0
    %v417 = vadd.f32 %v318, %v416
    %418 = vdwg.mxu0
    %v419 = vld [vmem:[%s6] sm:$0xff]
    %v420 = vld [vmem:[%s6 + $0x8] sm:$0xff]
    %v421 = vld [vmem:[%s6 + $0x10] sm:$0xff]
    %v422 = vld [vmem:[%s6 + $0x18] sm:$0xff]
    %v424 = vsel %vm321, 0.0, 0
    %426 = vmatprep.subr.mxu0 0.0
    %427 = vmatpush1.msra.mxu0 %v419
    %428 = vmatprep.subr.mxu0 0.0
    %429 = vmatpush1.msra.mxu0 %v420
    %430 = vmatprep.subr.mxu0 0.0
    %431 = vmatpush1.msra.mxu0 %v421
    %432 = vmatprep.subr.mxu0 0.0
    %433 = vmatpush1.msra.mxu0 %v422
    %434 = vmatprep.subr.mxu0 0.0
    %435 = vmatpush1.msra.mxu0 0.0
    %436 = vmatprep.subr.mxu0 0.0
    %437 = vmatpush1.msra.mxu0 0.0
    %438 = vmatprep.subr.mxu0 0.0
    %439 = vmatpush1.msra.mxu0 0.0
    %440 = vmatprep.subr.mxu0 0.0
    %441 = vmatpush1.msra.mxu0 0.0
    %442 = vmatprep.subr.mxu0 0.0
    %443 = vmatpush1.msra.mxu0 0.0
    %444 = vmatprep.subr.mxu0 0.0
    %445 = vmatpush1.msra.mxu0 0.0
    %446 = vmatprep.subr.mxu0 0.0
    %447 = vmatpush1.msra.mxu0 0.0
    %448 = vmatprep.subr.mxu0 0.0
    %449 = vmatpush1.msra.mxu0 0.0
    %450 = vmatprep.subr.mxu0 0.0
    %451 = vmatpush1.msra.mxu0 0.0
    %452 = vmatprep.subr.mxu0 0.0
    %453 = vmatpush1.msra.mxu0 0.0
    %454 = vmatprep.subr.mxu0 0.0
    %455 = vmatpush1.msra.mxu0 0.0
    %456 = vmatprep.subr.mxu0 0.0
    %457 = vmatpush1.msra.mxu0 0.0
    %458 = vmatprep.subr.mxu0 0.0
    %459 = vmatpush1.msra.mxu0 0.0
    %460 = vmatprep.subr.mxu0 0.0
    %461 = vmatpush1.msra.mxu0 0.0
    %462 = vmatprep.subr.mxu0 0.0
    %463 = vmatpush1.msra.mxu0 0.0
    %464 = vmatprep.subr.mxu0 0.0
    %465 = vmatpush1.msra.mxu0 0.0
    %466 = vmatprep.subr.mxu0 0.0
    %467 = vmatpush1.msra.mxu0 0.0
    %468 = vmatprep.subr.mxu0 0.0
    %469 = vmatpush1.msra.mxu0 0.0
    %470 = vmatprep.subr.mxu0 0.0
    %471 = vmatpush1.msra.mxu0 0.0
    %472 = vmatprep.subr.mxu0 0.0
    %473 = vmatpush1.msra.mxu0 0.0
    %474 = vmatprep.subr.mxu0 0.0
    %475 = vmatpush1.msra.mxu0 0.0
    %476 = vmatprep.subr.mxu0 0.0
    %477 = vmatpush1.msra.mxu0 0.0
    %478 = vmatprep.subr.mxu0 0.0
    %479 = vmatpush1.msra.mxu0 0.0
    %480 = vmatprep.subr.mxu0 0.0
    %481 = vmatpush1.msra.mxu0 0.0
    %482 = vmatprep.subr.mxu0 0.0
    %483 = vmatpush1.msra.mxu0 0.0
    %484 = vmatprep.subr.mxu0 0.0
    %485 = vmatpush1.msra.mxu0 0.0
    %486 = vmatprep.subr.mxu0 0.0
    %487 = vmatpush1.msra.mxu0 0.0
    %488 = vmatprep.subr.mxu0 0.0
    %489 = vmatpush1.msra.mxu0 0.0
    %490 = vmatprep.mubr.f32.mxu0 0.0
    %491 = vmatmul.mubr.f32.gmra.mrb[0].mxu0 %v424
    %v492 = vpop.f32.mrb[0].mxu0
    %v493 = vadd.f32 0.0, %v492
    %v494 = vpop.f32.mrb[0].mxu0
    %495 = vdwg.mxu0
    %v496 = vadd.f32 %v401, %v493
    %v497 = vxor.u32 %v496, 2147483648
    %v498 = vmul.f32 %v497, 1.442695
    %v499 = vpow.pop %v498
    %v500 = vadd.f32 %v499, 1.0
    %v501 = vrcp.pop %v500
    %v502 = vmul.f32 1.0, %v501
    %v503 = vtanh.pop %v496
    %v504 = vmul.f32 %v502, 0.0
    %506 = vrot.lane.b32.xlu0 %v503, 32
    %v507 = vpop.permute.xlu0 %506
    %v509 = vmul.f32 %v502, %v507
    %511 = vrot.lane.b32.xlu0 %v509, 32
    %v512 = vpop.permute.xlu0 %511
    %v514 = vadd.f32 %v504, %v512
    %v515 = vtanh.pop %v514
    %517 = vrot.lane.b32.xlu0 %v515, 32
    %v518 = vpop.permute.xlu0 %517
    %v520 = vmul.f32 %v502, %v518
    %v521 = vadd.f32 %v520, 0.0
    %523 = vrot.lane.b32.xlu0 %v520, 64
    %v524 = vpop.permute.xlu0 %523
    %v525 = vsel %vm321, %v524, 0
    %527 = vmatprep.subr.mxu0 0.0
    %528 = vmatpush1.msra.mxu0 %v419
    %529 = vmatprep.subr.mxu0 0.0
    %530 = vmatpush1.msra.mxu0 %v420
    %531 = vmatprep.subr.mxu0 0.0
    %532 = vmatpush1.msra.mxu0 %v421
    %533 = vmatprep.subr.mxu0 0.0
    %534 = vmatpush1.msra.mxu0 %v422
    %535 = vmatprep.subr.mxu0 0.0
    %536 = vmatpush1.msra.mxu0 0.0
    %537 = vmatprep.subr.mxu0 0.0
    %538 = vmatpush1.msra.mxu0 0.0
    %539 = vmatprep.subr.mxu0 0.0
    %540 = vmatpush1.msra.mxu0 0.0
    %541 = vmatprep.subr.mxu0 0.0
    %542 = vmatpush1.msra.mxu0 0.0
    %543 = vmatprep.subr.mxu0 0.0
    %544 = vmatpush1.msra.mxu0 0.0
    %545 = vmatprep.subr.mxu0 0.0
    %546 = vmatpush1.msra.mxu0 0.0
    %547 = vmatprep.subr.mxu0 0.0
    %548 = vmatpush1.msra.mxu0 0.0
    %549 = vmatprep.subr.mxu0 0.0
    %550 = vmatpush1.msra.mxu0 0.0
    %551 = vmatprep.subr.mxu0 0.0
    %552 = vmatpush1.msra.mxu0 0.0
    %553 = vmatprep.subr.mxu0 0.0
    %554 = vmatpush1.msra.mxu0 0.0
    %555 = vmatprep.subr.mxu0 0.0
    %556 = vmatpush1.msra.mxu0 0.0
    %557 = vmatprep.subr.mxu0 0.0
    %558 = vmatpush1.msra.mxu0 0.0
    %559 = vmatprep.subr.mxu0 0.0
    %560 = vmatpush1.msra.mxu0 0.0
    %561 = vmatprep.subr.mxu0 0.0
    %562 = vmatpush1.msra.mxu0 0.0
    %563 = vmatprep.subr.mxu0 0.0
    %564 = vmatpush1.msra.mxu0 0.0
    %565 = vmatprep.subr.mxu0 0.0
    %566 = vmatpush1.msra.mxu0 0.0
    %567 = vmatprep.subr.mxu0 0.0
    %568 = vmatpush1.msra.mxu0 0.0
    %569 = vmatprep.subr.mxu0 0.0
    %570 = vmatpush1.msra.mxu0 0.0
    %571 = vmatprep.subr.mxu0 0.0
    %572 = vmatpush1.msra.mxu0 0.0
    %573 = vmatprep.subr.mxu0 0.0
    %574 = vmatpush1.msra.mxu0 0.0
    %575 = vmatprep.subr.mxu0 0.0
    %576 = vmatpush1.msra.mxu0 0.0
    %577 = vmatprep.subr.mxu0 0.0
    %578 = vmatpush1.msra.mxu0 0.0
    %579 = vmatprep.subr.mxu0 0.0
    %580 = vmatpush1.msra.mxu0 0.0
    %581 = vmatprep.subr.mxu0 0.0
    %582 = vmatpush1.msra.mxu0 0.0
    %583 = vmatprep.subr.mxu0 0.0
    %584 = vmatpush1.msra.mxu0 0.0
    %585 = vmatprep.subr.mxu0 0.0
    %586 = vmatpush1.msra.mxu0 0.0
    %587 = vmatprep.subr.mxu0 0.0
    %588 = vmatpush1.msra.mxu0 0.0
    %589 = vmatprep.subr.mxu0 0.0
    %590 = vmatpush1.msra.mxu0 0.0
    %591 = vmatprep.mubr.f32.mxu0 0.0
    %592 = vmatmul.mubr.f32.gmra.mrb[0].mxu0 %v525
    %v593 = vpop.f32.mrb[0].mxu0
    %v594 = vadd.f32 0.0, %v593
    %v595 = vpop.f32.mrb[0].mxu0
    %596 = vdwg.mxu0
    %v598 = vrot.slane %v594, 6
    %v600 = vadd.f32 %v401, %v598
    %v601 = vxor.u32 %v600, 2147483648
    %v602 = vmul.f32 %v601, 1.442695
    %v603 = vpow.pop %v602
    %v604 = vadd.f32 %v603, 1.0
    %v605 = vrcp.pop %v604
    %v606 = vmul.f32 1.0, %v605
    %v607 = vtanh.pop %v600
    %v609 = vrot.slane %v514, 6
    %v611 = vmul.f32 %v606, %v609
    %613 = vrot.lane.b32.xlu0 %v607, 32
    %v614 = vpop.permute.xlu0 %613
    %v616 = vmul.f32 %v606, %v614
    %618 = vrot.lane.b32.xlu0 %v616, 32
    %v619 = vpop.permute.xlu0 %618
    %v621 = vadd.f32 %v611, %v619
    %v622 = vtanh.pop %v621
    %624 = vrot.lane.b32.xlu0 %v622, 32
    %v625 = vpop.permute.xlu0 %624
    %v627 = vmul.f32 %v606, %v625
    %v629 = vrot.slane %v627, 2
    %v631 = vadd.f32 %v521, %v629
    %632 = vrot.lane.b32.xlu0 %v629, 64
    %v633 = vpop.permute.xlu0 %632
    %v634 = vsel %vm321, %v633, 0
    %636 = vmatprep.subr.mxu0 0.0
    %637 = vmatpush1.msra.mxu0 %v419
    %638 = vmatprep.subr.mxu0 0.0
    %639 = vmatpush1.msra.mxu0 %v420
    %640 = vmatprep.subr.mxu0 0.0
    %641 = vmatpush1.msra.mxu0 %v421
    %642 = vmatprep.subr.mxu0 0.0
    %643 = vmatpush1.msra.mxu0 %v422
    %644 = vmatprep.subr.mxu0 0.0
    %645 = vmatpush1.msra.mxu0 0.0
    %646 = vmatprep.subr.mxu0 0.0
    %647 = vmatpush1.msra.mxu0 0.0
    %648 = vmatprep.subr.mxu0 0.0
    %649 = vmatpush1.msra.mxu0 0.0
    %650 = vmatprep.subr.mxu0 0.0
    %651 = vmatpush1.msra.mxu0 0.0
    %652 = vmatprep.subr.mxu0 0.0
    %653 = vmatpush1.msra.mxu0 0.0
    %654 = vmatprep.subr.mxu0 0.0
    %655 = vmatpush1.msra.mxu0 0.0
    %656 = vmatprep.subr.mxu0 0.0
    %657 = vmatpush1.msra.mxu0 0.0
    %658 = vmatprep.subr.mxu0 0.0
    %659 = vmatpush1.msra.mxu0 0.0
    %660 = vmatprep.subr.mxu0 0.0
    %661 = vmatpush1.msra.mxu0 0.0
    %662 = vmatprep.subr.mxu0 0.0
    %663 = vmatpush1.msra.mxu0 0.0
    %664 = vmatprep.subr.mxu0 0.0
    %665 = vmatpush1.msra.mxu0 0.0
    %666 = vmatprep.subr.mxu0 0.0
    %667 = vmatpush1.msra.mxu0 0.0
    %668 = vmatprep.subr.mxu0 0.0
    %669 = vmatpush1.msra.mxu0 0.0
    %670 = vmatprep.subr.mxu0 0.0
    %671 = vmatpush1.msra.mxu0 0.0
    %672 = vmatprep.subr.mxu0 0.0
    %673 = vmatpush1.msra.mxu0 0.0
    %674 = vmatprep.subr.mxu0 0.0
    %675 = vmatpush1.msra.mxu0 0.0
    %676 = vmatprep.subr.mxu0 0.0
    %677 = vmatpush1.msra.mxu0 0.0
    %678 = vmatprep.subr.mxu0 0.0
    %679 = vmatpush1.msra.mxu0 0.0
    %680 = vmatprep.subr.mxu0 0.0
    %681 = vmatpush1.msra.mxu0 0.0
    %682 = vmatprep.subr.mxu0 0.0
    %683 = vmatpush1.msra.mxu0 0.0
    %684 = vmatprep.subr.mxu0 0.0
    %685 = vmatpush1.msra.mxu0 0.0
    %686 = vmatprep.subr.mxu0 0.0
    %687 = vmatpush1.msra.mxu0 0.0
    %688 = vmatprep.subr.mxu0 0.0
    %689 = vmatpush1.msra.mxu0 0.0
    %690 = vmatprep.subr.mxu0 0.0
    %691 = vmatpush1.msra.mxu0 0.0
    %692 = vmatprep.subr.mxu0 0.0
    %693 = vmatpush1.msra.mxu0 0.0
    %694 = vmatprep.subr.mxu0 0.0
    %695 = vmatpush1.msra.mxu0 0.0
    %696 = vmatprep.subr.mxu0 0.0
    %697 = vmatpush1.msra.mxu0 0.0
    %698 = vmatprep.subr.mxu0 0.0
    %699 = vmatpush1.msra.mxu0 0.0
    %700 = vmatprep.mubr.f32.mxu0 0.0
    %701 = vmatmul.mubr.f32.gmra.mrb[0].mxu0 %v634
    %v702 = vpop.f32.mrb[0].mxu0
    %v703 = vadd.f32 0.0, %v702
    %v704 = vpop.f32.mrb[0].mxu0
    %705 = vdwg.mxu0
    %v707 = vrot.slane %v703, 4
    %v709 = vadd.f32 %v401, %v707
    %v710 = vxor.u32 %v709, 2147483648
    %v711 = vmul.f32 %v710, 1.442695
    %v712 = vpow.pop %v711
    %v713 = vadd.f32 %v712, 1.0
    %v714 = vrcp.pop %v713
    %v715 = vmul.f32 1.0, %v714
    %v716 = vtanh.pop %v709
    %v718 = vrot.slane %v621, 6
    %v720 = vmul.f32 %v715, %v718
    %722 = vrot.lane.b32.xlu0 %v716, 32
    %v723 = vpop.permute.xlu0 %722
    %v725 = vmul.f32 %v715, %v723
    %727 = vrot.lane.b32.xlu0 %v725, 32
    %v728 = vpop.permute.xlu0 %727
    %v730 = vadd.f32 %v720, %v728
    %v731 = vtanh.pop %v730
    %733 = vrot.lane.b32.xlu0 %v731, 32
    %v734 = vpop.permute.xlu0 %733
    %v736 = vmul.f32 %v715, %v734
    %v738 = vrot.slane %v736, 4
    %v740 = vadd.f32 %v631, %v738
    %741 = vrot.lane.b32.xlu0 %v738, 64
    %v742 = vpop.permute.xlu0 %741
    %v743 = vsel %vm321, %v742, 0
    %745 = vmatprep.subr.mxu0 0.0
    %746 = vmatpush1.msra.mxu0 %v419
    %747 = vmatprep.subr.mxu0 0.0
    %748 = vmatpush1.msra.mxu0 %v420
    %749 = vmatprep.subr.mxu0 0.0
    %750 = vmatpush1.msra.mxu0 %v421
    %751 = vmatprep.subr.mxu0 0.0
    %752 = vmatpush1.msra.mxu0 %v422
    %753 = vmatprep.subr.mxu0 0.0
    %754 = vmatpush1.msra.mxu0 0.0
    %755 = vmatprep.subr.mxu0 0.0
    %756 = vmatpush1.msra.mxu0 0.0
    %757 = vmatprep.subr.mxu0 0.0
    %758 = vmatpush1.msra.mxu0 0.0
    %759 = vmatprep.subr.mxu0 0.0
    %760 = vmatpush1.msra.mxu0 0.0
    %761 = vmatprep.subr.mxu0 0.0
    %762 = vmatpush1.msra.mxu0 0.0
    %763 = vmatprep.subr.mxu0 0.0
    %764 = vmatpush1.msra.mxu0 0.0
    %765 = vmatprep.subr.mxu0 0.0
    %766 = vmatpush1.msra.mxu0 0.0
    %767 = vmatprep.subr.mxu0 0.0
    %768 = vmatpush1.msra.mxu0 0.0
    %769 = vmatprep.subr.mxu0 0.0
    %770 = vmatpush1.msra.mxu0 0.0
    %771 = vmatprep.subr.mxu0 0.0
    %772 = vmatpush1.msra.mxu0 0.0
    %773 = vmatprep.subr.mxu0 0.0
    %774 = vmatpush1.msra.mxu0 0.0
    %775 = vmatprep.subr.mxu0 0.0
    %776 = vmatpush1.msra.mxu0 0.0
    %777 = vmatprep.subr.mxu0 0.0
    %778 = vmatpush1.msra.mxu0 0.0
    %779 = vmatprep.subr.mxu0 0.0
    %780 = vmatpush1.msra.mxu0 0.0
    %781 = vmatprep.subr.mxu0 0.0
    %782 = vmatpush1.msra.mxu0 0.0
    %783 = vmatprep.subr.mxu0 0.0
    %784 = vmatpush1.msra.mxu0 0.0
    %785 = vmatprep.subr.mxu0 0.0
    %786 = vmatpush1.msra.mxu0 0.0
    %787 = vmatprep.subr.mxu0 0.0
    %788 = vmatpush1.msra.mxu0 0.0
    %789 = vmatprep.subr.mxu0 0.0
    %790 = vmatpush1.msra.mxu0 0.0
    %791 = vmatprep.subr.mxu0 0.0
    %792 = vmatpush1.msra.mxu0 0.0
    %793 = vmatprep.subr.mxu0 0.0
    %794 = vmatpush1.msra.mxu0 0.0
    %795 = vmatprep.subr.mxu0 0.0
    %796 = vmatpush1.msra.mxu0 0.0
    %797 = vmatprep.subr.mxu0 0.0
    %798 = vmatpush1.msra.mxu0 0.0
    %799 = vmatprep.subr.mxu0 0.0
    %800 = vmatpush1.msra.mxu0 0.0
    %801 = vmatprep.subr.mxu0 0.0
    %802 = vmatpush1.msra.mxu0 0.0
    %803 = vmatprep.subr.mxu0 0.0
    %804 = vmatpush1.msra.mxu0 0.0
    %805 = vmatprep.subr.mxu0 0.0
    %806 = vmatpush1.msra.mxu0 0.0
    %807 = vmatprep.subr.mxu0 0.0
    %808 = vmatpush1.msra.mxu0 0.0
    %809 = vmatprep.mubr.f32.mxu0 0.0
    %810 = vmatmul.mubr.f32.gmra.mrb[0].mxu0 %v743
    %v811 = vpop.f32.mrb[0].mxu0
    %v812 = vadd.f32 0.0, %v811
    %v813 = vpop.f32.mrb[0].mxu0
    %814 = vdwg.mxu0
    %v816 = vrot.slane %v812, 2
    %v818 = vadd.f32 %v401, %v816
    %v819 = vxor.u32 %v818, 2147483648
    %v820 = vmul.f32 %v819, 1.442695
    %v821 = vpow.pop %v820
    %v822 = vadd.f32 %v821, 1.0
    %v823 = vrcp.pop %v822
    %v824 = vmul.f32 1.0, %v823
    %v825 = vtanh.pop %v818
    %v827 = vrot.slane %v730, 6
    %v829 = vmul.f32 %v824, %v827
    %831 = vrot.lane.b32.xlu0 %v825, 32
    %v832 = vpop.permute.xlu0 %831
    %v834 = vmul.f32 %v824, %v832
    %836 = vrot.lane.b32.xlu0 %v834, 32
    %v837 = vpop.permute.xlu0 %836
    %v839 = vadd.f32 %v829, %v837
    %v840 = vtanh.pop %v839
    %842 = vrot.lane.b32.xlu0 %v840, 32
    %v843 = vpop.permute.xlu0 %842
    %v845 = vmul.f32 %v824, %v843
    %v847 = vrot.slane %v845, 6
    %v849 = vadd.f32 %v740, %v847
    %850 = vrot.lane.b32.xlu0 %v847, 64
    %v851 = vpop.permute.xlu0 %850
    %v852 = vsel %vm321, %v851, 0
    %854 = vmatprep.subr.mxu0 0.0
    %855 = vmatpush1.msra.mxu0 %v419
    %856 = vmatprep.subr.mxu0 0.0
    %857 = vmatpush1.msra.mxu0 %v420
    %858 = vmatprep.subr.mxu0 0.0
    %859 = vmatpush1.msra.mxu0 %v421
    %860 = vmatprep.subr.mxu0 0.0
    %861 = vmatpush1.msra.mxu0 %v422
    %862 = vmatprep.subr.mxu0 0.0
    %863 = vmatpush1.msra.mxu0 0.0
    %864 = vmatprep.subr.mxu0 0.0
    %865 = vmatpush1.msra.mxu0 0.0
    %866 = vmatprep.subr.mxu0 0.0
    %867 = vmatpush1.msra.mxu0 0.0
    %868 = vmatprep.subr.mxu0 0.0
    %869 = vmatpush1.msra.mxu0 0.0
    %870 = vmatprep.subr.mxu0 0.0
    %871 = vmatpush1.msra.mxu0 0.0
    %872 = vmatprep.subr.mxu0 0.0
    %873 = vmatpush1.msra.mxu0 0.0
    %874 = vmatprep.subr.mxu0 0.0
    %875 = vmatpush1.msra.mxu0 0.0
    %876 = vmatprep.subr.mxu0 0.0
    %877 = vmatpush1.msra.mxu0 0.0
    %878 = vmatprep.subr.mxu0 0.0
    %879 = vmatpush1.msra.mxu0 0.0
    %880 = vmatprep.subr.mxu0 0.0
    %881 = vmatpush1.msra.mxu0 0.0
    %882 = vmatprep.subr.mxu0 0.0
    %883 = vmatpush1.msra.mxu0 0.0
    %884 = vmatprep.subr.mxu0 0.0
    %885 = vmatpush1.msra.mxu0 0.0
    %886 = vmatprep.subr.mxu0 0.0
    %887 = vmatpush1.msra.mxu0 0.0
    %888 = vmatprep.subr.mxu0 0.0
    %889 = vmatpush1.msra.mxu0 0.0
    %890 = vmatprep.subr.mxu0 0.0
    %891 = vmatpush1.msra.mxu0 0.0
    %892 = vmatprep.subr.mxu0 0.0
    %893 = vmatpush1.msra.mxu0 0.0
    %894 = vmatprep.subr.mxu0 0.0
    %895 = vmatpush1.msra.mxu0 0.0
    %896 = vmatprep.subr.mxu0 0.0
    %897 = vmatpush1.msra.mxu0 0.0
    %898 = vmatprep.subr.mxu0 0.0
    %899 = vmatpush1.msra.mxu0 0.0
    %900 = vmatprep.subr.mxu0 0.0
    %901 = vmatpush1.msra.mxu0 0.0
    %902 = vmatprep.subr.mxu0 0.0
    %903 = vmatpush1.msra.mxu0 0.0
    %904 = vmatprep.subr.mxu0 0.0
    %905 = vmatpush1.msra.mxu0 0.0
    %906 = vmatprep.subr.mxu0 0.0
    %907 = vmatpush1.msra.mxu0 0.0
    %908 = vmatprep.subr.mxu0 0.0
    %909 = vmatpush1.msra.mxu0 0.0
    %910 = vmatprep.subr.mxu0 0.0
    %911 = vmatpush1.msra.mxu0 0.0
    %912 = vmatprep.subr.mxu0 0.0
    %913 = vmatpush1.msra.mxu0 0.0
    %914 = vmatprep.subr.mxu0 0.0
    %915 = vmatpush1.msra.mxu0 0.0
    %916 = vmatprep.subr.mxu0 0.0
    %917 = vmatpush1.msra.mxu0 0.0
    %918 = vmatprep.mubr.f32.mxu0 0.0
    %919 = vmatmul.mubr.f32.gmra.mrb[0].mxu0 %v852
    %v920 = vpop.f32.mrb[0].mxu0
    %v921 = vadd.f32 0.0, %v920
    %v922 = vpop.f32.mrb[0].mxu0
    %923 = vdwg.mxu0
    %v924 = vadd.f32 %v406, %v921
    %v925 = vxor.u32 %v924, 2147483648
    %v926 = vmul.f32 %v925, 1.442695
    %v927 = vpow.pop %v926
    %v928 = vadd.f32 %v927, 1.0
    %v929 = vrcp.pop %v928
    %v930 = vmul.f32 1.0, %v929
    %v931 = vtanh.pop %v924
    %v933 = vrot.slane %v839, 6
    %v935 = vmul.f32 %v930, %v933
    %937 = vrot.lane.b32.xlu0 %v931, 32
    %v938 = vpop.permute.xlu0 %937
    %v940 = vmul.f32 %v930, %v938
    %942 = vrot.lane.b32.xlu0 %v940, 32
    %v943 = vpop.permute.xlu0 %942
    %v945 = vadd.f32 %v935, %v943
    %v946 = vtanh.pop %v945
    %948 = vrot.lane.b32.xlu0 %v946, 32
    %v949 = vpop.permute.xlu0 %948
    %v951 = vmul.f32 %v930, %v949
    %v952 = vadd.f32 %v849, %v951
    %954 = vrot.lane.b32.xlu0 %v951, 64
    %v955 = vpop.permute.xlu0 %954
    %v956 = vsel %vm321, %v955, 0
    %958 = vmatprep.subr.mxu0 0.0
    %959 = vmatpush1.msra.mxu0 %v419
    %960 = vmatprep.subr.mxu0 0.0
    %961 = vmatpush1.msra.mxu0 %v420
    %962 = vmatprep.subr.mxu0 0.0
    %963 = vmatpush1.msra.mxu0 %v421
    %964 = vmatprep.subr.mxu0 0.0
    %965 = vmatpush1.msra.mxu0 %v422
    %966 = vmatprep.subr.mxu0 0.0
    %967 = vmatpush1.msra.mxu0 0.0
    %968 = vmatprep.subr.mxu0 0.0
    %969 = vmatpush1.msra.mxu0 0.0
    %970 = vmatprep.subr.mxu0 0.0
    %971 = vmatpush1.msra.mxu0 0.0
    %972 = vmatprep.subr.mxu0 0.0
    %973 = vmatpush1.msra.mxu0 0.0
    %974 = vmatprep.subr.mxu0 0.0
    %975 = vmatpush1.msra.mxu0 0.0
    %976 = vmatprep.subr.mxu0 0.0
    %977 = vmatpush1.msra.mxu0 0.0
    %978 = vmatprep.subr.mxu0 0.0
    %979 = vmatpush1.msra.mxu0 0.0
    %980 = vmatprep.subr.mxu0 0.0
    %981 = vmatpush1.msra.mxu0 0.0
    %982 = vmatprep.subr.mxu0 0.0
    %983 = vmatpush1.msra.mxu0 0.0
    %984 = vmatprep.subr.mxu0 0.0
    %985 = vmatpush1.msra.mxu0 0.0
    %986 = vmatprep.subr.mxu0 0.0
    %987 = vmatpush1.msra.mxu0 0.0
    %988 = vmatprep.subr.mxu0 0.0
    %989 = vmatpush1.msra.mxu0 0.0
    %990 = vmatprep.subr.mxu0 0.0
    %991 = vmatpush1.msra.mxu0 0.0
    %992 = vmatprep.subr.mxu0 0.0
    %993 = vmatpush1.msra.mxu0 0.0
    %994 = vmatprep.subr.mxu0 0.0
    %995 = vmatpush1.msra.mxu0 0.0
    %996 = vmatprep.subr.mxu0 0.0
    %997 = vmatpush1.msra.mxu0 0.0
    %998 = vmatprep.subr.mxu0 0.0
    %999 = vmatpush1.msra.mxu0 0.0
    %1000 = vmatprep.subr.mxu0 0.0
    %1001 = vmatpush1.msra.mxu0 0.0
    %1002 = vmatprep.subr.mxu0 0.0
    %1003 = vmatpush1.msra.mxu0 0.0
    %1004 = vmatprep.subr.mxu0 0.0
    %1005 = vmatpush1.msra.mxu0 0.0
    %1006 = vmatprep.subr.mxu0 0.0
    %1007 = vmatpush1.msra.mxu0 0.0
    %1008 = vmatprep.subr.mxu0 0.0
    %1009 = vmatpush1.msra.mxu0 0.0
    %1010 = vmatprep.subr.mxu0 0.0
    %1011 = vmatpush1.msra.mxu0 0.0
    %1012 = vmatprep.subr.mxu0 0.0
    %1013 = vmatpush1.msra.mxu0 0.0
    %1014 = vmatprep.subr.mxu0 0.0
    %1015 = vmatpush1.msra.mxu0 0.0
    %1016 = vmatprep.subr.mxu0 0.0
    %1017 = vmatpush1.msra.mxu0 0.0
    %1018 = vmatprep.subr.mxu0 0.0
    %1019 = vmatpush1.msra.mxu0 0.0
    %1020 = vmatprep.subr.mxu0 0.0
    %1021 = vmatpush1.msra.mxu0 0.0
    %1022 = vmatprep.mubr.f32.mxu0 0.0
    %1023 = vmatmul.mubr.f32.gmra.mrb[0].mxu0 %v956
    %v1024 = vpop.f32.mrb[0].mxu0
    %v1025 = vadd.f32 0.0, %v1024
    %v1026 = vpop.f32.mrb[0].mxu0
    %1027 = vdwg.mxu0
    %v1029 = vrot.slane %v1025, 6
    %v1031 = vadd.f32 %v406, %v1029
    %v1032 = vxor.u32 %v1031, 2147483648
    %v1033 = vmul.f32 %v1032, 1.442695
    %v1034 = vpow.pop %v1033
    %v1035 = vadd.f32 %v1034, 1.0
    %v1036 = vrcp.pop %v1035
    %v1037 = vmul.f32 1.0, %v1036
    %v1038 = vtanh.pop %v1031
    %v1040 = vrot.slane %v945, 6
    %v1042 = vmul.f32 %v1037, %v1040
    %1044 = vrot.lane.b32.xlu0 %v1038, 32
    %v1045 = vpop.permute.xlu0 %1044
    %v1047 = vmul.f32 %v1037, %v1045
    %1049 = vrot.lane.b32.xlu0 %v1047, 32
    %v1050 = vpop.permute.xlu0 %1049
    %v1052 = vadd.f32 %v1042, %v1050
    %v1053 = vtanh.pop %v1052
    %1055 = vrot.lane.b32.xlu0 %v1053, 32
    %v1056 = vpop.permute.xlu0 %1055
    %v1058 = vmul.f32 %v1037, %v1056
    %v1060 = vrot.slane %v1058, 2
    %v1062 = vadd.f32 %v952, %v1060
    %1063 = vrot.lane.b32.xlu0 %v1060, 64
    %v1064 = vpop.permute.xlu0 %1063
    %v1065 = vsel %vm321, %v1064, 0
    %1067 = vmatprep.subr.mxu0 0.0
    %1068 = vmatpush1.msra.mxu0 %v419
    %1069 = vmatprep.subr.mxu0 0.0
    %1070 = vmatpush1.msra.mxu0 %v420
    %1071 = vmatprep.subr.mxu0 0.0
    %1072 = vmatpush1.msra.mxu0 %v421
    %1073 = vmatprep.subr.mxu0 0.0
    %1074 = vmatpush1.msra.mxu0 %v422
    %1075 = vmatprep.subr.mxu0 0.0
    %1076 = vmatpush1.msra.mxu0 0.0
    %1077 = vmatprep.subr.mxu0 0.0
    %1078 = vmatpush1.msra.mxu0 0.0
    %1079 = vmatprep.subr.mxu0 0.0
    %1080 = vmatpush1.msra.mxu0 0.0
    %1081 = vmatprep.subr.mxu0 0.0
    %1082 = vmatpush1.msra.mxu0 0.0
    %1083 = vmatprep.subr.mxu0 0.0
    %1084 = vmatpush1.msra.mxu0 0.0
    %1085 = vmatprep.subr.mxu0 0.0
    %1086 = vmatpush1.msra.mxu0 0.0
    %1087 = vmatprep.subr.mxu0 0.0
    %1088 = vmatpush1.msra.mxu0 0.0
    %1089 = vmatprep.subr.mxu0 0.0
    %1090 = vmatpush1.msra.mxu0 0.0
    %1091 = vmatprep.subr.mxu0 0.0
    %1092 = vmatpush1.msra.mxu0 0.0
    %1093 = vmatprep.subr.mxu0 0.0
    %1094 = vmatpush1.msra.mxu0 0.0
    %1095 = vmatprep.subr.mxu0 0.0
    %1096 = vmatpush1.msra.mxu0 0.0
    %1097 = vmatprep.subr.mxu0 0.0
    %1098 = vmatpush1.msra.mxu0 0.0
    %1099 = vmatprep.subr.mxu0 0.0
    %1100 = vmatpush1.msra.mxu0 0.0
    %1101 = vmatprep.subr.mxu0 0.0
    %1102 = vmatpush1.msra.mxu0 0.0
    %1103 = vmatprep.subr.mxu0 0.0
    %1104 = vmatpush1.msra.mxu0 0.0
    %1105 = vmatprep.subr.mxu0 0.0
    %1106 = vmatpush1.msra.mxu0 0.0
    %1107 = vmatprep.subr.mxu0 0.0
    %1108 = vmatpush1.msra.mxu0 0.0
    %1109 = vmatprep.subr.mxu0 0.0
    %1110 = vmatpush1.msra.mxu0 0.0
    %1111 = vmatprep.subr.mxu0 0.0
    %1112 = vmatpush1.msra.mxu0 0.0
    %1113 = vmatprep.subr.mxu0 0.0
    %1114 = vmatpush1.msra.mxu0 0.0
    %1115 = vmatprep.subr.mxu0 0.0
    %1116 = vmatpush1.msra.mxu0 0.0
    %1117 = vmatprep.subr.mxu0 0.0
    %1118 = vmatpush1.msra.mxu0 0.0
    %1119 = vmatprep.subr.mxu0 0.0
    %1120 = vmatpush1.msra.mxu0 0.0
    %1121 = vmatprep.subr.mxu0 0.0
    %1122 = vmatpush1.msra.mxu0 0.0
    %1123 = vmatprep.subr.mxu0 0.0
    %1124 = vmatpush1.msra.mxu0 0.0
    %1125 = vmatprep.subr.mxu0 0.0
    %1126 = vmatpush1.msra.mxu0 0.0
    %1127 = vmatprep.subr.mxu0 0.0
    %1128 = vmatpush1.msra.mxu0 0.0
    %1129 = vmatprep.subr.mxu0 0.0
    %1130 = vmatpush1.msra.mxu0 0.0
    %1131 = vmatprep.mubr.f32.mxu0 0.0
    %1132 = vmatmul.mubr.f32.gmra.mrb[0].mxu0 %v1065
    %v1133 = vpop.f32.mrb[0].mxu0
    %v1134 = vadd.f32 0.0, %v1133
    %v1135 = vpop.f32.mrb[0].mxu0
    %1136 = vdwg.mxu0
    %v1138 = vrot.slane %v1134, 4
    %v1140 = vadd.f32 %v406, %v1138
    %v1141 = vxor.u32 %v1140, 2147483648
    %v1142 = vmul.f32 %v1141, 1.442695
    %v1143 = vpow.pop %v1142
    %v1144 = vadd.f32 %v1143, 1.0
    %v1145 = vrcp.pop %v1144
    %v1146 = vmul.f32 1.0, %v1145
    %v1147 = vtanh.pop %v1140
    %v1149 = vrot.slane %v1052, 6
    %v1151 = vmul.f32 %v1146, %v1149
    %1153 = vrot.lane.b32.xlu0 %v1147, 32
    %v1154 = vpop.permute.xlu0 %1153
    %v1156 = vmul.f32 %v1146, %v1154
    %1158 = vrot.lane.b32.xlu0 %v1156, 32
    %v1159 = vpop.permute.xlu0 %1158
    %v1161 = vadd.f32 %v1151, %v1159
    %v1162 = vtanh.pop %v1161
    %1164 = vrot.lane.b32.xlu0 %v1162, 32
    %v1165 = vpop.permute.xlu0 %1164
    %v1167 = vmul.f32 %v1146, %v1165
    %v1169 = vrot.slane %v1167, 4
    %v1171 = vadd.f32 %v1062, %v1169
    %1172 = vrot.lane.b32.xlu0 %v1169, 64
    %v1173 = vpop.permute.xlu0 %1172
    %v1174 = vsel %vm321, %v1173, 0
    %1176 = vmatprep.subr.mxu0 0.0
    %1177 = vmatpush1.msra.mxu0 %v419
    %1178 = vmatprep.subr.mxu0 0.0
    %1179 = vmatpush1.msra.mxu0 %v420
    %1180 = vmatprep.subr.mxu0 0.0
    %1181 = vmatpush1.msra.mxu0 %v421
    %1182 = vmatprep.subr.mxu0 0.0
    %1183 = vmatpush1.msra.mxu0 %v422
    %1184 = vmatprep.subr.mxu0 0.0
    %1185 = vmatpush1.msra.mxu0 0.0
    %1186 = vmatprep.subr.mxu0 0.0
    %1187 = vmatpush1.msra.mxu0 0.0
    %1188 = vmatprep.subr.mxu0 0.0
    %1189 = vmatpush1.msra.mxu0 0.0
    %1190 = vmatprep.subr.mxu0 0.0
    %1191 = vmatpush1.msra.mxu0 0.0
    %1192 = vmatprep.subr.mxu0 0.0
    %1193 = vmatpush1.msra.mxu0 0.0
    %1194 = vmatprep.subr.mxu0 0.0
    %1195 = vmatpush1.msra.mxu0 0.0
    %1196 = vmatprep.subr.mxu0 0.0
    %1197 = vmatpush1.msra.mxu0 0.0
    %1198 = vmatprep.subr.mxu0 0.0
    %1199 = vmatpush1.msra.mxu0 0.0
    %1200 = vmatprep.subr.mxu0 0.0
    %1201 = vmatpush1.msra.mxu0 0.0
    %1202 = vmatprep.subr.mxu0 0.0
    %1203 = vmatpush1.msra.mxu0 0.0
    %1204 = vmatprep.subr.mxu0 0.0
    %1205 = vmatpush1.msra.mxu0 0.0
    %1206 = vmatprep.subr.mxu0 0.0
    %1207 = vmatpush1.msra.mxu0 0.0
    %1208 = vmatprep.subr.mxu0 0.0
    %1209 = vmatpush1.msra.mxu0 0.0
    %1210 = vmatprep.subr.mxu0 0.0
    %1211 = vmatpush1.msra.mxu0 0.0
    %1212 = vmatprep.subr.mxu0 0.0
    %1213 = vmatpush1.msra.mxu0 0.0
    %1214 = vmatprep.subr.mxu0 0.0
    %1215 = vmatpush1.msra.mxu0 0.0
    %1216 = vmatprep.subr.mxu0 0.0
    %1217 = vmatpush1.msra.mxu0 0.0
    %1218 = vmatprep.subr.mxu0 0.0
    %1219 = vmatpush1.msra.mxu0 0.0
    %1220 = vmatprep.subr.mxu0 0.0
    %1221 = vmatpush1.msra.mxu0 0.0
    %1222 = vmatprep.subr.mxu0 0.0
    %1223 = vmatpush1.msra.mxu0 0.0
    %1224 = vmatprep.subr.mxu0 0.0
    %1225 = vmatpush1.msra.mxu0 0.0
    %1226 = vmatprep.subr.mxu0 0.0
    %1227 = vmatpush1.msra.mxu0 0.0
    %1228 = vmatprep.subr.mxu0 0.0
    %1229 = vmatpush1.msra.mxu0 0.0
    %1230 = vmatprep.subr.mxu0 0.0
    %1231 = vmatpush1.msra.mxu0 0.0
    %1232 = vmatprep.subr.mxu0 0.0
    %1233 = vmatpush1.msra.mxu0 0.0
    %1234 = vmatprep.subr.mxu0 0.0
    %1235 = vmatpush1.msra.mxu0 0.0
    %1236 = vmatprep.subr.mxu0 0.0
    %1237 = vmatpush1.msra.mxu0 0.0
    %1238 = vmatprep.subr.mxu0 0.0
    %1239 = vmatpush1.msra.mxu0 0.0
    %1240 = vmatprep.mubr.f32.mxu0 0.0
    %1241 = vmatmul.mubr.f32.gmra.mrb[0].mxu0 %v1174
    %v1242 = vpop.f32.mrb[0].mxu0
    %v1243 = vadd.f32 0.0, %v1242
    %v1244 = vpop.f32.mrb[0].mxu0
    %1245 = vdwg.mxu0
    %v1247 = vrot.slane %v1243, 2
    %v1249 = vadd.f32 %v406, %v1247
    %v1250 = vxor.u32 %v1249, 2147483648
    %v1251 = vmul.f32 %v1250, 1.442695
    %v1252 = vpow.pop %v1251
    %v1253 = vadd.f32 %v1252, 1.0
    %v1254 = vrcp.pop %v1253
    %v1255 = vmul.f32 1.0, %v1254
    %v1256 = vtanh.pop %v1249
    %v1258 = vrot.slane %v1161, 6
    %v1260 = vmul.f32 %v1255, %v1258
    %1262 = vrot.lane.b32.xlu0 %v1256, 32
    %v1263 = vpop.permute.xlu0 %1262
    %v1265 = vmul.f32 %v1255, %v1263
    %1267 = vrot.lane.b32.xlu0 %v1265, 32
    %v1268 = vpop.permute.xlu0 %1267
    %v1270 = vadd.f32 %v1260, %v1268
    %v1271 = vtanh.pop %v1270
    %1273 = vrot.lane.b32.xlu0 %v1271, 32
    %v1274 = vpop.permute.xlu0 %1273
    %v1276 = vmul.f32 %v1255, %v1274
    %v1278 = vrot.slane %v1276, 6
    %v1280 = vadd.f32 %v1171, %v1278
    %v1281 = vmul.f32 %v1280, 0.125
    %v1282 = vmul.f32 %v1281, %v1281
    %1284 = vrot.lane.b32.xlu0 %v1282, 64
    %v1285 = vpop.permute.xlu0 %1284
    %vm1287 = vcmask 254976
    %v1288 = vsel %vm1287, %v1285, 0.0
    %1289 = vadd.xlane.f32.xlu0 %v1288
    %v1290 = vpop.xlane.xlu0 %1289
    %v1291 = vmax.f32 %v1290, 1e-24
    %v1292 = vrsqrt.pop %v1291
    %v1293 = vmul.f32 %v1281, %v1292
    %v1294 = vld [vmem:[%s7] sm:$0xff]
    %v1295 = vld [vmem:[%s7 + $0x8] sm:$0xff]
    %v1296 = vld [vmem:[%s7 + $0x10] sm:$0xff]
    %v1297 = vld [vmem:[%s7 + $0x18] sm:$0xff]
    %v1298 = vld [vmem:[#allocation2] sm:$0x1]
    %v1300 = vlaneseq
    %v1301 = vshrl.u32 %v1300, 7
    %v1302 = vsub.s32 0, %v1301
    %v1303 = vrot.slane %v1298, %v1302
    %1306 = vrot.lane.b32.xlu0 %v1293, 64
    %v1307 = vpop.permute.xlu0 %1306
    %v1308 = vsel %vm321, %v1307, 0
    %1310 = vmatprep.subr.mxu0 0.0
    %1311 = vmatpush1.msra.mxu0 %v1294
    %1312 = vmatprep.subr.mxu0 0.0
    %1313 = vmatpush1.msra.mxu0 %v1295
    %1314 = vmatprep.subr.mxu0 0.0
    %1315 = vmatpush1.msra.mxu0 %v1296
    %1316 = vmatprep.subr.mxu0 0.0
    %1317 = vmatpush1.msra.mxu0 %v1297
    %1318 = vmatprep.subr.mxu0 0.0
    %1319 = vmatpush1.msra.mxu0 0.0
    %1320 = vmatprep.subr.mxu0 0.0
    %1321 = vmatpush1.msra.mxu0 0.0
    %1322 = vmatprep.subr.mxu0 0.0
    %1323 = vmatpush1.msra.mxu0 0.0
    %1324 = vmatprep.subr.mxu0 0.0
    %1325 = vmatpush1.msra.mxu0 0.0
    %1326 = vmatprep.subr.mxu0 0.0
    %1327 = vmatpush1.msra.mxu0 0.0
    %1328 = vmatprep.subr.mxu0 0.0
    %1329 = vmatpush1.msra.mxu0 0.0
    %1330 = vmatprep.subr.mxu0 0.0
    %1331 = vmatpush1.msra.mxu0 0.0
    %1332 = vmatprep.subr.mxu0 0.0
    %1333 = vmatpush1.msra.mxu0 0.0
    %1334 = vmatprep.subr.mxu0 0.0
    %1335 = vmatpush1.msra.mxu0 0.0
    %1336 = vmatprep.subr.mxu0 0.0
    %1337 = vmatpush1.msra.mxu0 0.0
    %1338 = vmatprep.subr.mxu0 0.0
    %1339 = vmatpush1.msra.mxu0 0.0
    %1340 = vmatprep.subr.mxu0 0.0
    %1341 = vmatpush1.msra.mxu0 0.0
    %1342 = vmatprep.subr.mxu0 0.0
    %1343 = vmatpush1.msra.mxu0 0.0
    %1344 = vmatprep.subr.mxu0 0.0
    %1345 = vmatpush1.msra.mxu0 0.0
    %1346 = vmatprep.subr.mxu0 0.0
    %1347 = vmatpush1.msra.mxu0 0.0
    %1348 = vmatprep.subr.mxu0 0.0
    %1349 = vmatpush1.msra.mxu0 0.0
    %1350 = vmatprep.subr.mxu0 0.0
    %1351 = vmatpush1.msra.mxu0 0.0
    %1352 = vmatprep.subr.mxu0 0.0
    %1353 = vmatpush1.msra.mxu0 0.0
    %1354 = vmatprep.subr.mxu0 0.0
    %1355 = vmatpush1.msra.mxu0 0.0
    %1356 = vmatprep.subr.mxu0 0.0
    %1357 = vmatpush1.msra.mxu0 0.0
    %1358 = vmatprep.subr.mxu0 0.0
    %1359 = vmatpush1.msra.mxu0 0.0
    %1360 = vmatprep.subr.mxu0 0.0
    %1361 = vmatpush1.msra.mxu0 0.0
    %1362 = vmatprep.subr.mxu0 0.0
    %1363 = vmatpush1.msra.mxu0 0.0
    %1364 = vmatprep.subr.mxu0 0.0
    %1365 = vmatpush1.msra.mxu0 0.0
    %1366 = vmatprep.subr.mxu0 0.0
    %1367 = vmatpush1.msra.mxu0 0.0
    %1368 = vmatprep.subr.mxu0 0.0
    %1369 = vmatpush1.msra.mxu0 0.0
    %1370 = vmatprep.subr.mxu0 0.0
    %1371 = vmatpush1.msra.mxu0 0.0
    %1372 = vmatprep.subr.mxu0 0.0
    %1373 = vmatpush1.msra.mxu0 0.0
    %1374 = vmatprep.mubr.f32.mxu0 0.0
    %1375 = vmatmul.mubr.f32.gmra.mrb[0].mxu0 %v1308
    %v1376 = vpop.f32.mrb[0].mxu0
    %v1377 = vadd.f32 %v1303, %v1376
    %v1378 = vpop.f32.mrb[0].mxu0
    %1379 = vdwg.mxu0
    %v1380 = vxor.u32 %v1377, 2147483648
    %v1381 = vmul.f32 %v1380, 1.442695
    %v1382 = vpow.pop %v1381
    %v1383 = vadd.f32 %v1382, 1.0
    %v1384 = vrcp.pop %v1383
    %v1385 = vmul.f32 1.0, %v1384
    %vm1386 = vcmask 1024
    %1387 = vst.msk [vmem:[%s14] sm:$0x3] %vm1386, %v1385
    %vm1388 = vcmask 1041408
    %v1389 = vsel %vm1388, %v520, %v627
    %vm1390 = vcmask 1043456
    %v1391 = vsel %vm1390, %v1389, %v736
    %vm1392 = vcmask 1045504
    %v1393 = vsel %vm1392, %v1391, %v845
    %v1394 = vsel %vm1388, %v951, %v1058
    %v1395 = vsel %vm1390, %v1394, %v1167
    %v1396 = vsel %vm1392, %v1395, %v1276
    %1399 = vrot.lane.b32.xlu0 %v1393, 64
    %v1400 = vpop.permute.xlu0 %1399
    %1401 = vrot.lane.b32.xlu0 %v1396, 64
    %v1402 = vpop.permute.xlu0 %1401
    %1405 = vxpose.xlu0.b32.start [1/16] %v1400, 128
    %1406 = vxpose.xlu0.b32.cont [2/16] %v1402, 128
    %1407 = vxpose.xlu0.b32.cont [3/16] 0.0, 128
    %1408 = vxpose.xlu0.b32.cont [4/16] 0.0, 128
    %1409 = vxpose.xlu0.b32.cont [5/16] 0.0, 128
    %1410 = vxpose.xlu0.b32.cont [6/16] 0.0, 128
    %1411 = vxpose.xlu0.b32.cont [7/16] 0.0, 128
    %1412 = vxpose.xlu0.b32.cont [8/16] 0.0, 128
    %1413 = vxpose.xlu0.b32.cont [9/16] 0.0, 128
    %1414 = vxpose.xlu0.b32.cont [10/16] 0.0, 128
    %1415 = vxpose.xlu0.b32.cont [11/16] 0.0, 128
    %1416 = vxpose.xlu0.b32.cont [12/16] 0.0, 128
    %1417 = vxpose.xlu0.b32.cont [13/16] 0.0, 128
    %1418 = vxpose.xlu0.b32.cont [14/16] 0.0, 128
    %1419 = vxpose.xlu0.b32.cont [15/16] 0.0, 128
    %1420 = vxpose.xlu0.b32.end [16/16] 0.0, 128
    %v1421 = vpop.trf.xlu0
    %v1422 = vpop.trf.xlu0
    %v1423 = vpop.trf.xlu0
    %v1424 = vpop.trf.xlu0
    %v1425 = vpop.trf.xlu0
    %v1426 = vpop.trf.xlu0
    %v1427 = vpop.trf.xlu0
    %v1428 = vpop.trf.xlu0
    %v1429 = vpop.trf.xlu0
    %v1430 = vpop.trf.xlu0
    %v1431 = vpop.trf.xlu0
    %v1432 = vpop.trf.xlu0
    %v1433 = vpop.trf.xlu0
    %v1434 = vpop.trf.xlu0
    %v1435 = vpop.trf.xlu0
    %v1436 = vpop.trf.xlu0
    %v1437 = vld [vmem:[%s10] sm:$0xff]
    %v1438 = vld [vmem:[%s10 + $0x8] sm:$0xff]
    %v1439 = vld [vmem:[%s10 + $0x10] sm:$0xff]
    %v1440 = vld [vmem:[%s10 + $0x18] sm:$0xff]
    %v1441 = vsel %vm321, %v1400, 0
    %v1443 = vsel %vm321, %v1402, 0
    %1445 = vmatprep.subr.mxu0 0.0
    %1446 = vmatpush1.msra.mxu0 %v1437
    %1447 = vmatprep.subr.mxu0 0.0
    %1448 = vmatpush1.msra.mxu0 %v1438
    %1449 = vmatprep.subr.mxu0 0.0
    %1450 = vmatpush1.msra.mxu0 %v1439
    %1451 = vmatprep.subr.mxu0 0.0
    %1452 = vmatpush1.msra.mxu0 %v1440
    %1453 = vmatprep.subr.mxu0 0.0
    %1454 = vmatpush1.msra.mxu0 0.0
    %1455 = vmatprep.subr.mxu0 0.0
    %1456 = vmatpush1.msra.mxu0 0.0
    %1457 = vmatprep.subr.mxu0 0.0
    %1458 = vmatpush1.msra.mxu0 0.0
    %1459 = vmatprep.subr.mxu0 0.0
    %1460 = vmatpush1.msra.mxu0 0.0
    %1461 = vmatprep.subr.mxu0 0.0
    %1462 = vmatpush1.msra.mxu0 0.0
    %1463 = vmatprep.subr.mxu0 0.0
    %1464 = vmatpush1.msra.mxu0 0.0
    %1465 = vmatprep.subr.mxu0 0.0
    %1466 = vmatpush1.msra.mxu0 0.0
    %1467 = vmatprep.subr.mxu0 0.0
    %1468 = vmatpush1.msra.mxu0 0.0
    %1469 = vmatprep.subr.mxu0 0.0
    %1470 = vmatpush1.msra.mxu0 0.0
    %1471 = vmatprep.subr.mxu0 0.0
    %1472 = vmatpush1.msra.mxu0 0.0
    %1473 = vmatprep.subr.mxu0 0.0
    %1474 = vmatpush1.msra.mxu0 0.0
    %1475 = vmatprep.subr.mxu0 0.0
    %1476 = vmatpush1.msra.mxu0 0.0
    %1477 = vmatprep.subr.mxu0 0.0
    %1478 = vmatpush1.msra.mxu0 0.0
    %1479 = vmatprep.subr.mxu0 0.0
    %1480 = vmatpush1.msra.mxu0 0.0
    %1481 = vmatprep.subr.mxu0 0.0
    %1482 = vmatpush1.msra.mxu0 0.0
    %1483 = vmatprep.subr.mxu0 0.0
    %1484 = vmatpush1.msra.mxu0 0.0
    %1485 = vmatprep.subr.mxu0 0.0
    %1486 = vmatpush1.msra.mxu0 0.0
    %1487 = vmatprep.subr.mxu0 0.0
    %1488 = vmatpush1.msra.mxu0 0.0
    %1489 = vmatprep.subr.mxu0 0.0
    %1490 = vmatpush1.msra.mxu0 0.0
    %1491 = vmatprep.subr.mxu0 0.0
    %1492 = vmatpush1.msra.mxu0 0.0
    %1493 = vmatprep.subr.mxu0 0.0
    %1494 = vmatpush1.msra.mxu0 0.0
    %1495 = vmatprep.subr.mxu0 0.0
    %1496 = vmatpush1.msra.mxu0 0.0
    %1497 = vmatprep.subr.mxu0 0.0
    %1498 = vmatpush1.msra.mxu0 0.0
    %1499 = vmatprep.subr.mxu0 0.0
    %1500 = vmatpush1.msra.mxu0 0.0
    %1501 = vmatprep.subr.mxu0 0.0
    %1502 = vmatpush1.msra.mxu0 0.0
    %1503 = vmatprep.subr.mxu0 0.0
    %1504 = vmatpush1.msra.mxu0 0.0
    %1505 = vmatprep.subr.mxu0 0.0
    %1506 = vmatpush1.msra.mxu0 0.0
    %1507 = vmatprep.subr.mxu0 0.0
    %1508 = vmatpush1.msra.mxu0 0.0
    %1509 = vmatprep.mubr.f32.mxu0 0.0
    %1510 = vmatmul.mubr.f32.gmra.mrb[0].mxu0 %v1441
    %v1511 = vpop.f32.mrb[0].mxu0
    %v1512 = vadd.f32 0.0, %v1511
    %v1513 = vpop.f32.mrb[0].mxu0
    %1514 = vmatprep.mubr.f32.mxu0 0.0
    %1515 = vmatmul.mubr.f32.gmra.mrb[0].mxu0 %v1443
    %v1516 = vpop.f32.mrb[0].mxu0
    %v1517 = vadd.f32 0.0, %v1516
    %v1518 = vpop.f32.mrb[0].mxu0
    %1519 = vdwg.mxu0
    %v1520 = vld [vmem:[%s9] sm:$0xff]
    %v1521 = vld [vmem:[%s9 + $0x8] sm:$0xff]
    %v1522 = vld [vmem:[%s9 + $0x10] sm:$0xff]
    %v1523 = vld [vmem:[%s9 + $0x18] sm:$0xff]
    %v1524 = vld [vmem:[%s9 + $0x20] sm:$0xff]
    %v1525 = vld [vmem:[%s9 + $0x28] sm:$0xff]
    %v1526 = vld [vmem:[%s9 + $0x30] sm:$0xff]
    %v1527 = vld [vmem:[%s9 + $0x38] sm:$0xff]
    %1532 = vrot.lane.b32.xlu0 %v1421, 32
    %v1533 = vpop.permute.xlu0 %1532
    %1534 = vrot.lane.b32.xlu0 %v1422, 32
    %v1535 = vpop.permute.xlu0 %1534
    %1536 = vrot.lane.b32.xlu0 %v1423, 32
    %v1537 = vpop.permute.xlu0 %1536
    %1538 = vrot.lane.b32.xlu0 %v1424, 32
    %v1539 = vpop.permute.xlu0 %1538
    %v1544 = vsel %vm321, %v1521, %v1533
    %v1545 = vsel %vm321, %v1523, %v1535
    %v1546 = vsel %vm321, %v1525, %v1537
    %v1547 = vsel %vm321, %v1527, %v1539
    %v1548 = vld [vmem:[%s11] sm:$0xff]
    %v1549 = vld [vmem:[%s11 + $0x8] sm:$0xff]
    %v1550 = vld [vmem:[%s11 + $0x10] sm:$0xff]
    %v1551 = vld [vmem:[%s11 + $0x18] sm:$0xff]
    %v1552 = vld [vmem:[#allocation8] sm:$0x1]
    %v1554 = vlaneseq
    %v1555 = vshrl.u32 %v1554, 7
    %v1556 = vsub.s32 0, %v1555
    %v1557 = vrot.slane %v1552, %v1556
    %v1559 = vld [vmem:[#allocation9] sm:$0x3]
    %1560 = vmatprep.subr.mxu0 %v1544
    %1561 = vmatpush1.msra.mxu0 %v1520
    %1562 = vmatprep.subr.mxu0 %v1545
    %1563 = vmatpush1.msra.mxu0 %v1522
    %1564 = vmatprep.subr.mxu0 %v1546
    %1565 = vmatpush1.msra.mxu0 %v1524
    %1566 = vmatprep.subr.mxu0 %v1547
    %1567 = vmatpush1.msra.mxu0 %v1526
    %1568 = vmatprep.subr.mxu0 0.0
    %1569 = vmatpush1.msra.mxu0 0.0
    %1570 = vmatprep.subr.mxu0 0.0
    %1571 = vmatpush1.msra.mxu0 0.0
    %1572 = vmatprep.subr.mxu0 0.0
    %1573 = vmatpush1.msra.mxu0 0.0
    %1574 = vmatprep.subr.mxu0 0.0
    %1575 = vmatpush1.msra.mxu0 0.0
    %1576 = vmatprep.subr.mxu0 0.0
    %1577 = vmatpush1.msra.mxu0 0.0
    %1578 = vmatprep.subr.mxu0 0.0
    %1579 = vmatpush1.msra.mxu0 0.0
    %1580 = vmatprep.subr.mxu0 0.0
    %1581 = vmatpush1.msra.mxu0 0.0
    %1582 = vmatprep.subr.mxu0 0.0
    %1583 = vmatpush1.msra.mxu0 0.0
    %1584 = vmatprep.subr.mxu0 0.0
    %1585 = vmatpush1.msra.mxu0 0.0
    %1586 = vmatprep.subr.mxu0 0.0
    %1587 = vmatpush1.msra.mxu0 0.0
    %1588 = vmatprep.subr.mxu0 0.0
    %1589 = vmatpush1.msra.mxu0 0.0
    %1590 = vmatprep.subr.mxu0 0.0
    %1591 = vmatpush1.msra.mxu0 0.0
    %1592 = vmatprep.subr.mxu0 0.0
    %1593 = vmatpush1.msra.mxu0 0.0
    %1594 = vmatprep.subr.mxu0 0.0
    %1595 = vmatpush1.msra.mxu0 0.0
    %1596 = vmatprep.subr.mxu0 0.0
    %1597 = vmatpush1.msra.mxu0 0.0
    %1598 = vmatprep.subr.mxu0 0.0
    %1599 = vmatpush1.msra.mxu0 0.0
    %1600 = vmatprep.subr.mxu0 0.0
    %1601 = vmatpush1.msra.mxu0 0.0
    %1602 = vmatprep.subr.mxu0 0.0
    %1603 = vmatpush1.msra.mxu0 0.0
    %1604 = vmatprep.subr.mxu0 0.0
    %1605 = vmatpush1.msra.mxu0 0.0
    %1606 = vmatprep.subr.mxu0 0.0
    %1607 = vmatpush1.msra.mxu0 0.0
    %1608 = vmatprep.subr.mxu0 0.0
    %1609 = vmatpush1.msra.mxu0 0.0
    %1610 = vmatprep.subr.mxu0 0.0
    %1611 = vmatpush1.msra.mxu0 0.0
    %1612 = vmatprep.subr.mxu0 0.0
    %1613 = vmatpush1.msra.mxu0 0.0
    %1614 = vmatprep.subr.mxu0 0.0
    %1615 = vmatpush1.msra.mxu0 0.0
    %1616 = vmatprep.subr.mxu0 0.0
    %1617 = vmatpush1.msra.mxu0 0.0
    %1618 = vmatprep.subr.mxu0 0.0
    %1619 = vmatpush1.msra.mxu0 0.0
    %1620 = vmatprep.subr.mxu0 0.0
    %1621 = vmatpush1.msra.mxu0 0.0
    %1622 = vmatprep.subr.mxu0 0.0
    %1623 = vmatpush1.msra.mxu0 0.0
    %1624 = vmatprep.mubr.f32.mxu0 0.0
    %1625 = vmatmul.mubr.f32.gmra.mrb[0].mxu0 %v1308
    %v1626 = vpop.f32.mrb[0].mxu0
    %v1627 = vadd.f32 0.0, %v1626
    %v1628 = vpop.f32.mrb[0].mxu0
    %1629 = vdwg.mxu0
    %v1630 = vadd.f32 %v412, %v1627
    %v1631 = vxor.u32 %v1630, 2147483648
    %v1632 = vmul.f32 %v1631, 1.442695
    %v1633 = vpow.pop %v1632
    %v1634 = vadd.f32 %v1633, 1.0
    %v1635 = vrcp.pop %v1634
    %v1636 = vmul.f32 1.0, %v1635
    %v1637 = vtanh.pop %v1630
    %1638 = vrot.lane.b32.xlu0 %v1293, 96
    %v1639 = vpop.permute.xlu0 %1638
    %v1641 = vmul.f32 %v1636, %v1639
    %1643 = vrot.lane.b32.xlu0 %v1637, 32
    %v1644 = vpop.permute.xlu0 %1643
    %v1646 = vmul.f32 %v1636, %v1644
    %1648 = vrot.lane.b32.xlu0 %v1646, 32
    %v1649 = vpop.permute.xlu0 %1648
    %v1651 = vadd.f32 %v1641, %v1649
    %v1652 = vtanh.pop %v1651
    %1654 = vrot.lane.b32.xlu0 %v1652, 32
    %v1655 = vpop.permute.xlu0 %1654
    %v1657 = vmul.f32 %v1636, %v1655
    %1659 = vrot.lane.b32.xlu0 %v1657, 64
    %v1660 = vpop.permute.xlu0 %1659
    %v1661 = vsel %vm321, %v1660, 0
    %1663 = vmatprep.subr.mxu0 %v1544
    %1664 = vmatpush1.msra.mxu0 %v1520
    %1665 = vmatprep.subr.mxu0 %v1545
    %1666 = vmatpush1.msra.mxu0 %v1522
    %1667 = vmatprep.subr.mxu0 %v1546
    %1668 = vmatpush1.msra.mxu0 %v1524
    %1669 = vmatprep.subr.mxu0 %v1547
    %1670 = vmatpush1.msra.mxu0 %v1526
    %1671 = vmatprep.subr.mxu0 0.0
    %1672 = vmatpush1.msra.mxu0 0.0
    %1673 = vmatprep.subr.mxu0 0.0
    %1674 = vmatpush1.msra.mxu0 0.0
    %1675 = vmatprep.subr.mxu0 0.0
    %1676 = vmatpush1.msra.mxu0 0.0
    %1677 = vmatprep.subr.mxu0 0.0
    %1678 = vmatpush1.msra.mxu0 0.0
    %1679 = vmatprep.subr.mxu0 0.0
    %1680 = vmatpush1.msra.mxu0 0.0
    %1681 = vmatprep.subr.mxu0 0.0
    %1682 = vmatpush1.msra.mxu0 0.0
    %1683 = vmatprep.subr.mxu0 0.0
    %1684 = vmatpush1.msra.mxu0 0.0
    %1685 = vmatprep.subr.mxu0 0.0
    %1686 = vmatpush1.msra.mxu0 0.0
    %1687 = vmatprep.subr.mxu0 0.0
    %1688 = vmatpush1.msra.mxu0 0.0
    %1689 = vmatprep.subr.mxu0 0.0
    %1690 = vmatpush1.msra.mxu0 0.0
    %1691 = vmatprep.subr.mxu0 0.0
    %1692 = vmatpush1.msra.mxu0 0.0
    %1693 = vmatprep.subr.mxu0 0.0
    %1694 = vmatpush1.msra.mxu0 0.0
    %1695 = vmatprep.subr.mxu0 0.0
    %1696 = vmatpush1.msra.mxu0 0.0
    %1697 = vmatprep.subr.mxu0 0.0
    %1698 = vmatpush1.msra.mxu0 0.0
    %1699 = vmatprep.subr.mxu0 0.0
    %1700 = vmatpush1.msra.mxu0 0.0
    %1701 = vmatprep.subr.mxu0 0.0
    %1702 = vmatpush1.msra.mxu0 0.0
    %1703 = vmatprep.subr.mxu0 0.0
    %1704 = vmatpush1.msra.mxu0 0.0
    %1705 = vmatprep.subr.mxu0 0.0
    %1706 = vmatpush1.msra.mxu0 0.0
    %1707 = vmatprep.subr.mxu0 0.0
    %1708 = vmatpush1.msra.mxu0 0.0
    %1709 = vmatprep.subr.mxu0 0.0
    %1710 = vmatpush1.msra.mxu0 0.0
    %1711 = vmatprep.subr.mxu0 0.0
    %1712 = vmatpush1.msra.mxu0 0.0
    %1713 = vmatprep.subr.mxu0 0.0
    %1714 = vmatpush1.msra.mxu0 0.0
    %1715 = vmatprep.subr.mxu0 0.0
    %1716 = vmatpush1.msra.mxu0 0.0
    %1717 = vmatprep.subr.mxu0 0.0
    %1718 = vmatpush1.msra.mxu0 0.0
    %1719 = vmatprep.subr.mxu0 0.0
    %1720 = vmatpush1.msra.mxu0 0.0
    %1721 = vmatprep.subr.mxu0 0.0
    %1722 = vmatpush1.msra.mxu0 0.0
    %1723 = vmatprep.subr.mxu0 0.0
    %1724 = vmatpush1.msra.mxu0 0.0
    %1725 = vmatprep.subr.mxu0 0.0
    %1726 = vmatpush1.msra.mxu0 0.0
    %1727 = vmatprep.mubr.f32.mxu0 0.0
    %1728 = vmatmul.mubr.f32.gmra.mrb[0].mxu0 %v1661
    %v1729 = vpop.f32.mrb[0].mxu0
    %v1730 = vadd.f32 0.0, %v1729
    %v1731 = vpop.f32.mrb[0].mxu0
    %v1732 = vadd.f32 0.0, %v1731
    %1733 = vdwg.mxu0
    %1735 = vrot.lane.b32.xlu0 %v1559, 32
    %v1736 = vpop.permute.xlu0 %1735
    %v1738 = vadd.f32 %v1732, %v1736
    %vm1739 = vcmask 386304
    %v1740 = vsel %vm1739, %v1738, -inf
    %1741 = vmax.xlane.f32.xlu0 %v1740
    %v1742 = vpop.xlane.xlu0 %1741
    %v1743 = vsub.f32 %v1738, %v1742
    %v1744 = vmul.f32 %v1743, 1.442695
    %v1745 = vpow.pop %v1744
    %1747 = vrot.lane.b32.xlu0 %v1745, 96
    %v1748 = vpop.permute.xlu0 %1747
    %vm1750 = vcmask 123904
    %v1751 = vsel %vm1750, %v1748, 0.0
    %1752 = vadd.xlane.f32.xlu0 %v1751
    %v1753 = vpop.xlane.xlu0 %1752
    %v1754 = vrcp.pop %v1753
    %v1755 = vmul.f32 %v1745, %v1754
    %1757 = vrot.lane.b32.xlu0 %v1755, 96
    %v1758 = vpop.permute.xlu0 %1757
    %v1759 = vsel %vm136, %v1758, 0
    %1761 = vmatprep.subr.mxu0 0.0
    %1762 = vmatpush1.msra.mxu0 %v1512
    %1763 = vmatprep.subr.mxu0 0.0
    %1764 = vmatpush1.msra.mxu0 %v1517
    %1765 = vmatprep.subr.mxu0 0.0
    %1766 = vmatpush1.msra.mxu0 0.0
    %1767 = vmatprep.subr.mxu0 0.0
    %1768 = vmatpush1.msra.mxu0 0.0
    %1769 = vmatprep.subr.mxu0 0.0
    %1770 = vmatpush1.msra.mxu0 0.0
    %1771 = vmatprep.subr.mxu0 0.0
    %1772 = vmatpush1.msra.mxu0 0.0
    %1773 = vmatprep.subr.mxu0 0.0
    %1774 = vmatpush1.msra.mxu0 0.0
    %1775 = vmatprep.subr.mxu0 0.0
    %1776 = vmatpush1.msra.mxu0 0.0
    %1777 = vmatprep.subr.mxu0 0.0
    %1778 = vmatpush1.msra.mxu0 0.0
    %1779 = vmatprep.subr.mxu0 0.0
    %1780 = vmatpush1.msra.mxu0 0.0
    %1781 = vmatprep.subr.mxu0 0.0
    %1782 = vmatpush1.msra.mxu0 0.0
    %1783 = vmatprep.subr.mxu0 0.0
    %1784 = vmatpush1.msra.mxu0 0.0
    %1785 = vmatprep.subr.mxu0 0.0
    %1786 = vmatpush1.msra.mxu0 0.0
    %1787 = vmatprep.subr.mxu0 0.0
    %1788 = vmatpush1.msra.mxu0 0.0
    %1789 = vmatprep.subr.mxu0 0.0
    %1790 = vmatpush1.msra.mxu0 0.0
    %1791 = vmatprep.subr.mxu0 0.0
    %1792 = vmatpush1.msra.mxu0 0.0
    %1793 = vmatprep.subr.mxu0 0.0
    %1794 = vmatpush1.msra.mxu0 0.0
    %1795 = vmatprep.subr.mxu0 0.0
    %1796 = vmatpush1.msra.mxu0 0.0
    %1797 = vmatprep.subr.mxu0 0.0
    %1798 = vmatpush1.msra.mxu0 0.0
    %1799 = vmatprep.subr.mxu0 0.0
    %1800 = vmatpush1.msra.mxu0 0.0
    %1801 = vmatprep.subr.mxu0 0.0
    %1802 = vmatpush1.msra.mxu0 0.0
    %1803 = vmatprep.subr.mxu0 0.0
    %1804 = vmatpush1.msra.mxu0 0.0
    %1805 = vmatprep.subr.mxu0 0.0
    %1806 = vmatpush1.msra.mxu0 0.0
    %1807 = vmatprep.subr.mxu0 0.0
    %1808 = vmatpush1.msra.mxu0 0.0
    %1809 = vmatprep.subr.mxu0 0.0
    %1810 = vmatpush1.msra.mxu0 0.0
    %1811 = vmatprep.subr.mxu0 0.0
    %1812 = vmatpush1.msra.mxu0 0.0
    %1813 = vmatprep.subr.mxu0 0.0
    %1814 = vmatpush1.msra.mxu0 0.0
    %1815 = vmatprep.subr.mxu0 0.0
    %1816 = vmatpush1.msra.mxu0 0.0
    %1817 = vmatprep.subr.mxu0 0.0
    %1818 = vmatpush1.msra.mxu0 0.0
    %1819 = vmatprep.subr.mxu0 0.0
    %1820 = vmatpush1.msra.mxu0 0.0
    %1821 = vmatprep.subr.mxu0 0.0
    %1822 = vmatpush1.msra.mxu0 0.0
    %1823 = vmatprep.subr.mxu0 0.0
    %1824 = vmatpush1.msra.mxu0 0.0
    %1825 = vmatprep.mubr.f32.mxu0 0.0
    %1826 = vmatmul.mubr.f32.gmra.mrb[0].mxu0 %v1759
    %v1827 = vpop.f32.mrb[0].mxu0
    %v1828 = vadd.f32 0.0, %v1827
    %v1829 = vpop.f32.mrb[0].mxu0
    %1830 = vdwg.mxu0
    %v1831 = vadd.f32 %v1732, %v1828
    %v1832 = vtanh.pop %v1831
    %v1834 = vsel %vm321, %v1832, 0
    %1836 = vmatprep.subr.mxu0 0.0
    %1837 = vmatpush1.msra.mxu0 %v1548
    %1838 = vmatprep.subr.mxu0 0.0
    %1839 = vmatpush1.msra.mxu0 %v1549
    %1840 = vmatprep.subr.mxu0 0.0
    %1841 = vmatpush1.msra.mxu0 %v1550
    %1842 = vmatprep.subr.mxu0 0.0
    %1843 = vmatpush1.msra.mxu0 %v1551
    %1844 = vmatprep.subr.mxu0 0.0
    %1845 = vmatpush1.msra.mxu0 0.0
    %1846 = vmatprep.subr.mxu0 0.0
    %1847 = vmatpush1.msra.mxu0 0.0
    %1848 = vmatprep.subr.mxu0 0.0
    %1849 = vmatpush1.msra.mxu0 0.0
    %1850 = vmatprep.subr.mxu0 0.0
    %1851 = vmatpush1.msra.mxu0 0.0
    %1852 = vmatprep.subr.mxu0 0.0
    %1853 = vmatpush1.msra.mxu0 0.0
    %1854 = vmatprep.subr.mxu0 0.0
    %1855 = vmatpush1.msra.mxu0 0.0
    %1856 = vmatprep.subr.mxu0 0.0
    %1857 = vmatpush1.msra.mxu0 0.0
    %1858 = vmatprep.subr.mxu0 0.0
    %1859 = vmatpush1.msra.mxu0 0.0
    %1860 = vmatprep.subr.mxu0 0.0
    %1861 = vmatpush1.msra.mxu0 0.0
    %1862 = vmatprep.subr.mxu0 0.0
    %1863 = vmatpush1.msra.mxu0 0.0
    %1864 = vmatprep.subr.mxu0 0.0
    %1865 = vmatpush1.msra.mxu0 0.0
    %1866 = vmatprep.subr.mxu0 0.0
    %1867 = vmatpush1.msra.mxu0 0.0
    %1868 = vmatprep.subr.mxu0 0.0
    %1869 = vmatpush1.msra.mxu0 0.0
    %1870 = vmatprep.subr.mxu0 0.0
    %1871 = vmatpush1.msra.mxu0 0.0
    %1872 = vmatprep.subr.mxu0 0.0
    %1873 = vmatpush1.msra.mxu0 0.0
    %1874 = vmatprep.subr.mxu0 0.0
    %1875 = vmatpush1.msra.mxu0 0.0
    %1876 = vmatprep.subr.mxu0 0.0
    %1877 = vmatpush1.msra.mxu0 0.0
    %1878 = vmatprep.subr.mxu0 0.0
    %1879 = vmatpush1.msra.mxu0 0.0
    %1880 = vmatprep.subr.mxu0 0.0
    %1881 = vmatpush1.msra.mxu0 0.0
    %1882 = vmatprep.subr.mxu0 0.0
    %1883 = vmatpush1.msra.mxu0 0.0
    %1884 = vmatprep.subr.mxu0 0.0
    %1885 = vmatpush1.msra.mxu0 0.0
    %1886 = vmatprep.subr.mxu0 0.0
    %1887 = vmatpush1.msra.mxu0 0.0
    %1888 = vmatprep.subr.mxu0 0.0
    %1889 = vmatpush1.msra.mxu0 0.0
    %1890 = vmatprep.subr.mxu0 0.0
    %1891 = vmatpush1.msra.mxu0 0.0
    %1892 = vmatprep.subr.mxu0 0.0
    %1893 = vmatpush1.msra.mxu0 0.0
    %1894 = vmatprep.subr.mxu0 0.0
    %1895 = vmatpush1.msra.mxu0 0.0
    %1896 = vmatprep.subr.mxu0 0.0
    %1897 = vmatpush1.msra.mxu0 0.0
    %1898 = vmatprep.subr.mxu0 0.0
    %1899 = vmatpush1.msra.mxu0 0.0
    %1900 = vmatprep.mubr.f32.mxu0 0.0
    %1901 = vmatmul.mubr.f32.gmra.mrb[0].mxu0 %v1834
    %v1902 = vpop.f32.mrb[0].mxu0
    %v1903 = vadd.f32 %v1557, %v1902
    %v1904 = vpop.f32.mrb[0].mxu0
    %1905 = vdwg.mxu0
    %v1906 = vsel %vm1750, %v1903, -inf
    %1907 = vmax.xlane.f32.xlu0 %v1906
    %v1908 = vpop.xlane.xlu0 %1907
    %v1909 = vsub.f32 %v1903, %v1908
    %v1910 = vmul.f32 %v1909, 1.442695
    %v1911 = vpow.pop %v1910
    %v1912 = vsel %vm1750, %v1911, 0.0
    %1913 = vadd.xlane.f32.xlu0 %v1912
    %v1914 = vpop.xlane.xlu0 %1913
    %v1915 = vlog2.pop %v1914
    %v1916 = vmul.f32 %v1915, 0.6931472
    %v1917 = vadd.f32 %v1916, %v1908
    %v1918 = vsub.f32 %v1903, %v1917
    %vm1919 = vcmp.ge.f32.partialorder %v1903, %v1908
    %v1920 = vsel %vm1919, %v105, 16
    %v1921 = vsel %vm1750, %v1920, 2147483647
    %v1922 = vand.u32 %v1921, 65535
    %v1923 = vshra.s32 %v1921, 16
    %v1924 = vcvt.s32.f32 %v1922
    %v1925 = vcvt.s32.f32 %v1923
    %1926 = vmin.xlane.f32.xlu0 %v1925
    %v1927 = vpop.xlane.xlu0 %1926
    %vm1928 = vcmp.eq.f32.partialorder %v1925, %v1927
    %v1929 = vsel %vm1928, %v1924, inf
    %1930 = vmin.xlane.f32.xlu0 %v1929
    %v1931 = vpop.xlane.xlu0 %1930
    %v1932 = vcvt.f32.s32 %v1931
    %v1933 = vcvt.f32.s32 %v1927
    %v1934 = vshll.u32 %v1933, 16
    %v1935 = vadd.s32 %v1934, %v1932
    %v1937 = vrot.slane %v1730, 6
    %v1939 = vadd.f32 %v412, %v1937
    %v1940 = vxor.u32 %v1939, 2147483648
    %v1941 = vmul.f32 %v1940, 1.442695
    %v1942 = vpow.pop %v1941
    %v1943 = vadd.f32 %v1942, 1.0
    %v1944 = vrcp.pop %v1943
    %v1945 = vmul.f32 1.0, %v1944
    %v1946 = vtanh.pop %v1939
    %v1948 = vrot.slane %v1651, 6
    %v1950 = vmul.f32 %v1945, %v1948
    %1952 = vrot.lane.b32.xlu0 %v1946, 32
    %v1953 = vpop.permute.xlu0 %1952
    %v1955 = vmul.f32 %v1945, %v1953
    %1957 = vrot.lane.b32.xlu0 %v1955, 32
    %v1958 = vpop.permute.xlu0 %1957
    %v1960 = vadd.f32 %v1950, %v1958
    %v1961 = vtanh.pop %v1960
    %1963 = vrot.lane.b32.xlu0 %v1961, 32
    %v1964 = vpop.permute.xlu0 %1963
    %v1966 = vmul.f32 %v1945, %v1964
    %v1968 = vrot.slane %v1966, 2
    %1969 = vrot.lane.b32.xlu0 %v1968, 64
    %v1970 = vpop.permute.xlu0 %1969
    %v1971 = vsel %vm321, %v1970, 0
    %1973 = vmatprep.subr.mxu0 %v1544
    %1974 = vmatpush1.msra.mxu0 %v1520
    %1975 = vmatprep.subr.mxu0 %v1545
    %1976 = vmatpush1.msra.mxu0 %v1522
    %1977 = vmatprep.subr.mxu0 %v1546
    %1978 = vmatpush1.msra.mxu0 %v1524
    %1979 = vmatprep.subr.mxu0 %v1547
    %1980 = vmatpush1.msra.mxu0 %v1526
    %1981 = vmatprep.subr.mxu0 0.0
    %1982 = vmatpush1.msra.mxu0 0.0
    %1983 = vmatprep.subr.mxu0 0.0
    %1984 = vmatpush1.msra.mxu0 0.0
    %1985 = vmatprep.subr.mxu0 0.0
    %1986 = vmatpush1.msra.mxu0 0.0
    %1987 = vmatprep.subr.mxu0 0.0
    %1988 = vmatpush1.msra.mxu0 0.0
    %1989 = vmatprep.subr.mxu0 0.0
    %1990 = vmatpush1.msra.mxu0 0.0
    %1991 = vmatprep.subr.mxu0 0.0
    %1992 = vmatpush1.msra.mxu0 0.0
    %1993 = vmatprep.subr.mxu0 0.0
    %1994 = vmatpush1.msra.mxu0 0.0
    %1995 = vmatprep.subr.mxu0 0.0
    %1996 = vmatpush1.msra.mxu0 0.0
    %1997 = vmatprep.subr.mxu0 0.0
    %1998 = vmatpush1.msra.mxu0 0.0
    %1999 = vmatprep.subr.mxu0 0.0
    %2000 = vmatpush1.msra.mxu0 0.0
    %2001 = vmatprep.subr.mxu0 0.0
    %2002 = vmatpush1.msra.mxu0 0.0
    %2003 = vmatprep.subr.mxu0 0.0
    %2004 = vmatpush1.msra.mxu0 0.0
    %2005 = vmatprep.subr.mxu0 0.0
    %2006 = vmatpush1.msra.mxu0 0.0
    %2007 = vmatprep.subr.mxu0 0.0
    %2008 = vmatpush1.msra.mxu0 0.0
    %2009 = vmatprep.subr.mxu0 0.0
    %2010 = vmatpush1.msra.mxu0 0.0
    %2011 = vmatprep.subr.mxu0 0.0
    %2012 = vmatpush1.msra.mxu0 0.0
    %2013 = vmatprep.subr.mxu0 0.0
    %2014 = vmatpush1.msra.mxu0 0.0
    %2015 = vmatprep.subr.mxu0 0.0
    %2016 = vmatpush1.msra.mxu0 0.0
    %2017 = vmatprep.subr.mxu0 0.0
    %2018 = vmatpush1.msra.mxu0 0.0
    %2019 = vmatprep.subr.mxu0 0.0
    %2020 = vmatpush1.msra.mxu0 0.0
    %2021 = vmatprep.subr.mxu0 0.0
    %2022 = vmatpush1.msra.mxu0 0.0
    %2023 = vmatprep.subr.mxu0 0.0
    %2024 = vmatpush1.msra.mxu0 0.0
    %2025 = vmatprep.subr.mxu0 0.0
    %2026 = vmatpush1.msra.mxu0 0.0
    %2027 = vmatprep.subr.mxu0 0.0
    %2028 = vmatpush1.msra.mxu0 0.0
    %2029 = vmatprep.subr.mxu0 0.0
    %2030 = vmatpush1.msra.mxu0 0.0
    %2031 = vmatprep.subr.mxu0 0.0
    %2032 = vmatpush1.msra.mxu0 0.0
    %2033 = vmatprep.subr.mxu0 0.0
    %2034 = vmatpush1.msra.mxu0 0.0
    %2035 = vmatprep.subr.mxu0 0.0
    %2036 = vmatpush1.msra.mxu0 0.0
    %2037 = vmatprep.mubr.f32.mxu0 0.0
    %2038 = vmatmul.mubr.f32.gmra.mrb[0].mxu0 %v1971
    %v2039 = vpop.f32.mrb[0].mxu0
    %v2040 = vadd.f32 0.0, %v2039
    %v2041 = vpop.f32.mrb[0].mxu0
    %v2042 = vadd.f32 0.0, %v2041
    %2043 = vdwg.mxu0
    %v2044 = vadd.f32 %v2042, %v1736
    %v2045 = vsel %vm1739, %v2044, -inf
    %2046 = vmax.xlane.f32.xlu0 %v2045
    %v2047 = vpop.xlane.xlu0 %2046
    %v2048 = vsub.f32 %v2044, %v2047
    %v2049 = vmul.f32 %v2048, 1.442695
    %v2050 = vpow.pop %v2049
    %2052 = vrot.lane.b32.xlu0 %v2050, 96
    %v2053 = vpop.permute.xlu0 %2052
    %v2055 = vsel %vm1750, %v2053, 0.0
    %2056 = vadd.xlane.f32.xlu0 %v2055
    %v2057 = vpop.xlane.xlu0 %2056
    %v2058 = vrcp.pop %v2057
    %v2059 = vmul.f32 %v2050, %v2058
    %2061 = vrot.lane.b32.xlu0 %v2059, 96
    %v2062 = vpop.permute.xlu0 %2061
    %v2063 = vsel %vm136, %v2062, 0
    %2065 = vmatprep.subr.mxu0 0.0
    %2066 = vmatpush1.msra.mxu0 %v1512
    %2067 = vmatprep.subr.mxu0 0.0
    %2068 = vmatpush1.msra.mxu0 %v1517
    %2069 = vmatprep.subr.mxu0 0.0
    %2070 = vmatpush1.msra.mxu0 0.0
    %2071 = vmatprep.subr.mxu0 0.0
    %2072 = vmatpush1.msra.mxu0 0.0
    %2073 = vmatprep.subr.mxu0 0.0
    %2074 = vmatpush1.msra.mxu0 0.0
    %2075 = vmatprep.subr.mxu0 0.0
    %2076 = vmatpush1.msra.mxu0 0.0
    %2077 = vmatprep.subr.mxu0 0.0
    %2078 = vmatpush1.msra.mxu0 0.0
    %2079 = vmatprep.subr.mxu0 0.0
    %2080 = vmatpush1.msra.mxu0 0.0
    %2081 = vmatprep.subr.mxu0 0.0
    %2082 = vmatpush1.msra.mxu0 0.0
    %2083 = vmatprep.subr.mxu0 0.0
    %2084 = vmatpush1.msra.mxu0 0.0
    %2085 = vmatprep.subr.mxu0 0.0
    %2086 = vmatpush1.msra.mxu0 0.0
    %2087 = vmatprep.subr.mxu0 0.0
    %2088 = vmatpush1.msra.mxu0 0.0
    %2089 = vmatprep.subr.mxu0 0.0
    %2090 = vmatpush1.msra.mxu0 0.0
    %2091 = vmatprep.subr.mxu0 0.0
    %2092 = vmatpush1.msra.mxu0 0.0
    %2093 = vmatprep.subr.mxu0 0.0
    %2094 = vmatpush1.msra.mxu0 0.0
    %2095 = vmatprep.subr.mxu0 0.0
    %2096 = vmatpush1.msra.mxu0 0.0
    %2097 = vmatprep.subr.mxu0 0.0
    %2098 = vmatpush1.msra.mxu0 0.0
    %2099 = vmatprep.subr.mxu0 0.0
    %2100 = vmatpush1.msra.mxu0 0.0
    %2101 = vmatprep.subr.mxu0 0.0
    %2102 = vmatpush1.msra.mxu0 0.0
    %2103 = vmatprep.subr.mxu0 0.0
    %2104 = vmatpush1.msra.mxu0 0.0
    %2105 = vmatprep.subr.mxu0 0.0
    %2106 = vmatpush1.msra.mxu0 0.0
    %2107 = vmatprep.subr.mxu0 0.0
    %2108 = vmatpush1.msra.mxu0 0.0
    %2109 = vmatprep.subr.mxu0 0.0
    %2110 = vmatpush1.msra.mxu0 0.0
    %2111 = vmatprep.subr.mxu0 0.0
    %2112 = vmatpush1.msra.mxu0 0.0
    %2113 = vmatprep.subr.mxu0 0.0
    %2114 = vmatpush1.msra.mxu0 0.0
    %2115 = vmatprep.subr.mxu0 0.0
    %2116 = vmatpush1.msra.mxu0 0.0
    %2117 = vmatprep.subr.mxu0 0.0
    %2118 = vmatpush1.msra.mxu0 0.0
    %2119 = vmatprep.subr.mxu0 0.0
    %2120 = vmatpush1.msra.mxu0 0.0
    %2121 = vmatprep.subr.mxu0 0.0
    %2122 = vmatpush1.msra.mxu0 0.0
    %2123 = vmatprep.subr.mxu0 0.0
    %2124 = vmatpush1.msra.mxu0 0.0
    %2125 = vmatprep.subr.mxu0 0.0
    %2126 = vmatpush1.msra.mxu0 0.0
    %2127 = vmatprep.subr.mxu0 0.0
    %2128 = vmatpush1.msra.mxu0 0.0
    %2129 = vmatprep.mubr.f32.mxu0 0.0
    %2130 = vmatmul.mubr.f32.gmra.mrb[0].mxu0 %v2063
    %v2131 = vpop.f32.mrb[0].mxu0
    %v2132 = vadd.f32 0.0, %v2131
    %v2133 = vpop.f32.mrb[0].mxu0
    %2134 = vdwg.mxu0
    %v2135 = vadd.f32 %v2042, %v2132
    %v2136 = vtanh.pop %v2135
    %v2138 = vsel %vm321, %v2136, 0
    %2140 = vmatprep.subr.mxu0 0.0
    %2141 = vmatpush1.msra.mxu0 %v1548
    %2142 = vmatprep.subr.mxu0 0.0
    %2143 = vmatpush1.msra.mxu0 %v1549
    %2144 = vmatprep.subr.mxu0 0.0
    %2145 = vmatpush1.msra.mxu0 %v1550
    %2146 = vmatprep.subr.mxu0 0.0
    %2147 = vmatpush1.msra.mxu0 %v1551
    %2148 = vmatprep.subr.mxu0 0.0
    %2149 = vmatpush1.msra.mxu0 0.0
    %2150 = vmatprep.subr.mxu0 0.0
    %2151 = vmatpush1.msra.mxu0 0.0
    %2152 = vmatprep.subr.mxu0 0.0
    %2153 = vmatpush1.msra.mxu0 0.0
    %2154 = vmatprep.subr.mxu0 0.0
    %2155 = vmatpush1.msra.mxu0 0.0
    %2156 = vmatprep.subr.mxu0 0.0
    %2157 = vmatpush1.msra.mxu0 0.0
    %2158 = vmatprep.subr.mxu0 0.0
    %2159 = vmatpush1.msra.mxu0 0.0
    %2160 = vmatprep.subr.mxu0 0.0
    %2161 = vmatpush1.msra.mxu0 0.0
    %2162 = vmatprep.subr.mxu0 0.0
    %2163 = vmatpush1.msra.mxu0 0.0
    %2164 = vmatprep.subr.mxu0 0.0
    %2165 = vmatpush1.msra.mxu0 0.0
    %2166 = vmatprep.subr.mxu0 0.0
    %2167 = vmatpush1.msra.mxu0 0.0
    %2168 = vmatprep.subr.mxu0 0.0
    %2169 = vmatpush1.msra.mxu0 0.0
    %2170 = vmatprep.subr.mxu0 0.0
    %2171 = vmatpush1.msra.mxu0 0.0
    %2172 = vmatprep.subr.mxu0 0.0
    %2173 = vmatpush1.msra.mxu0 0.0
    %2174 = vmatprep.subr.mxu0 0.0
    %2175 = vmatpush1.msra.mxu0 0.0
    %2176 = vmatprep.subr.mxu0 0.0
    %2177 = vmatpush1.msra.mxu0 0.0
    %2178 = vmatprep.subr.mxu0 0.0
    %2179 = vmatpush1.msra.mxu0 0.0
    %2180 = vmatprep.subr.mxu0 0.0
    %2181 = vmatpush1.msra.mxu0 0.0
    %2182 = vmatprep.subr.mxu0 0.0
    %2183 = vmatpush1.msra.mxu0 0.0
    %2184 = vmatprep.subr.mxu0 0.0
    %2185 = vmatpush1.msra.mxu0 0.0
    %2186 = vmatprep.subr.mxu0 0.0
    %2187 = vmatpush1.msra.mxu0 0.0
    %2188 = vmatprep.subr.mxu0 0.0
    %2189 = vmatpush1.msra.mxu0 0.0
    %2190 = vmatprep.subr.mxu0 0.0
    %2191 = vmatpush1.msra.mxu0 0.0
    %2192 = vmatprep.subr.mxu0 0.0
    %2193 = vmatpush1.msra.mxu0 0.0
    %2194 = vmatprep.subr.mxu0 0.0
    %2195 = vmatpush1.msra.mxu0 0.0
    %2196 = vmatprep.subr.mxu0 0.0
    %2197 = vmatpush1.msra.mxu0 0.0
    %2198 = vmatprep.subr.mxu0 0.0
    %2199 = vmatpush1.msra.mxu0 0.0
    %2200 = vmatprep.subr.mxu0 0.0
    %2201 = vmatpush1.msra.mxu0 0.0
    %2202 = vmatprep.subr.mxu0 0.0
    %2203 = vmatpush1.msra.mxu0 0.0
    %2204 = vmatprep.mubr.f32.mxu0 0.0
    %2205 = vmatmul.mubr.f32.gmra.mrb[0].mxu0 %v2138
    %v2206 = vpop.f32.mrb[0].mxu0
    %v2207 = vadd.f32 %v1557, %v2206
    %v2208 = vpop.f32.mrb[0].mxu0
    %2209 = vdwg.mxu0
    %v2210 = vsel %vm1750, %v2207, -inf
    %2211 = vmax.xlane.f32.xlu0 %v2210
    %v2212 = vpop.xlane.xlu0 %2211
    %v2213 = vsub.f32 %v2207, %v2212
    %v2214 = vmul.f32 %v2213, 1.442695
    %v2215 = vpow.pop %v2214
    %v2216 = vsel %vm1750, %v2215, 0.0
    %2217 = vadd.xlane.f32.xlu0 %v2216
    %v2218 = vpop.xlane.xlu0 %2217
    %v2219 = vlog2.pop %v2218
    %v2220 = vmul.f32 %v2219, 0.6931472
    %v2221 = vadd.f32 %v2220, %v2212
    %v2222 = vsub.f32 %v2207, %v2221
    %vm2223 = vcmp.ge.f32.partialorder %v2207, %v2212
    %v2224 = vsel %vm2223, %v105, 16
    %v2225 = vsel %vm1750, %v2224, 2147483647
    %v2226 = vand.u32 %v2225, 65535
    %v2227 = vshra.s32 %v2225, 16
    %v2228 = vcvt.s32.f32 %v2226
    %v2229 = vcvt.s32.f32 %v2227
    %2230 = vmin.xlane.f32.xlu0 %v2229
    %v2231 = vpop.xlane.xlu0 %2230
    %vm2232 = vcmp.eq.f32.partialorder %v2229, %v2231
    %v2233 = vsel %vm2232, %v2228, inf
    %2234 = vmin.xlane.f32.xlu0 %v2233
    %v2235 = vpop.xlane.xlu0 %2234
    %v2236 = vcvt.f32.s32 %v2235
    %v2237 = vcvt.f32.s32 %v2231
    %v2238 = vshll.u32 %v2237, 16
    %v2239 = vadd.s32 %v2238, %v2236
    %v2241 = vrot.slane %v2040, 4
    %v2243 = vadd.f32 %v412, %v2241
    %v2244 = vxor.u32 %v2243, 2147483648
    %v2245 = vmul.f32 %v2244, 1.442695
    %v2246 = vpow.pop %v2245
    %v2247 = vadd.f32 %v2246, 1.0
    %v2248 = vrcp.pop %v2247
    %v2249 = vmul.f32 1.0, %v2248
    %v2250 = vtanh.pop %v2243
    %v2252 = vrot.slane %v1960, 6
    %v2254 = vmul.f32 %v2249, %v2252
    %2256 = vrot.lane.b32.xlu0 %v2250, 32
    %v2257 = vpop.permute.xlu0 %2256
    %v2259 = vmul.f32 %v2249, %v2257
    %2261 = vrot.lane.b32.xlu0 %v2259, 32
    %v2262 = vpop.permute.xlu0 %2261
    %v2264 = vadd.f32 %v2254, %v2262
    %v2265 = vtanh.pop %v2264
    %2267 = vrot.lane.b32.xlu0 %v2265, 32
    %v2268 = vpop.permute.xlu0 %2267
    %v2270 = vmul.f32 %v2249, %v2268
    %v2272 = vrot.slane %v2270, 4
    %2273 = vrot.lane.b32.xlu0 %v2272, 64
    %v2274 = vpop.permute.xlu0 %2273
    %v2275 = vsel %vm321, %v2274, 0
    %2277 = vmatprep.subr.mxu0 %v1544
    %2278 = vmatpush1.msra.mxu0 %v1520
    %2279 = vmatprep.subr.mxu0 %v1545
    %2280 = vmatpush1.msra.mxu0 %v1522
    %2281 = vmatprep.subr.mxu0 %v1546
    %2282 = vmatpush1.msra.mxu0 %v1524
    %2283 = vmatprep.subr.mxu0 %v1547
    %2284 = vmatpush1.msra.mxu0 %v1526
    %2285 = vmatprep.subr.mxu0 0.0
    %2286 = vmatpush1.msra.mxu0 0.0
    %2287 = vmatprep.subr.mxu0 0.0
    %2288 = vmatpush1.msra.mxu0 0.0
    %2289 = vmatprep.subr.mxu0 0.0
    %2290 = vmatpush1.msra.mxu0 0.0
    %2291 = vmatprep.subr.mxu0 0.0
    %2292 = vmatpush1.msra.mxu0 0.0
    %2293 = vmatprep.subr.mxu0 0.0
    %2294 = vmatpush1.msra.mxu0 0.0
    %2295 = vmatprep.subr.mxu0 0.0
    %2296 = vmatpush1.msra.mxu0 0.0
    %2297 = vmatprep.subr.mxu0 0.0
    %2298 = vmatpush1.msra.mxu0 0.0
    %2299 = vmatprep.subr.mxu0 0.0
    %2300 = vmatpush1.msra.mxu0 0.0
    %2301 = vmatprep.subr.mxu0 0.0
    %2302 = vmatpush1.msra.mxu0 0.0
    %2303 = vmatprep.subr.mxu0 0.0
    %2304 = vmatpush1.msra.mxu0 0.0
    %2305 = vmatprep.subr.mxu0 0.0
    %2306 = vmatpush1.msra.mxu0 0.0
    %2307 = vmatprep.subr.mxu0 0.0
    %2308 = vmatpush1.msra.mxu0 0.0
    %2309 = vmatprep.subr.mxu0 0.0
    %2310 = vmatpush1.msra.mxu0 0.0
    %2311 = vmatprep.subr.mxu0 0.0
    %2312 = vmatpush1.msra.mxu0 0.0
    %2313 = vmatprep.subr.mxu0 0.0
    %2314 = vmatpush1.msra.mxu0 0.0
    %2315 = vmatprep.subr.mxu0 0.0
    %2316 = vmatpush1.msra.mxu0 0.0
    %2317 = vmatprep.subr.mxu0 0.0
    %2318 = vmatpush1.msra.mxu0 0.0
    %2319 = vmatprep.subr.mxu0 0.0
    %2320 = vmatpush1.msra.mxu0 0.0
    %2321 = vmatprep.subr.mxu0 0.0
    %2322 = vmatpush1.msra.mxu0 0.0
    %2323 = vmatprep.subr.mxu0 0.0
    %2324 = vmatpush1.msra.mxu0 0.0
    %2325 = vmatprep.subr.mxu0 0.0
    %2326 = vmatpush1.msra.mxu0 0.0
    %2327 = vmatprep.subr.mxu0 0.0
    %2328 = vmatpush1.msra.mxu0 0.0
    %2329 = vmatprep.subr.mxu0 0.0
    %2330 = vmatpush1.msra.mxu0 0.0
    %2331 = vmatprep.subr.mxu0 0.0
    %2332 = vmatpush1.msra.mxu0 0.0
    %2333 = vmatprep.subr.mxu0 0.0
    %2334 = vmatpush1.msra.mxu0 0.0
    %2335 = vmatprep.subr.mxu0 0.0
    %2336 = vmatpush1.msra.mxu0 0.0
    %2337 = vmatprep.subr.mxu0 0.0
    %2338 = vmatpush1.msra.mxu0 0.0
    %2339 = vmatprep.subr.mxu0 0.0
    %2340 = vmatpush1.msra.mxu0 0.0
    %2341 = vmatprep.mubr.f32.mxu0 0.0
    %2342 = vmatmul.mubr.f32.gmra.mrb[0].mxu0 %v2275
    %v2343 = vpop.f32.mrb[0].mxu0
    %v2344 = vadd.f32 0.0, %v2343
    %v2345 = vpop.f32.mrb[0].mxu0
    %v2346 = vadd.f32 0.0, %v2345
    %2347 = vdwg.mxu0
    %v2348 = vadd.f32 %v2346, %v1736
    %v2349 = vsel %vm1739, %v2348, -inf
    %2350 = vmax.xlane.f32.xlu0 %v2349
    %v2351 = vpop.xlane.xlu0 %2350
    %v2352 = vsub.f32 %v2348, %v2351
    %v2353 = vmul.f32 %v2352, 1.442695
    %v2354 = vpow.pop %v2353
    %2356 = vrot.lane.b32.xlu0 %v2354, 96
    %v2357 = vpop.permute.xlu0 %2356
    %v2359 = vsel %vm1750, %v2357, 0.0
    %2360 = vadd.xlane.f32.xlu0 %v2359
    %v2361 = vpop.xlane.xlu0 %2360
    %v2362 = vrcp.pop %v2361
    %v2363 = vmul.f32 %v2354, %v2362
    %2365 = vrot.lane.b32.xlu0 %v2363, 96
    %v2366 = vpop.permute.xlu0 %2365
    %v2367 = vsel %vm136, %v2366, 0
    %2369 = vmatprep.subr.mxu0 0.0
    %2370 = vmatpush1.msra.mxu0 %v1512
    %2371 = vmatprep.subr.mxu0 0.0
    %2372 = vmatpush1.msra.mxu0 %v1517
    %2373 = vmatprep.subr.mxu0 0.0
    %2374 = vmatpush1.msra.mxu0 0.0
    %2375 = vmatprep.subr.mxu0 0.0
    %2376 = vmatpush1.msra.mxu0 0.0
    %2377 = vmatprep.subr.mxu0 0.0
    %2378 = vmatpush1.msra.mxu0 0.0
    %2379 = vmatprep.subr.mxu0 0.0
    %2380 = vmatpush1.msra.mxu0 0.0
    %2381 = vmatprep.subr.mxu0 0.0
    %2382 = vmatpush1.msra.mxu0 0.0
    %2383 = vmatprep.subr.mxu0 0.0
    %2384 = vmatpush1.msra.mxu0 0.0
    %2385 = vmatprep.subr.mxu0 0.0
    %2386 = vmatpush1.msra.mxu0 0.0
    %2387 = vmatprep.subr.mxu0 0.0
    %2388 = vmatpush1.msra.mxu0 0.0
    %2389 = vmatprep.subr.mxu0 0.0
    %2390 = vmatpush1.msra.mxu0 0.0
    %2391 = vmatprep.subr.mxu0 0.0
    %2392 = vmatpush1.msra.mxu0 0.0
    %2393 = vmatprep.subr.mxu0 0.0
    %2394 = vmatpush1.msra.mxu0 0.0
    %2395 = vmatprep.subr.mxu0 0.0
    %2396 = vmatpush1.msra.mxu0 0.0
    %2397 = vmatprep.subr.mxu0 0.0
    %2398 = vmatpush1.msra.mxu0 0.0
    %2399 = vmatprep.subr.mxu0 0.0
    %2400 = vmatpush1.msra.mxu0 0.0
    %2401 = vmatprep.subr.mxu0 0.0
    %2402 = vmatpush1.msra.mxu0 0.0
    %2403 = vmatprep.subr.mxu0 0.0
    %2404 = vmatpush1.msra.mxu0 0.0
    %2405 = vmatprep.subr.mxu0 0.0
    %2406 = vmatpush1.msra.mxu0 0.0
    %2407 = vmatprep.subr.mxu0 0.0
    %2408 = vmatpush1.msra.mxu0 0.0
    %2409 = vmatprep.subr.mxu0 0.0
    %2410 = vmatpush1.msra.mxu0 0.0
    %2411 = vmatprep.subr.mxu0 0.0
    %2412 = vmatpush1.msra.mxu0 0.0
    %2413 = vmatprep.subr.mxu0 0.0
    %2414 = vmatpush1.msra.mxu0 0.0
    %2415 = vmatprep.subr.mxu0 0.0
    %2416 = vmatpush1.msra.mxu0 0.0
    %2417 = vmatprep.subr.mxu0 0.0
    %2418 = vmatpush1.msra.mxu0 0.0
    %2419 = vmatprep.subr.mxu0 0.0
    %2420 = vmatpush1.msra.mxu0 0.0
    %2421 = vmatprep.subr.mxu0 0.0
    %2422 = vmatpush1.msra.mxu0 0.0
    %2423 = vmatprep.subr.mxu0 0.0
    %2424 = vmatpush1.msra.mxu0 0.0
    %2425 = vmatprep.subr.mxu0 0.0
    %2426 = vmatpush1.msra.mxu0 0.0
    %2427 = vmatprep.subr.mxu0 0.0
    %2428 = vmatpush1.msra.mxu0 0.0
    %2429 = vmatprep.subr.mxu0 0.0
    %2430 = vmatpush1.msra.mxu0 0.0
    %2431 = vmatprep.subr.mxu0 0.0
    %2432 = vmatpush1.msra.mxu0 0.0
    %2433 = vmatprep.mubr.f32.mxu0 0.0
    %2434 = vmatmul.mubr.f32.gmra.mrb[0].mxu0 %v2367
    %v2435 = vpop.f32.mrb[0].mxu0
    %v2436 = vadd.f32 0.0, %v2435
    %v2437 = vpop.f32.mrb[0].mxu0
    %2438 = vdwg.mxu0
    %v2439 = vadd.f32 %v2346, %v2436
    %v2440 = vtanh.pop %v2439
    %v2442 = vsel %vm321, %v2440, 0
    %2444 = vmatprep.subr.mxu0 0.0
    %2445 = vmatpush1.msra.mxu0 %v1548
    %2446 = vmatprep.subr.mxu0 0.0
    %2447 = vmatpush1.msra.mxu0 %v1549
    %2448 = vmatprep.subr.mxu0 0.0
    %2449 = vmatpush1.msra.mxu0 %v1550
    %2450 = vmatprep.subr.mxu0 0.0
    %2451 = vmatpush1.msra.mxu0 %v1551
    %2452 = vmatprep.subr.mxu0 0.0
    %2453 = vmatpush1.msra.mxu0 0.0
    %2454 = vmatprep.subr.mxu0 0.0
    %2455 = vmatpush1.msra.mxu0 0.0
    %2456 = vmatprep.subr.mxu0 0.0
    %2457 = vmatpush1.msra.mxu0 0.0
    %2458 = vmatprep.subr.mxu0 0.0
    %2459 = vmatpush1.msra.mxu0 0.0
    %2460 = vmatprep.subr.mxu0 0.0
    %2461 = vmatpush1.msra.mxu0 0.0
    %2462 = vmatprep.subr.mxu0 0.0
    %2463 = vmatpush1.msra.mxu0 0.0
    %2464 = vmatprep.subr.mxu0 0.0
    %2465 = vmatpush1.msra.mxu0 0.0
    %2466 = vmatprep.subr.mxu0 0.0
    %2467 = vmatpush1.msra.mxu0 0.0
    %2468 = vmatprep.subr.mxu0 0.0
    %2469 = vmatpush1.msra.mxu0 0.0
    %2470 = vmatprep.subr.mxu0 0.0
    %2471 = vmatpush1.msra.mxu0 0.0
    %2472 = vmatprep.subr.mxu0 0.0
    %2473 = vmatpush1.msra.mxu0 0.0
    %2474 = vmatprep.subr.mxu0 0.0
    %2475 = vmatpush1.msra.mxu0 0.0
    %2476 = vmatprep.subr.mxu0 0.0
    %2477 = vmatpush1.msra.mxu0 0.0
    %2478 = vmatprep.subr.mxu0 0.0
    %2479 = vmatpush1.msra.mxu0 0.0
    %2480 = vmatprep.subr.mxu0 0.0
    %2481 = vmatpush1.msra.mxu0 0.0
    %2482 = vmatprep.subr.mxu0 0.0
    %2483 = vmatpush1.msra.mxu0 0.0
    %2484 = vmatprep.subr.mxu0 0.0
    %2485 = vmatpush1.msra.mxu0 0.0
    %2486 = vmatprep.subr.mxu0 0.0
    %2487 = vmatpush1.msra.mxu0 0.0
    %2488 = vmatprep.subr.mxu0 0.0
    %2489 = vmatpush1.msra.mxu0 0.0
    %2490 = vmatprep.subr.mxu0 0.0
    %2491 = vmatpush1.msra.mxu0 0.0
    %2492 = vmatprep.subr.mxu0 0.0
    %2493 = vmatpush1.msra.mxu0 0.0
    %2494 = vmatprep.subr.mxu0 0.0
    %2495 = vmatpush1.msra.mxu0 0.0
    %2496 = vmatprep.subr.mxu0 0.0
    %2497 = vmatpush1.msra.mxu0 0.0
    %2498 = vmatprep.subr.mxu0 0.0
    %2499 = vmatpush1.msra.mxu0 0.0
    %2500 = vmatprep.subr.mxu0 0.0
    %2501 = vmatpush1.msra.mxu0 0.0
    %2502 = vmatprep.subr.mxu0 0.0
    %2503 = vmatpush1.msra.mxu0 0.0
    %2504 = vmatprep.subr.mxu0 0.0
    %2505 = vmatpush1.msra.mxu0 0.0
    %2506 = vmatprep.subr.mxu0 0.0
    %2507 = vmatpush1.msra.mxu0 0.0
    %2508 = vmatprep.mubr.f32.mxu0 0.0
    %2509 = vmatmul.mubr.f32.gmra.mrb[0].mxu0 %v2442
    %v2510 = vpop.f32.mrb[0].mxu0
    %v2511 = vadd.f32 %v1557, %v2510
    %v2512 = vpop.f32.mrb[0].mxu0
    %2513 = vdwg.mxu0
    %v2514 = vsel %vm1750, %v2511, -inf
    %2515 = vmax.xlane.f32.xlu0 %v2514
    %v2516 = vpop.xlane.xlu0 %2515
    %v2517 = vsub.f32 %v2511, %v2516
    %v2518 = vmul.f32 %v2517, 1.442695
    %v2519 = vpow.pop %v2518
    %v2520 = vsel %vm1750, %v2519, 0.0
    %2521 = vadd.xlane.f32.xlu0 %v2520
    %v2522 = vpop.xlane.xlu0 %2521
    %v2523 = vlog2.pop %v2522
    %v2524 = vmul.f32 %v2523, 0.6931472
    %v2525 = vadd.f32 %v2524, %v2516
    %v2526 = vsub.f32 %v2511, %v2525
    %vm2527 = vcmp.ge.f32.partialorder %v2511, %v2516
    %v2528 = vsel %vm2527, %v105, 16
    %v2529 = vsel %vm1750, %v2528, 2147483647
    %v2530 = vand.u32 %v2529, 65535
    %v2531 = vshra.s32 %v2529, 16
    %v2532 = vcvt.s32.f32 %v2530
    %v2533 = vcvt.s32.f32 %v2531
    %2534 = vmin.xlane.f32.xlu0 %v2533
    %v2535 = vpop.xlane.xlu0 %2534
    %vm2536 = vcmp.eq.f32.partialorder %v2533, %v2535
    %v2537 = vsel %vm2536, %v2532, inf
    %2538 = vmin.xlane.f32.xlu0 %v2537
    %v2539 = vpop.xlane.xlu0 %2538
    %v2540 = vcvt.f32.s32 %v2539
    %v2541 = vcvt.f32.s32 %v2535
    %v2542 = vshll.u32 %v2541, 16
    %v2543 = vadd.s32 %v2542, %v2540
    %v2545 = vrot.slane %v2344, 2
    %v2547 = vadd.f32 %v412, %v2545
    %v2548 = vxor.u32 %v2547, 2147483648
    %v2549 = vmul.f32 %v2548, 1.442695
    %v2550 = vpow.pop %v2549
    %v2551 = vadd.f32 %v2550, 1.0
    %v2552 = vrcp.pop %v2551
    %v2553 = vmul.f32 1.0, %v2552
    %v2554 = vtanh.pop %v2547
    %v2556 = vrot.slane %v2264, 6
    %v2558 = vmul.f32 %v2553, %v2556
    %2560 = vrot.lane.b32.xlu0 %v2554, 32
    %v2561 = vpop.permute.xlu0 %2560
    %v2563 = vmul.f32 %v2553, %v2561
    %2565 = vrot.lane.b32.xlu0 %v2563, 32
    %v2566 = vpop.permute.xlu0 %2565
    %v2568 = vadd.f32 %v2558, %v2566
    %v2569 = vtanh.pop %v2568
    %2571 = vrot.lane.b32.xlu0 %v2569, 32
    %v2572 = vpop.permute.xlu0 %2571
    %v2574 = vmul.f32 %v2553, %v2572
    %v2576 = vrot.slane %v2574, 6
    %2577 = vrot.lane.b32.xlu0 %v2576, 64
    %v2578 = vpop.permute.xlu0 %2577
    %v2579 = vsel %vm321, %v2578, 0
    %2581 = vmatprep.subr.mxu0 %v1544
    %2582 = vmatpush1.msra.mxu0 %v1520
    %2583 = vmatprep.subr.mxu0 %v1545
    %2584 = vmatpush1.msra.mxu0 %v1522
    %2585 = vmatprep.subr.mxu0 %v1546
    %2586 = vmatpush1.msra.mxu0 %v1524
    %2587 = vmatprep.subr.mxu0 %v1547
    %2588 = vmatpush1.msra.mxu0 %v1526
    %2589 = vmatprep.subr.mxu0 0.0
    %2590 = vmatpush1.msra.mxu0 0.0
    %2591 = vmatprep.subr.mxu0 0.0
    %2592 = vmatpush1.msra.mxu0 0.0
    %2593 = vmatprep.subr.mxu0 0.0
    %2594 = vmatpush1.msra.mxu0 0.0
    %2595 = vmatprep.subr.mxu0 0.0
    %2596 = vmatpush1.msra.mxu0 0.0
    %2597 = vmatprep.subr.mxu0 0.0
    %2598 = vmatpush1.msra.mxu0 0.0
    %2599 = vmatprep.subr.mxu0 0.0
    %2600 = vmatpush1.msra.mxu0 0.0
    %2601 = vmatprep.subr.mxu0 0.0
    %2602 = vmatpush1.msra.mxu0 0.0
    %2603 = vmatprep.subr.mxu0 0.0
    %2604 = vmatpush1.msra.mxu0 0.0
    %2605 = vmatprep.subr.mxu0 0.0
    %2606 = vmatpush1.msra.mxu0 0.0
    %2607 = vmatprep.subr.mxu0 0.0
    %2608 = vmatpush1.msra.mxu0 0.0
    %2609 = vmatprep.subr.mxu0 0.0
    %2610 = vmatpush1.msra.mxu0 0.0
    %2611 = vmatprep.subr.mxu0 0.0
    %2612 = vmatpush1.msra.mxu0 0.0
    %2613 = vmatprep.subr.mxu0 0.0
    %2614 = vmatpush1.msra.mxu0 0.0
    %2615 = vmatprep.subr.mxu0 0.0
    %2616 = vmatpush1.msra.mxu0 0.0
    %2617 = vmatprep.subr.mxu0 0.0
    %2618 = vmatpush1.msra.mxu0 0.0
    %2619 = vmatprep.subr.mxu0 0.0
    %2620 = vmatpush1.msra.mxu0 0.0
    %2621 = vmatprep.subr.mxu0 0.0
    %2622 = vmatpush1.msra.mxu0 0.0
    %2623 = vmatprep.subr.mxu0 0.0
    %2624 = vmatpush1.msra.mxu0 0.0
    %2625 = vmatprep.subr.mxu0 0.0
    %2626 = vmatpush1.msra.mxu0 0.0
    %2627 = vmatprep.subr.mxu0 0.0
    %2628 = vmatpush1.msra.mxu0 0.0
    %2629 = vmatprep.subr.mxu0 0.0
    %2630 = vmatpush1.msra.mxu0 0.0
    %2631 = vmatprep.subr.mxu0 0.0
    %2632 = vmatpush1.msra.mxu0 0.0
    %2633 = vmatprep.subr.mxu0 0.0
    %2634 = vmatpush1.msra.mxu0 0.0
    %2635 = vmatprep.subr.mxu0 0.0
    %2636 = vmatpush1.msra.mxu0 0.0
    %2637 = vmatprep.subr.mxu0 0.0
    %2638 = vmatpush1.msra.mxu0 0.0
    %2639 = vmatprep.subr.mxu0 0.0
    %2640 = vmatpush1.msra.mxu0 0.0
    %2641 = vmatprep.subr.mxu0 0.0
    %2642 = vmatpush1.msra.mxu0 0.0
    %2643 = vmatprep.subr.mxu0 0.0
    %2644 = vmatpush1.msra.mxu0 0.0
    %2645 = vmatprep.mubr.f32.mxu0 0.0
    %2646 = vmatmul.mubr.f32.gmra.mrb[0].mxu0 %v2579
    %v2647 = vpop.f32.mrb[0].mxu0
    %v2648 = vadd.f32 0.0, %v2647
    %v2649 = vpop.f32.mrb[0].mxu0
    %v2650 = vadd.f32 0.0, %v2649
    %2651 = vdwg.mxu0
    %v2652 = vadd.f32 %v2650, %v1736
    %v2653 = vsel %vm1739, %v2652, -inf
    %2654 = vmax.xlane.f32.xlu0 %v2653
    %v2655 = vpop.xlane.xlu0 %2654
    %v2656 = vsub.f32 %v2652, %v2655
    %v2657 = vmul.f32 %v2656, 1.442695
    %v2658 = vpow.pop %v2657
    %2660 = vrot.lane.b32.xlu0 %v2658, 96
    %v2661 = vpop.permute.xlu0 %2660
    %v2663 = vsel %vm1750, %v2661, 0.0
    %2664 = vadd.xlane.f32.xlu0 %v2663
    %v2665 = vpop.xlane.xlu0 %2664
    %v2666 = vrcp.pop %v2665
    %v2667 = vmul.f32 %v2658, %v2666
    %2669 = vrot.lane.b32.xlu0 %v2667, 96
    %v2670 = vpop.permute.xlu0 %2669
    %v2671 = vsel %vm136, %v2670, 0
    %2673 = vmatprep.subr.mxu0 0.0
    %2674 = vmatpush1.msra.mxu0 %v1512
    %2675 = vmatprep.subr.mxu0 0.0
    %2676 = vmatpush1.msra.mxu0 %v1517
    %2677 = vmatprep.subr.mxu0 0.0
    %2678 = vmatpush1.msra.mxu0 0.0
    %2679 = vmatprep.subr.mxu0 0.0
    %2680 = vmatpush1.msra.mxu0 0.0
    %2681 = vmatprep.subr.mxu0 0.0
    %2682 = vmatpush1.msra.mxu0 0.0
    %2683 = vmatprep.subr.mxu0 0.0
    %2684 = vmatpush1.msra.mxu0 0.0
    %2685 = vmatprep.subr.mxu0 0.0
    %2686 = vmatpush1.msra.mxu0 0.0
    %2687 = vmatprep.subr.mxu0 0.0
    %2688 = vmatpush1.msra.mxu0 0.0
    %2689 = vmatprep.subr.mxu0 0.0
    %2690 = vmatpush1.msra.mxu0 0.0
    %2691 = vmatprep.subr.mxu0 0.0
    %2692 = vmatpush1.msra.mxu0 0.0
    %2693 = vmatprep.subr.mxu0 0.0
    %2694 = vmatpush1.msra.mxu0 0.0
    %2695 = vmatprep.subr.mxu0 0.0
    %2696 = vmatpush1.msra.mxu0 0.0
    %2697 = vmatprep.subr.mxu0 0.0
    %2698 = vmatpush1.msra.mxu0 0.0
    %2699 = vmatprep.subr.mxu0 0.0
    %2700 = vmatpush1.msra.mxu0 0.0
    %2701 = vmatprep.subr.mxu0 0.0
    %2702 = vmatpush1.msra.mxu0 0.0
    %2703 = vmatprep.subr.mxu0 0.0
    %2704 = vmatpush1.msra.mxu0 0.0
    %2705 = vmatprep.subr.mxu0 0.0
    %2706 = vmatpush1.msra.mxu0 0.0
    %2707 = vmatprep.subr.mxu0 0.0
    %2708 = vmatpush1.msra.mxu0 0.0
    %2709 = vmatprep.subr.mxu0 0.0
    %2710 = vmatpush1.msra.mxu0 0.0
    %2711 = vmatprep.subr.mxu0 0.0
    %2712 = vmatpush1.msra.mxu0 0.0
    %2713 = vmatprep.subr.mxu0 0.0
    %2714 = vmatpush1.msra.mxu0 0.0
    %2715 = vmatprep.subr.mxu0 0.0
    %2716 = vmatpush1.msra.mxu0 0.0
    %2717 = vmatprep.subr.mxu0 0.0
    %2718 = vmatpush1.msra.mxu0 0.0
    %2719 = vmatprep.subr.mxu0 0.0
    %2720 = vmatpush1.msra.mxu0 0.0
    %2721 = vmatprep.subr.mxu0 0.0
    %2722 = vmatpush1.msra.mxu0 0.0
    %2723 = vmatprep.subr.mxu0 0.0
    %2724 = vmatpush1.msra.mxu0 0.0
    %2725 = vmatprep.subr.mxu0 0.0
    %2726 = vmatpush1.msra.mxu0 0.0
    %2727 = vmatprep.subr.mxu0 0.0
    %2728 = vmatpush1.msra.mxu0 0.0
    %2729 = vmatprep.subr.mxu0 0.0
    %2730 = vmatpush1.msra.mxu0 0.0
    %2731 = vmatprep.subr.mxu0 0.0
    %2732 = vmatpush1.msra.mxu0 0.0
    %2733 = vmatprep.subr.mxu0 0.0
    %2734 = vmatpush1.msra.mxu0 0.0
    %2735 = vmatprep.subr.mxu0 0.0
    %2736 = vmatpush1.msra.mxu0 0.0
    %2737 = vmatprep.mubr.f32.mxu0 0.0
    %2738 = vmatmul.mubr.f32.gmra.mrb[0].mxu0 %v2671
    %v2739 = vpop.f32.mrb[0].mxu0
    %v2740 = vadd.f32 0.0, %v2739
    %v2741 = vpop.f32.mrb[0].mxu0
    %2742 = vdwg.mxu0
    %v2743 = vadd.f32 %v2650, %v2740
    %v2744 = vtanh.pop %v2743
    %v2746 = vsel %vm321, %v2744, 0
    %2748 = vmatprep.subr.mxu0 0.0
    %2749 = vmatpush1.msra.mxu0 %v1548
    %2750 = vmatprep.subr.mxu0 0.0
    %2751 = vmatpush1.msra.mxu0 %v1549
    %2752 = vmatprep.subr.mxu0 0.0
    %2753 = vmatpush1.msra.mxu0 %v1550
    %2754 = vmatprep.subr.mxu0 0.0
    %2755 = vmatpush1.msra.mxu0 %v1551
    %2756 = vmatprep.subr.mxu0 0.0
    %2757 = vmatpush1.msra.mxu0 0.0
    %2758 = vmatprep.subr.mxu0 0.0
    %2759 = vmatpush1.msra.mxu0 0.0
    %2760 = vmatprep.subr.mxu0 0.0
    %2761 = vmatpush1.msra.mxu0 0.0
    %2762 = vmatprep.subr.mxu0 0.0
    %2763 = vmatpush1.msra.mxu0 0.0
    %2764 = vmatprep.subr.mxu0 0.0
    %2765 = vmatpush1.msra.mxu0 0.0
    %2766 = vmatprep.subr.mxu0 0.0
    %2767 = vmatpush1.msra.mxu0 0.0
    %2768 = vmatprep.subr.mxu0 0.0
    %2769 = vmatpush1.msra.mxu0 0.0
    %2770 = vmatprep.subr.mxu0 0.0
    %2771 = vmatpush1.msra.mxu0 0.0
    %2772 = vmatprep.subr.mxu0 0.0
    %2773 = vmatpush1.msra.mxu0 0.0
    %2774 = vmatprep.subr.mxu0 0.0
    %2775 = vmatpush1.msra.mxu0 0.0
    %2776 = vmatprep.subr.mxu0 0.0
    %2777 = vmatpush1.msra.mxu0 0.0
    %2778 = vmatprep.subr.mxu0 0.0
    %2779 = vmatpush1.msra.mxu0 0.0
    %2780 = vmatprep.subr.mxu0 0.0
    %2781 = vmatpush1.msra.mxu0 0.0
    %2782 = vmatprep.subr.mxu0 0.0
    %2783 = vmatpush1.msra.mxu0 0.0
    %2784 = vmatprep.subr.mxu0 0.0
    %2785 = vmatpush1.msra.mxu0 0.0
    %2786 = vmatprep.subr.mxu0 0.0
    %2787 = vmatpush1.msra.mxu0 0.0
    %2788 = vmatprep.subr.mxu0 0.0
    %2789 = vmatpush1.msra.mxu0 0.0
    %2790 = vmatprep.subr.mxu0 0.0
    %2791 = vmatpush1.msra.mxu0 0.0
    %2792 = vmatprep.subr.mxu0 0.0
    %2793 = vmatpush1.msra.mxu0 0.0
    %2794 = vmatprep.subr.mxu0 0.0
    %2795 = vmatpush1.msra.mxu0 0.0
    %2796 = vmatprep.subr.mxu0 0.0
    %2797 = vmatpush1.msra.mxu0 0.0
    %2798 = vmatprep.subr.mxu0 0.0
    %2799 = vmatpush1.msra.mxu0 0.0
    %2800 = vmatprep.subr.mxu0 0.0
    %2801 = vmatpush1.msra.mxu0 0.0
    %2802 = vmatprep.subr.mxu0 0.0
    %2803 = vmatpush1.msra.mxu0 0.0
    %2804 = vmatprep.subr.mxu0 0.0
    %2805 = vmatpush1.msra.mxu0 0.0
    %2806 = vmatprep.subr.mxu0 0.0
    %2807 = vmatpush1.msra.mxu0 0.0
    %2808 = vmatprep.subr.mxu0 0.0
    %2809 = vmatpush1.msra.mxu0 0.0
    %2810 = vmatprep.subr.mxu0 0.0
    %2811 = vmatpush1.msra.mxu0 0.0
    %2812 = vmatprep.mubr.f32.mxu0 0.0
    %2813 = vmatmul.mubr.f32.gmra.mrb[0].mxu0 %v2746
    %v2814 = vpop.f32.mrb[0].mxu0
    %v2815 = vadd.f32 %v1557, %v2814
    %v2816 = vpop.f32.mrb[0].mxu0
    %2817 = vdwg.mxu0
    %v2818 = vsel %vm1750, %v2815, -inf
    %2819 = vmax.xlane.f32.xlu0 %v2818
    %v2820 = vpop.xlane.xlu0 %2819
    %v2821 = vsub.f32 %v2815, %v2820
    %v2822 = vmul.f32 %v2821, 1.442695
    %v2823 = vpow.pop %v2822
    %v2824 = vsel %vm1750, %v2823, 0.0
    %2825 = vadd.xlane.f32.xlu0 %v2824
    %v2826 = vpop.xlane.xlu0 %2825
    %v2827 = vlog2.pop %v2826
    %v2828 = vmul.f32 %v2827, 0.6931472
    %v2829 = vadd.f32 %v2828, %v2820
    %v2830 = vsub.f32 %v2815, %v2829
    %vm2831 = vcmp.ge.f32.partialorder %v2815, %v2820
    %v2832 = vsel %vm2831, %v105, 16
    %v2833 = vsel %vm1750, %v2832, 2147483647
    %v2834 = vand.u32 %v2833, 65535
    %v2835 = vshra.s32 %v2833, 16
    %v2836 = vcvt.s32.f32 %v2834
    %v2837 = vcvt.s32.f32 %v2835
    %2838 = vmin.xlane.f32.xlu0 %v2837
    %v2839 = vpop.xlane.xlu0 %2838
    %vm2840 = vcmp.eq.f32.partialorder %v2837, %v2839
    %v2841 = vsel %vm2840, %v2836, inf
    %2842 = vmin.xlane.f32.xlu0 %v2841
    %v2843 = vpop.xlane.xlu0 %2842
    %v2844 = vcvt.f32.s32 %v2843
    %v2845 = vcvt.f32.s32 %v2839
    %v2846 = vshll.u32 %v2845, 16
    %v2847 = vadd.s32 %v2846, %v2844
    %v2848 = vadd.f32 %v417, %v2648
    %v2849 = vxor.u32 %v2848, 2147483648
    %v2850 = vmul.f32 %v2849, 1.442695
    %v2851 = vpow.pop %v2850
    %v2852 = vadd.f32 %v2851, 1.0
    %v2853 = vrcp.pop %v2852
    %v2854 = vmul.f32 1.0, %v2853
    %v2855 = vtanh.pop %v2848
    %v2857 = vrot.slane %v2568, 6
    %v2859 = vmul.f32 %v2854, %v2857
    %2861 = vrot.lane.b32.xlu0 %v2855, 32
    %v2862 = vpop.permute.xlu0 %2861
    %v2864 = vmul.f32 %v2854, %v2862
    %2866 = vrot.lane.b32.xlu0 %v2864, 32
    %v2867 = vpop.permute.xlu0 %2866
    %v2869 = vadd.f32 %v2859, %v2867
    %v2870 = vtanh.pop %v2869
    %2872 = vrot.lane.b32.xlu0 %v2870, 32
    %v2873 = vpop.permute.xlu0 %2872
    %v2875 = vmul.f32 %v2854, %v2873
    %2877 = vrot.lane.b32.xlu0 %v2875, 64
    %v2878 = vpop.permute.xlu0 %2877
    %v2879 = vsel %vm321, %v2878, 0
    %2881 = vmatprep.subr.mxu0 %v1544
    %2882 = vmatpush1.msra.mxu0 %v1520
    %2883 = vmatprep.subr.mxu0 %v1545
    %2884 = vmatpush1.msra.mxu0 %v1522
    %2885 = vmatprep.subr.mxu0 %v1546
    %2886 = vmatpush1.msra.mxu0 %v1524
    %2887 = vmatprep.subr.mxu0 %v1547
    %2888 = vmatpush1.msra.mxu0 %v1526
    %2889 = vmatprep.subr.mxu0 0.0
    %2890 = vmatpush1.msra.mxu0 0.0
    %2891 = vmatprep.subr.mxu0 0.0
    %2892 = vmatpush1.msra.mxu0 0.0
    %2893 = vmatprep.subr.mxu0 0.0
    %2894 = vmatpush1.msra.mxu0 0.0
    %2895 = vmatprep.subr.mxu0 0.0
    %2896 = vmatpush1.msra.mxu0 0.0
    %2897 = vmatprep.subr.mxu0 0.0
    %2898 = vmatpush1.msra.mxu0 0.0
    %2899 = vmatprep.subr.mxu0 0.0
    %2900 = vmatpush1.msra.mxu0 0.0
    %2901 = vmatprep.subr.mxu0 0.0
    %2902 = vmatpush1.msra.mxu0 0.0
    %2903 = vmatprep.subr.mxu0 0.0
    %2904 = vmatpush1.msra.mxu0 0.0
    %2905 = vmatprep.subr.mxu0 0.0
    %2906 = vmatpush1.msra.mxu0 0.0
    %2907 = vmatprep.subr.mxu0 0.0
    %2908 = vmatpush1.msra.mxu0 0.0
    %2909 = vmatprep.subr.mxu0 0.0
    %2910 = vmatpush1.msra.mxu0 0.0
    %2911 = vmatprep.subr.mxu0 0.0
    %2912 = vmatpush1.msra.mxu0 0.0
    %2913 = vmatprep.subr.mxu0 0.0
    %2914 = vmatpush1.msra.mxu0 0.0
    %2915 = vmatprep.subr.mxu0 0.0
    %2916 = vmatpush1.msra.mxu0 0.0
    %2917 = vmatprep.subr.mxu0 0.0
    %2918 = vmatpush1.msra.mxu0 0.0
    %2919 = vmatprep.subr.mxu0 0.0
    %2920 = vmatpush1.msra.mxu0 0.0
    %2921 = vmatprep.subr.mxu0 0.0
    %2922 = vmatpush1.msra.mxu0 0.0
    %2923 = vmatprep.subr.mxu0 0.0
    %2924 = vmatpush1.msra.mxu0 0.0
    %2925 = vmatprep.subr.mxu0 0.0
    %2926 = vmatpush1.msra.mxu0 0.0
    %2927 = vmatprep.subr.mxu0 0.0
    %2928 = vmatpush1.msra.mxu0 0.0
    %2929 = vmatprep.subr.mxu0 0.0
    %2930 = vmatpush1.msra.mxu0 0.0
    %2931 = vmatprep.subr.mxu0 0.0
    %2932 = vmatpush1.msra.mxu0 0.0
    %2933 = vmatprep.subr.mxu0 0.0
    %2934 = vmatpush1.msra.mxu0 0.0
    %2935 = vmatprep.subr.mxu0 0.0
    %2936 = vmatpush1.msra.mxu0 0.0
    %2937 = vmatprep.subr.mxu0 0.0
    %2938 = vmatpush1.msra.mxu0 0.0
    %2939 = vmatprep.subr.mxu0 0.0
    %2940 = vmatpush1.msra.mxu0 0.0
    %2941 = vmatprep.subr.mxu0 0.0
    %2942 = vmatpush1.msra.mxu0 0.0
    %2943 = vmatprep.subr.mxu0 0.0
    %2944 = vmatpush1.msra.mxu0 0.0
    %2945 = vmatprep.mubr.f32.mxu0 0.0
    %2946 = vmatmul.mubr.f32.gmra.mrb[0].mxu0 %v2879
    %v2947 = vpop.f32.mrb[0].mxu0
    %v2948 = vadd.f32 0.0, %v2947
    %v2949 = vpop.f32.mrb[0].mxu0
    %v2950 = vadd.f32 0.0, %v2949
    %2951 = vdwg.mxu0
    %v2952 = vadd.f32 %v2950, %v1736
    %v2953 = vsel %vm1739, %v2952, -inf
    %2954 = vmax.xlane.f32.xlu0 %v2953
    %v2955 = vpop.xlane.xlu0 %2954
    %v2956 = vsub.f32 %v2952, %v2955
    %v2957 = vmul.f32 %v2956, 1.442695
    %v2958 = vpow.pop %v2957
    %2960 = vrot.lane.b32.xlu0 %v2958, 96
    %v2961 = vpop.permute.xlu0 %2960
    %v2963 = vsel %vm1750, %v2961, 0.0
    %2964 = vadd.xlane.f32.xlu0 %v2963
    %v2965 = vpop.xlane.xlu0 %2964
    %v2966 = vrcp.pop %v2965
    %v2967 = vmul.f32 %v2958, %v2966
    %2969 = vrot.lane.b32.xlu0 %v2967, 96
    %v2970 = vpop.permute.xlu0 %2969
    %v2971 = vsel %vm136, %v2970, 0
    %2973 = vmatprep.subr.mxu0 0.0
    %2974 = vmatpush1.msra.mxu0 %v1512
    %2975 = vmatprep.subr.mxu0 0.0
    %2976 = vmatpush1.msra.mxu0 %v1517
    %2977 = vmatprep.subr.mxu0 0.0
    %2978 = vmatpush1.msra.mxu0 0.0
    %2979 = vmatprep.subr.mxu0 0.0
    %2980 = vmatpush1.msra.mxu0 0.0
    %2981 = vmatprep.subr.mxu0 0.0
    %2982 = vmatpush1.msra.mxu0 0.0
    %2983 = vmatprep.subr.mxu0 0.0
    %2984 = vmatpush1.msra.mxu0 0.0
    %2985 = vmatprep.subr.mxu0 0.0
    %2986 = vmatpush1.msra.mxu0 0.0
    %2987 = vmatprep.subr.mxu0 0.0
    %2988 = vmatpush1.msra.mxu0 0.0
    %2989 = vmatprep.subr.mxu0 0.0
    %2990 = vmatpush1.msra.mxu0 0.0
    %2991 = vmatprep.subr.mxu0 0.0
    %2992 = vmatpush1.msra.mxu0 0.0
    %2993 = vmatprep.subr.mxu0 0.0
    %2994 = vmatpush1.msra.mxu0 0.0
    %2995 = vmatprep.subr.mxu0 0.0
    %2996 = vmatpush1.msra.mxu0 0.0
    %2997 = vmatprep.subr.mxu0 0.0
    %2998 = vmatpush1.msra.mxu0 0.0
    %2999 = vmatprep.subr.mxu0 0.0
    %3000 = vmatpush1.msra.mxu0 0.0
    %3001 = vmatprep.subr.mxu0 0.0
    %3002 = vmatpush1.msra.mxu0 0.0
    %3003 = vmatprep.subr.mxu0 0.0
    %3004 = vmatpush1.msra.mxu0 0.0
    %3005 = vmatprep.subr.mxu0 0.0
    %3006 = vmatpush1.msra.mxu0 0.0
    %3007 = vmatprep.subr.mxu0 0.0
    %3008 = vmatpush1.msra.mxu0 0.0
    %3009 = vmatprep.subr.mxu0 0.0
    %3010 = vmatpush1.msra.mxu0 0.0
    %3011 = vmatprep.subr.mxu0 0.0
    %3012 = vmatpush1.msra.mxu0 0.0
    %3013 = vmatprep.subr.mxu0 0.0
    %3014 = vmatpush1.msra.mxu0 0.0
    %3015 = vmatprep.subr.mxu0 0.0
    %3016 = vmatpush1.msra.mxu0 0.0
    %3017 = vmatprep.subr.mxu0 0.0
    %3018 = vmatpush1.msra.mxu0 0.0
    %3019 = vmatprep.subr.mxu0 0.0
    %3020 = vmatpush1.msra.mxu0 0.0
    %3021 = vmatprep.subr.mxu0 0.0
    %3022 = vmatpush1.msra.mxu0 0.0
    %3023 = vmatprep.subr.mxu0 0.0
    %3024 = vmatpush1.msra.mxu0 0.0
    %3025 = vmatprep.subr.mxu0 0.0
    %3026 = vmatpush1.msra.mxu0 0.0
    %3027 = vmatprep.subr.mxu0 0.0
    %3028 = vmatpush1.msra.mxu0 0.0
    %3029 = vmatprep.subr.mxu0 0.0
    %3030 = vmatpush1.msra.mxu0 0.0
    %3031 = vmatprep.subr.mxu0 0.0
    %3032 = vmatpush1.msra.mxu0 0.0
    %3033 = vmatprep.subr.mxu0 0.0
    %3034 = vmatpush1.msra.mxu0 0.0
    %3035 = vmatprep.subr.mxu0 0.0
    %3036 = vmatpush1.msra.mxu0 0.0
    %3037 = vmatprep.mubr.f32.mxu0 0.0
    %3038 = vmatmul.mubr.f32.gmra.mrb[0].mxu0 %v2971
    %v3039 = vpop.f32.mrb[0].mxu0
    %v3040 = vadd.f32 0.0, %v3039
    %v3041 = vpop.f32.mrb[0].mxu0
    %3042 = vdwg.mxu0
    %v3043 = vadd.f32 %v2950, %v3040
    %v3044 = vtanh.pop %v3043
    %v3046 = vsel %vm321, %v3044, 0
    %3048 = vmatprep.subr.mxu0 0.0
    %3049 = vmatpush1.msra.mxu0 %v1548
    %3050 = vmatprep.subr.mxu0 0.0
    %3051 = vmatpush1.msra.mxu0 %v1549
    %3052 = vmatprep.subr.mxu0 0.0
    %3053 = vmatpush1.msra.mxu0 %v1550
    %3054 = vmatprep.subr.mxu0 0.0
    %3055 = vmatpush1.msra.mxu0 %v1551
    %3056 = vmatprep.subr.mxu0 0.0
    %3057 = vmatpush1.msra.mxu0 0.0
    %3058 = vmatprep.subr.mxu0 0.0
    %3059 = vmatpush1.msra.mxu0 0.0
    %3060 = vmatprep.subr.mxu0 0.0
    %3061 = vmatpush1.msra.mxu0 0.0
    %3062 = vmatprep.subr.mxu0 0.0
    %3063 = vmatpush1.msra.mxu0 0.0
    %3064 = vmatprep.subr.mxu0 0.0
    %3065 = vmatpush1.msra.mxu0 0.0
    %3066 = vmatprep.subr.mxu0 0.0
    %3067 = vmatpush1.msra.mxu0 0.0
    %3068 = vmatprep.subr.mxu0 0.0
    %3069 = vmatpush1.msra.mxu0 0.0
    %3070 = vmatprep.subr.mxu0 0.0
    %3071 = vmatpush1.msra.mxu0 0.0
    %3072 = vmatprep.subr.mxu0 0.0
    %3073 = vmatpush1.msra.mxu0 0.0
    %3074 = vmatprep.subr.mxu0 0.0
    %3075 = vmatpush1.msra.mxu0 0.0
    %3076 = vmatprep.subr.mxu0 0.0
    %3077 = vmatpush1.msra.mxu0 0.0
    %3078 = vmatprep.subr.mxu0 0.0
    %3079 = vmatpush1.msra.mxu0 0.0
    %3080 = vmatprep.subr.mxu0 0.0
    %3081 = vmatpush1.msra.mxu0 0.0
    %3082 = vmatprep.subr.mxu0 0.0
    %3083 = vmatpush1.msra.mxu0 0.0
    %3084 = vmatprep.subr.mxu0 0.0
    %3085 = vmatpush1.msra.mxu0 0.0
    %3086 = vmatprep.subr.mxu0 0.0
    %3087 = vmatpush1.msra.mxu0 0.0
    %3088 = vmatprep.subr.mxu0 0.0
    %3089 = vmatpush1.msra.mxu0 0.0
    %3090 = vmatprep.subr.mxu0 0.0
    %3091 = vmatpush1.msra.mxu0 0.0
    %3092 = vmatprep.subr.mxu0 0.0
    %3093 = vmatpush1.msra.mxu0 0.0
    %3094 = vmatprep.subr.mxu0 0.0
    %3095 = vmatpush1.msra.mxu0 0.0
    %3096 = vmatprep.subr.mxu0 0.0
    %3097 = vmatpush1.msra.mxu0 0.0
    %3098 = vmatprep.subr.mxu0 0.0
    %3099 = vmatpush1.msra.mxu0 0.0
    %3100 = vmatprep.subr.mxu0 0.0
    %3101 = vmatpush1.msra.mxu0 0.0
    %3102 = vmatprep.subr.mxu0 0.0
    %3103 = vmatpush1.msra.mxu0 0.0
    %3104 = vmatprep.subr.mxu0 0.0
    %3105 = vmatpush1.msra.mxu0 0.0
    %3106 = vmatprep.subr.mxu0 0.0
    %3107 = vmatpush1.msra.mxu0 0.0
    %3108 = vmatprep.subr.mxu0 0.0
    %3109 = vmatpush1.msra.mxu0 0.0
    %3110 = vmatprep.subr.mxu0 0.0
    %3111 = vmatpush1.msra.mxu0 0.0
    %3112 = vmatprep.mubr.f32.mxu0 0.0
    %3113 = vmatmul.mubr.f32.gmra.mrb[0].mxu0 %v3046
    %v3114 = vpop.f32.mrb[0].mxu0
    %v3115 = vadd.f32 %v1557, %v3114
    %v3116 = vpop.f32.mrb[0].mxu0
    %3117 = vdwg.mxu0
    %v3118 = vsel %vm1750, %v3115, -inf
    %3119 = vmax.xlane.f32.xlu0 %v3118
    %v3120 = vpop.xlane.xlu0 %3119
    %v3121 = vsub.f32 %v3115, %v3120
    %v3122 = vmul.f32 %v3121, 1.442695
    %v3123 = vpow.pop %v3122
    %v3124 = vsel %vm1750, %v3123, 0.0
    %3125 = vadd.xlane.f32.xlu0 %v3124
    %v3126 = vpop.xlane.xlu0 %3125
    %v3127 = vlog2.pop %v3126
    %v3128 = vmul.f32 %v3127, 0.6931472
    %v3129 = vadd.f32 %v3128, %v3120
    %v3130 = vsub.f32 %v3115, %v3129
    %vm3131 = vcmp.ge.f32.partialorder %v3115, %v3120
    %v3132 = vsel %vm3131, %v105, 16
    %v3133 = vsel %vm1750, %v3132, 2147483647
    %v3134 = vand.u32 %v3133, 65535
    %v3135 = vshra.s32 %v3133, 16
    %v3136 = vcvt.s32.f32 %v3134
    %v3137 = vcvt.s32.f32 %v3135
    %3138 = vmin.xlane.f32.xlu0 %v3137
    %v3139 = vpop.xlane.xlu0 %3138
    %vm3140 = vcmp.eq.f32.partialorder %v3137, %v3139
    %v3141 = vsel %vm3140, %v3136, inf
    %3142 = vmin.xlane.f32.xlu0 %v3141
    %v3143 = vpop.xlane.xlu0 %3142
    %v3144 = vcvt.f32.s32 %v3143
    %v3145 = vcvt.f32.s32 %v3139
    %v3146 = vshll.u32 %v3145, 16
    %v3147 = vadd.s32 %v3146, %v3144
    %v3149 = vrot.slane %v2948, 6
    %v3151 = vadd.f32 %v417, %v3149
    %v3152 = vxor.u32 %v3151, 2147483648
    %v3153 = vmul.f32 %v3152, 1.442695
    %v3154 = vpow.pop %v3153
    %v3155 = vadd.f32 %v3154, 1.0
    %v3156 = vrcp.pop %v3155
    %v3157 = vmul.f32 1.0, %v3156
    %v3158 = vtanh.pop %v3151
    %v3160 = vrot.slane %v2869, 6
    %v3162 = vmul.f32 %v3157, %v3160
    %3164 = vrot.lane.b32.xlu0 %v3158, 32
    %v3165 = vpop.permute.xlu0 %3164
    %v3167 = vmul.f32 %v3157, %v3165
    %3169 = vrot.lane.b32.xlu0 %v3167, 32
    %v3170 = vpop.permute.xlu0 %3169
    %v3172 = vadd.f32 %v3162, %v3170
    %v3173 = vtanh.pop %v3172
    %3175 = vrot.lane.b32.xlu0 %v3173, 32
    %v3176 = vpop.permute.xlu0 %3175
    %v3178 = vmul.f32 %v3157, %v3176
    %v3180 = vrot.slane %v3178, 2
    %3181 = vrot.lane.b32.xlu0 %v3180, 64
    %v3182 = vpop.permute.xlu0 %3181
    %v3183 = vsel %vm321, %v3182, 0
    %3185 = vmatprep.subr.mxu0 %v1544
    %3186 = vmatpush1.msra.mxu0 %v1520
    %3187 = vmatprep.subr.mxu0 %v1545
    %3188 = vmatpush1.msra.mxu0 %v1522
    %3189 = vmatprep.subr.mxu0 %v1546
    %3190 = vmatpush1.msra.mxu0 %v1524
    %3191 = vmatprep.subr.mxu0 %v1547
    %3192 = vmatpush1.msra.mxu0 %v1526
    %3193 = vmatprep.subr.mxu0 0.0
    %3194 = vmatpush1.msra.mxu0 0.0
    %3195 = vmatprep.subr.mxu0 0.0
    %3196 = vmatpush1.msra.mxu0 0.0
    %3197 = vmatprep.subr.mxu0 0.0
    %3198 = vmatpush1.msra.mxu0 0.0
    %3199 = vmatprep.subr.mxu0 0.0
    %3200 = vmatpush1.msra.mxu0 0.0
    %3201 = vmatprep.subr.mxu0 0.0
    %3202 = vmatpush1.msra.mxu0 0.0
    %3203 = vmatprep.subr.mxu0 0.0
    %3204 = vmatpush1.msra.mxu0 0.0
    %3205 = vmatprep.subr.mxu0 0.0
    %3206 = vmatpush1.msra.mxu0 0.0
    %3207 = vmatprep.subr.mxu0 0.0
    %3208 = vmatpush1.msra.mxu0 0.0
    %3209 = vmatprep.subr.mxu0 0.0
    %3210 = vmatpush1.msra.mxu0 0.0
    %3211 = vmatprep.subr.mxu0 0.0
    %3212 = vmatpush1.msra.mxu0 0.0
    %3213 = vmatprep.subr.mxu0 0.0
    %3214 = vmatpush1.msra.mxu0 0.0
    %3215 = vmatprep.subr.mxu0 0.0
    %3216 = vmatpush1.msra.mxu0 0.0
    %3217 = vmatprep.subr.mxu0 0.0
    %3218 = vmatpush1.msra.mxu0 0.0
    %3219 = vmatprep.subr.mxu0 0.0
    %3220 = vmatpush1.msra.mxu0 0.0
    %3221 = vmatprep.subr.mxu0 0.0
    %3222 = vmatpush1.msra.mxu0 0.0
    %3223 = vmatprep.subr.mxu0 0.0
    %3224 = vmatpush1.msra.mxu0 0.0
    %3225 = vmatprep.subr.mxu0 0.0
    %3226 = vmatpush1.msra.mxu0 0.0
    %3227 = vmatprep.subr.mxu0 0.0
    %3228 = vmatpush1.msra.mxu0 0.0
    %3229 = vmatprep.subr.mxu0 0.0
    %3230 = vmatpush1.msra.mxu0 0.0
    %3231 = vmatprep.subr.mxu0 0.0
    %3232 = vmatpush1.msra.mxu0 0.0
    %3233 = vmatprep.subr.mxu0 0.0
    %3234 = vmatpush1.msra.mxu0 0.0
    %3235 = vmatprep.subr.mxu0 0.0
    %3236 = vmatpush1.msra.mxu0 0.0
    %3237 = vmatprep.subr.mxu0 0.0
    %3238 = vmatpush1.msra.mxu0 0.0
    %3239 = vmatprep.subr.mxu0 0.0
    %3240 = vmatpush1.msra.mxu0 0.0
    %3241 = vmatprep.subr.mxu0 0.0
    %3242 = vmatpush1.msra.mxu0 0.0
    %3243 = vmatprep.subr.mxu0 0.0
    %3244 = vmatpush1.msra.mxu0 0.0
    %3245 = vmatprep.subr.mxu0 0.0
    %3246 = vmatpush1.msra.mxu0 0.0
    %3247 = vmatprep.subr.mxu0 0.0
    %3248 = vmatpush1.msra.mxu0 0.0
    %3249 = vmatprep.mubr.f32.mxu0 0.0
    %3250 = vmatmul.mubr.f32.gmra.mrb[0].mxu0 %v3183
    %v3251 = vpop.f32.mrb[0].mxu0
    %v3252 = vadd.f32 0.0, %v3251
    %v3253 = vpop.f32.mrb[0].mxu0
    %v3254 = vadd.f32 0.0, %v3253
    %3255 = vdwg.mxu0
    %v3256 = vadd.f32 %v3254, %v1736
    %v3257 = vsel %vm1739, %v3256, -inf
    %3258 = vmax.xlane.f32.xlu0 %v3257
    %v3259 = vpop.xlane.xlu0 %3258
    %v3260 = vsub.f32 %v3256, %v3259
    %v3261 = vmul.f32 %v3260, 1.442695
    %v3262 = vpow.pop %v3261
    %3264 = vrot.lane.b32.xlu0 %v3262, 96
    %v3265 = vpop.permute.xlu0 %3264
    %v3267 = vsel %vm1750, %v3265, 0.0
    %3268 = vadd.xlane.f32.xlu0 %v3267
    %v3269 = vpop.xlane.xlu0 %3268
    %v3270 = vrcp.pop %v3269
    %v3271 = vmul.f32 %v3262, %v3270
    %3273 = vrot.lane.b32.xlu0 %v3271, 96
    %v3274 = vpop.permute.xlu0 %3273
    %v3275 = vsel %vm136, %v3274, 0
    %3277 = vmatprep.subr.mxu0 0.0
    %3278 = vmatpush1.msra.mxu0 %v1512
    %3279 = vmatprep.subr.mxu0 0.0
    %3280 = vmatpush1.msra.mxu0 %v1517
    %3281 = vmatprep.subr.mxu0 0.0
    %3282 = vmatpush1.msra.mxu0 0.0
    %3283 = vmatprep.subr.mxu0 0.0
    %3284 = vmatpush1.msra.mxu0 0.0
    %3285 = vmatprep.subr.mxu0 0.0
    %3286 = vmatpush1.msra.mxu0 0.0
    %3287 = vmatprep.subr.mxu0 0.0
    %3288 = vmatpush1.msra.mxu0 0.0
    %3289 = vmatprep.subr.mxu0 0.0
    %3290 = vmatpush1.msra.mxu0 0.0
    %3291 = vmatprep.subr.mxu0 0.0
    %3292 = vmatpush1.msra.mxu0 0.0
    %3293 = vmatprep.subr.mxu0 0.0
    %3294 = vmatpush1.msra.mxu0 0.0
    %3295 = vmatprep.subr.mxu0 0.0
    %3296 = vmatpush1.msra.mxu0 0.0
    %3297 = vmatprep.subr.mxu0 0.0
    %3298 = vmatpush1.msra.mxu0 0.0
    %3299 = vmatprep.subr.mxu0 0.0
    %3300 = vmatpush1.msra.mxu0 0.0
    %3301 = vmatprep.subr.mxu0 0.0
    %3302 = vmatpush1.msra.mxu0 0.0
    %3303 = vmatprep.subr.mxu0 0.0
    %3304 = vmatpush1.msra.mxu0 0.0
    %3305 = vmatprep.subr.mxu0 0.0
    %3306 = vmatpush1.msra.mxu0 0.0
    %3307 = vmatprep.subr.mxu0 0.0
    %3308 = vmatpush1.msra.mxu0 0.0
    %3309 = vmatprep.subr.mxu0 0.0
    %3310 = vmatpush1.msra.mxu0 0.0
    %3311 = vmatprep.subr.mxu0 0.0
    %3312 = vmatpush1.msra.mxu0 0.0
    %3313 = vmatprep.subr.mxu0 0.0
    %3314 = vmatpush1.msra.mxu0 0.0
    %3315 = vmatprep.subr.mxu0 0.0
    %3316 = vmatpush1.msra.mxu0 0.0
    %3317 = vmatprep.subr.mxu0 0.0
    %3318 = vmatpush1.msra.mxu0 0.0
    %3319 = vmatprep.subr.mxu0 0.0
    %3320 = vmatpush1.msra.mxu0 0.0
    %3321 = vmatprep.subr.mxu0 0.0
    %3322 = vmatpush1.msra.mxu0 0.0
    %3323 = vmatprep.subr.mxu0 0.0
    %3324 = vmatpush1.msra.mxu0 0.0
    %3325 = vmatprep.subr.mxu0 0.0
    %3326 = vmatpush1.msra.mxu0 0.0
    %3327 = vmatprep.subr.mxu0 0.0
    %3328 = vmatpush1.msra.mxu0 0.0
    %3329 = vmatprep.subr.mxu0 0.0
    %3330 = vmatpush1.msra.mxu0 0.0
    %3331 = vmatprep.subr.mxu0 0.0
    %3332 = vmatpush1.msra.mxu0 0.0
    %3333 = vmatprep.subr.mxu0 0.0
    %3334 = vmatpush1.msra.mxu0 0.0
    %3335 = vmatprep.subr.mxu0 0.0
    %3336 = vmatpush1.msra.mxu0 0.0
    %3337 = vmatprep.subr.mxu0 0.0
    %3338 = vmatpush1.msra.mxu0 0.0
    %3339 = vmatprep.subr.mxu0 0.0
    %3340 = vmatpush1.msra.mxu0 0.0
    %3341 = vmatprep.mubr.f32.mxu0 0.0
    %3342 = vmatmul.mubr.f32.gmra.mrb[0].mxu0 %v3275
    %v3343 = vpop.f32.mrb[0].mxu0
    %v3344 = vadd.f32 0.0, %v3343
    %v3345 = vpop.f32.mrb[0].mxu0
    %3346 = vdwg.mxu0
    %v3347 = vadd.f32 %v3254, %v3344
    %v3348 = vtanh.pop %v3347
    %v3350 = vsel %vm321, %v3348, 0
    %3352 = vmatprep.subr.mxu0 0.0
    %3353 = vmatpush1.msra.mxu0 %v1548
    %3354 = vmatprep.subr.mxu0 0.0
    %3355 = vmatpush1.msra.mxu0 %v1549
    %3356 = vmatprep.subr.mxu0 0.0
    %3357 = vmatpush1.msra.mxu0 %v1550
    %3358 = vmatprep.subr.mxu0 0.0
    %3359 = vmatpush1.msra.mxu0 %v1551
    %3360 = vmatprep.subr.mxu0 0.0
    %3361 = vmatpush1.msra.mxu0 0.0
    %3362 = vmatprep.subr.mxu0 0.0
    %3363 = vmatpush1.msra.mxu0 0.0
    %3364 = vmatprep.subr.mxu0 0.0
    %3365 = vmatpush1.msra.mxu0 0.0
    %3366 = vmatprep.subr.mxu0 0.0
    %3367 = vmatpush1.msra.mxu0 0.0
    %3368 = vmatprep.subr.mxu0 0.0
    %3369 = vmatpush1.msra.mxu0 0.0
    %3370 = vmatprep.subr.mxu0 0.0
    %3371 = vmatpush1.msra.mxu0 0.0
    %3372 = vmatprep.subr.mxu0 0.0
    %3373 = vmatpush1.msra.mxu0 0.0
    %3374 = vmatprep.subr.mxu0 0.0
    %3375 = vmatpush1.msra.mxu0 0.0
    %3376 = vmatprep.subr.mxu0 0.0
    %3377 = vmatpush1.msra.mxu0 0.0
    %3378 = vmatprep.subr.mxu0 0.0
    %3379 = vmatpush1.msra.mxu0 0.0
    %3380 = vmatprep.subr.mxu0 0.0
    %3381 = vmatpush1.msra.mxu0 0.0
    %3382 = vmatprep.subr.mxu0 0.0
    %3383 = vmatpush1.msra.mxu0 0.0
    %3384 = vmatprep.subr.mxu0 0.0
    %3385 = vmatpush1.msra.mxu0 0.0
    %3386 = vmatprep.subr.mxu0 0.0
    %3387 = vmatpush1.msra.mxu0 0.0
    %3388 = vmatprep.subr.mxu0 0.0
    %3389 = vmatpush1.msra.mxu0 0.0
    %3390 = vmatprep.subr.mxu0 0.0
    %3391 = vmatpush1.msra.mxu0 0.0
    %3392 = vmatprep.subr.mxu0 0.0
    %3393 = vmatpush1.msra.mxu0 0.0
    %3394 = vmatprep.subr.mxu0 0.0
    %3395 = vmatpush1.msra.mxu0 0.0
    %3396 = vmatprep.subr.mxu0 0.0
    %3397 = vmatpush1.msra.mxu0 0.0
    %3398 = vmatprep.subr.mxu0 0.0
    %3399 = vmatpush1.msra.mxu0 0.0
    %3400 = vmatprep.subr.mxu0 0.0
    %3401 = vmatpush1.msra.mxu0 0.0
    %3402 = vmatprep.subr.mxu0 0.0
    %3403 = vmatpush1.msra.mxu0 0.0
    %3404 = vmatprep.subr.mxu0 0.0
    %3405 = vmatpush1.msra.mxu0 0.0
    %3406 = vmatprep.subr.mxu0 0.0
    %3407 = vmatpush1.msra.mxu0 0.0
    %3408 = vmatprep.subr.mxu0 0.0
    %3409 = vmatpush1.msra.mxu0 0.0
    %3410 = vmatprep.subr.mxu0 0.0
    %3411 = vmatpush1.msra.mxu0 0.0
    %3412 = vmatprep.subr.mxu0 0.0
    %3413 = vmatpush1.msra.mxu0 0.0
    %3414 = vmatprep.subr.mxu0 0.0
    %3415 = vmatpush1.msra.mxu0 0.0
    %3416 = vmatprep.mubr.f32.mxu0 0.0
    %3417 = vmatmul.mubr.f32.gmra.mrb[0].mxu0 %v3350
    %v3418 = vpop.f32.mrb[0].mxu0
    %v3419 = vadd.f32 %v1557, %v3418
    %v3420 = vpop.f32.mrb[0].mxu0
    %3421 = vdwg.mxu0
    %v3422 = vsel %vm1750, %v3419, -inf
    %3423 = vmax.xlane.f32.xlu0 %v3422
    %v3424 = vpop.xlane.xlu0 %3423
    %v3425 = vsub.f32 %v3419, %v3424
    %v3426 = vmul.f32 %v3425, 1.442695
    %v3427 = vpow.pop %v3426
    %v3428 = vsel %vm1750, %v3427, 0.0
    %3429 = vadd.xlane.f32.xlu0 %v3428
    %v3430 = vpop.xlane.xlu0 %3429
    %v3431 = vlog2.pop %v3430
    %v3432 = vmul.f32 %v3431, 0.6931472
    %v3433 = vadd.f32 %v3432, %v3424
    %v3434 = vsub.f32 %v3419, %v3433
    %vm3435 = vcmp.ge.f32.partialorder %v3419, %v3424
    %v3436 = vsel %vm3435, %v105, 16
    %v3437 = vsel %vm1750, %v3436, 2147483647
    %v3438 = vand.u32 %v3437, 65535
    %v3439 = vshra.s32 %v3437, 16
    %v3440 = vcvt.s32.f32 %v3438
    %v3441 = vcvt.s32.f32 %v3439
    %3442 = vmin.xlane.f32.xlu0 %v3441
    %v3443 = vpop.xlane.xlu0 %3442
    %vm3444 = vcmp.eq.f32.partialorder %v3441, %v3443
    %v3445 = vsel %vm3444, %v3440, inf
    %3446 = vmin.xlane.f32.xlu0 %v3445
    %v3447 = vpop.xlane.xlu0 %3446
    %v3448 = vcvt.f32.s32 %v3447
    %v3449 = vcvt.f32.s32 %v3443
    %v3450 = vshll.u32 %v3449, 16
    %v3451 = vadd.s32 %v3450, %v3448
    %v3453 = vrot.slane %v3252, 4
    %v3455 = vadd.f32 %v417, %v3453
    %v3456 = vxor.u32 %v3455, 2147483648
    %v3457 = vmul.f32 %v3456, 1.442695
    %v3458 = vpow.pop %v3457
    %v3459 = vadd.f32 %v3458, 1.0
    %v3460 = vrcp.pop %v3459
    %v3461 = vmul.f32 1.0, %v3460
    %v3462 = vtanh.pop %v3455
    %v3464 = vrot.slane %v3172, 6
    %v3466 = vmul.f32 %v3461, %v3464
    %3468 = vrot.lane.b32.xlu0 %v3462, 32
    %v3469 = vpop.permute.xlu0 %3468
    %v3471 = vmul.f32 %v3461, %v3469
    %3473 = vrot.lane.b32.xlu0 %v3471, 32
    %v3474 = vpop.permute.xlu0 %3473
    %v3476 = vadd.f32 %v3466, %v3474
    %v3477 = vtanh.pop %v3476
    %3479 = vrot.lane.b32.xlu0 %v3477, 32
    %v3480 = vpop.permute.xlu0 %3479
    %v3482 = vmul.f32 %v3461, %v3480
    %v3484 = vrot.slane %v3482, 4
    %3485 = vrot.lane.b32.xlu0 %v3484, 64
    %v3486 = vpop.permute.xlu0 %3485
    %v3487 = vsel %vm321, %v3486, 0
    %3489 = vmatprep.subr.mxu0 %v1544
    %3490 = vmatpush1.msra.mxu0 %v1520
    %3491 = vmatprep.subr.mxu0 %v1545
    %3492 = vmatpush1.msra.mxu0 %v1522
    %3493 = vmatprep.subr.mxu0 %v1546
    %3494 = vmatpush1.msra.mxu0 %v1524
    %3495 = vmatprep.subr.mxu0 %v1547
    %3496 = vmatpush1.msra.mxu0 %v1526
    %3497 = vmatprep.subr.mxu0 0.0
    %3498 = vmatpush1.msra.mxu0 0.0
    %3499 = vmatprep.subr.mxu0 0.0
    %3500 = vmatpush1.msra.mxu0 0.0
    %3501 = vmatprep.subr.mxu0 0.0
    %3502 = vmatpush1.msra.mxu0 0.0
    %3503 = vmatprep.subr.mxu0 0.0
    %3504 = vmatpush1.msra.mxu0 0.0
    %3505 = vmatprep.subr.mxu0 0.0
    %3506 = vmatpush1.msra.mxu0 0.0
    %3507 = vmatprep.subr.mxu0 0.0
    %3508 = vmatpush1.msra.mxu0 0.0
    %3509 = vmatprep.subr.mxu0 0.0
    %3510 = vmatpush1.msra.mxu0 0.0
    %3511 = vmatprep.subr.mxu0 0.0
    %3512 = vmatpush1.msra.mxu0 0.0
    %3513 = vmatprep.subr.mxu0 0.0
    %3514 = vmatpush1.msra.mxu0 0.0
    %3515 = vmatprep.subr.mxu0 0.0
    %3516 = vmatpush1.msra.mxu0 0.0
    %3517 = vmatprep.subr.mxu0 0.0
    %3518 = vmatpush1.msra.mxu0 0.0
    %3519 = vmatprep.subr.mxu0 0.0
    %3520 = vmatpush1.msra.mxu0 0.0
    %3521 = vmatprep.subr.mxu0 0.0
    %3522 = vmatpush1.msra.mxu0 0.0
    %3523 = vmatprep.subr.mxu0 0.0
    %3524 = vmatpush1.msra.mxu0 0.0
    %3525 = vmatprep.subr.mxu0 0.0
    %3526 = vmatpush1.msra.mxu0 0.0
    %3527 = vmatprep.subr.mxu0 0.0
    %3528 = vmatpush1.msra.mxu0 0.0
    %3529 = vmatprep.subr.mxu0 0.0
    %3530 = vmatpush1.msra.mxu0 0.0
    %3531 = vmatprep.subr.mxu0 0.0
    %3532 = vmatpush1.msra.mxu0 0.0
    %3533 = vmatprep.subr.mxu0 0.0
    %3534 = vmatpush1.msra.mxu0 0.0
    %3535 = vmatprep.subr.mxu0 0.0
    %3536 = vmatpush1.msra.mxu0 0.0
    %3537 = vmatprep.subr.mxu0 0.0
    %3538 = vmatpush1.msra.mxu0 0.0
    %3539 = vmatprep.subr.mxu0 0.0
    %3540 = vmatpush1.msra.mxu0 0.0
    %3541 = vmatprep.subr.mxu0 0.0
    %3542 = vmatpush1.msra.mxu0 0.0
    %3543 = vmatprep.subr.mxu0 0.0
    %3544 = vmatpush1.msra.mxu0 0.0
    %3545 = vmatprep.subr.mxu0 0.0
    %3546 = vmatpush1.msra.mxu0 0.0
    %3547 = vmatprep.subr.mxu0 0.0
    %3548 = vmatpush1.msra.mxu0 0.0
    %3549 = vmatprep.subr.mxu0 0.0
    %3550 = vmatpush1.msra.mxu0 0.0
    %3551 = vmatprep.subr.mxu0 0.0
    %3552 = vmatpush1.msra.mxu0 0.0
    %3553 = vmatprep.mubr.f32.mxu0 0.0
    %3554 = vmatmul.mubr.f32.gmra.mrb[0].mxu0 %v3487
    %v3555 = vpop.f32.mrb[0].mxu0
    %v3556 = vadd.f32 0.0, %v3555
    %v3557 = vpop.f32.mrb[0].mxu0
    %v3558 = vadd.f32 0.0, %v3557
    %3559 = vdwg.mxu0
    %v3560 = vadd.f32 %v3558, %v1736
    %v3561 = vsel %vm1739, %v3560, -inf
    %3562 = vmax.xlane.f32.xlu0 %v3561
    %v3563 = vpop.xlane.xlu0 %3562
    %v3564 = vsub.f32 %v3560, %v3563
    %v3565 = vmul.f32 %v3564, 1.442695
    %v3566 = vpow.pop %v3565
    %3568 = vrot.lane.b32.xlu0 %v3566, 96
    %v3569 = vpop.permute.xlu0 %3568
    %v3571 = vsel %vm1750, %v3569, 0.0
    %3572 = vadd.xlane.f32.xlu0 %v3571
    %v3573 = vpop.xlane.xlu0 %3572
    %v3574 = vrcp.pop %v3573
    %v3575 = vmul.f32 %v3566, %v3574
    %3577 = vrot.lane.b32.xlu0 %v3575, 96
    %v3578 = vpop.permute.xlu0 %3577
    %v3579 = vsel %vm136, %v3578, 0
    %3581 = vmatprep.subr.mxu0 0.0
    %3582 = vmatpush1.msra.mxu0 %v1512
    %3583 = vmatprep.subr.mxu0 0.0
    %3584 = vmatpush1.msra.mxu0 %v1517
    %3585 = vmatprep.subr.mxu0 0.0
    %3586 = vmatpush1.msra.mxu0 0.0
    %3587 = vmatprep.subr.mxu0 0.0
    %3588 = vmatpush1.msra.mxu0 0.0
    %3589 = vmatprep.subr.mxu0 0.0
    %3590 = vmatpush1.msra.mxu0 0.0
    %3591 = vmatprep.subr.mxu0 0.0
    %3592 = vmatpush1.msra.mxu0 0.0
    %3593 = vmatprep.subr.mxu0 0.0
    %3594 = vmatpush1.msra.mxu0 0.0
    %3595 = vmatprep.subr.mxu0 0.0
    %3596 = vmatpush1.msra.mxu0 0.0
    %3597 = vmatprep.subr.mxu0 0.0
    %3598 = vmatpush1.msra.mxu0 0.0
    %3599 = vmatprep.subr.mxu0 0.0
    %3600 = vmatpush1.msra.mxu0 0.0
    %3601 = vmatprep.subr.mxu0 0.0
    %3602 = vmatpush1.msra.mxu0 0.0
    %3603 = vmatprep.subr.mxu0 0.0
    %3604 = vmatpush1.msra.mxu0 0.0
    %3605 = vmatprep.subr.mxu0 0.0
    %3606 = vmatpush1.msra.mxu0 0.0
    %3607 = vmatprep.subr.mxu0 0.0
    %3608 = vmatpush1.msra.mxu0 0.0
    %3609 = vmatprep.subr.mxu0 0.0
    %3610 = vmatpush1.msra.mxu0 0.0
    %3611 = vmatprep.subr.mxu0 0.0
    %3612 = vmatpush1.msra.mxu0 0.0
    %3613 = vmatprep.subr.mxu0 0.0
    %3614 = vmatpush1.msra.mxu0 0.0
    %3615 = vmatprep.subr.mxu0 0.0
    %3616 = vmatpush1.msra.mxu0 0.0
    %3617 = vmatprep.subr.mxu0 0.0
    %3618 = vmatpush1.msra.mxu0 0.0
    %3619 = vmatprep.subr.mxu0 0.0
    %3620 = vmatpush1.msra.mxu0 0.0
    %3621 = vmatprep.subr.mxu0 0.0
    %3622 = vmatpush1.msra.mxu0 0.0
    %3623 = vmatprep.subr.mxu0 0.0
    %3624 = vmatpush1.msra.mxu0 0.0
    %3625 = vmatprep.subr.mxu0 0.0
    %3626 = vmatpush1.msra.mxu0 0.0
    %3627 = vmatprep.subr.mxu0 0.0
    %3628 = vmatpush1.msra.mxu0 0.0
    %3629 = vmatprep.subr.mxu0 0.0
    %3630 = vmatpush1.msra.mxu0 0.0
    %3631 = vmatprep.subr.mxu0 0.0
    %3632 = vmatpush1.msra.mxu0 0.0
    %3633 = vmatprep.subr.mxu0 0.0
    %3634 = vmatpush1.msra.mxu0 0.0
    %3635 = vmatprep.subr.mxu0 0.0
    %3636 = vmatpush1.msra.mxu0 0.0
    %3637 = vmatprep.subr.mxu0 0.0
    %3638 = vmatpush1.msra.mxu0 0.0
    %3639 = vmatprep.subr.mxu0 0.0
    %3640 = vmatpush1.msra.mxu0 0.0
    %3641 = vmatprep.subr.mxu0 0.0
    %3642 = vmatpush1.msra.mxu0 0.0
    %3643 = vmatprep.subr.mxu0 0.0
    %3644 = vmatpush1.msra.mxu0 0.0
    %3645 = vmatprep.mubr.f32.mxu0 0.0
    %3646 = vmatmul.mubr.f32.gmra.mrb[0].mxu0 %v3579
    %v3647 = vpop.f32.mrb[0].mxu0
    %v3648 = vadd.f32 0.0, %v3647
    %v3649 = vpop.f32.mrb[0].mxu0
    %3650 = vdwg.mxu0
    %v3651 = vadd.f32 %v3558, %v3648
    %v3652 = vtanh.pop %v3651
    %v3654 = vsel %vm321, %v3652, 0
    %3656 = vmatprep.subr.mxu0 0.0
    %3657 = vmatpush1.msra.mxu0 %v1548
    %3658 = vmatprep.subr.mxu0 0.0
    %3659 = vmatpush1.msra.mxu0 %v1549
    %3660 = vmatprep.subr.mxu0 0.0
    %3661 = vmatpush1.msra.mxu0 %v1550
    %3662 = vmatprep.subr.mxu0 0.0
    %3663 = vmatpush1.msra.mxu0 %v1551
    %3664 = vmatprep.subr.mxu0 0.0
    %3665 = vmatpush1.msra.mxu0 0.0
    %3666 = vmatprep.subr.mxu0 0.0
    %3667 = vmatpush1.msra.mxu0 0.0
    %3668 = vmatprep.subr.mxu0 0.0
    %3669 = vmatpush1.msra.mxu0 0.0
    %3670 = vmatprep.subr.mxu0 0.0
    %3671 = vmatpush1.msra.mxu0 0.0
    %3672 = vmatprep.subr.mxu0 0.0
    %3673 = vmatpush1.msra.mxu0 0.0
    %3674 = vmatprep.subr.mxu0 0.0
    %3675 = vmatpush1.msra.mxu0 0.0
    %3676 = vmatprep.subr.mxu0 0.0
    %3677 = vmatpush1.msra.mxu0 0.0
    %3678 = vmatprep.subr.mxu0 0.0
    %3679 = vmatpush1.msra.mxu0 0.0
    %3680 = vmatprep.subr.mxu0 0.0
    %3681 = vmatpush1.msra.mxu0 0.0
    %3682 = vmatprep.subr.mxu0 0.0
    %3683 = vmatpush1.msra.mxu0 0.0
    %3684 = vmatprep.subr.mxu0 0.0
    %3685 = vmatpush1.msra.mxu0 0.0
    %3686 = vmatprep.subr.mxu0 0.0
    %3687 = vmatpush1.msra.mxu0 0.0
    %3688 = vmatprep.subr.mxu0 0.0
    %3689 = vmatpush1.msra.mxu0 0.0
    %3690 = vmatprep.subr.mxu0 0.0
    %3691 = vmatpush1.msra.mxu0 0.0
    %3692 = vmatprep.subr.mxu0 0.0
    %3693 = vmatpush1.msra.mxu0 0.0
    %3694 = vmatprep.subr.mxu0 0.0
    %3695 = vmatpush1.msra.mxu0 0.0
    %3696 = vmatprep.subr.mxu0 0.0
    %3697 = vmatpush1.msra.mxu0 0.0
    %3698 = vmatprep.subr.mxu0 0.0
    %3699 = vmatpush1.msra.mxu0 0.0
    %3700 = vmatprep.subr.mxu0 0.0
    %3701 = vmatpush1.msra.mxu0 0.0
    %3702 = vmatprep.subr.mxu0 0.0
    %3703 = vmatpush1.msra.mxu0 0.0
    %3704 = vmatprep.subr.mxu0 0.0
    %3705 = vmatpush1.msra.mxu0 0.0
    %3706 = vmatprep.subr.mxu0 0.0
    %3707 = vmatpush1.msra.mxu0 0.0
    %3708 = vmatprep.subr.mxu0 0.0
    %3709 = vmatpush1.msra.mxu0 0.0
    %3710 = vmatprep.subr.mxu0 0.0
    %3711 = vmatpush1.msra.mxu0 0.0
    %3712 = vmatprep.subr.mxu0 0.0
    %3713 = vmatpush1.msra.mxu0 0.0
    %3714 = vmatprep.subr.mxu0 0.0
    %3715 = vmatpush1.msra.mxu0 0.0
    %3716 = vmatprep.subr.mxu0 0.0
    %3717 = vmatpush1.msra.mxu0 0.0
    %3718 = vmatprep.subr.mxu0 0.0
    %3719 = vmatpush1.msra.mxu0 0.0
    %3720 = vmatprep.mubr.f32.mxu0 0.0
    %3721 = vmatmul.mubr.f32.gmra.mrb[0].mxu0 %v3654
    %v3722 = vpop.f32.mrb[0].mxu0
    %v3723 = vadd.f32 %v1557, %v3722
    %v3724 = vpop.f32.mrb[0].mxu0
    %3725 = vdwg.mxu0
    %v3726 = vsel %vm1750, %v3723, -inf
    %3727 = vmax.xlane.f32.xlu0 %v3726
    %v3728 = vpop.xlane.xlu0 %3727
    %v3729 = vsub.f32 %v3723, %v3728
    %v3730 = vmul.f32 %v3729, 1.442695
    %v3731 = vpow.pop %v3730
    %v3732 = vsel %vm1750, %v3731, 0.0
    %3733 = vadd.xlane.f32.xlu0 %v3732
    %v3734 = vpop.xlane.xlu0 %3733
    %v3735 = vlog2.pop %v3734
    %v3736 = vmul.f32 %v3735, 0.6931472
    %v3737 = vadd.f32 %v3736, %v3728
    %v3738 = vsub.f32 %v3723, %v3737
    %vm3739 = vcmp.ge.f32.partialorder %v3723, %v3728
    %v3740 = vsel %vm3739, %v105, 16
    %v3741 = vsel %vm1750, %v3740, 2147483647
    %v3742 = vand.u32 %v3741, 65535
    %v3743 = vshra.s32 %v3741, 16
    %v3744 = vcvt.s32.f32 %v3742
    %v3745 = vcvt.s32.f32 %v3743
    %3746 = vmin.xlane.f32.xlu0 %v3745
    %v3747 = vpop.xlane.xlu0 %3746
    %vm3748 = vcmp.eq.f32.partialorder %v3745, %v3747
    %v3749 = vsel %vm3748, %v3744, inf
    %3750 = vmin.xlane.f32.xlu0 %v3749
    %v3751 = vpop.xlane.xlu0 %3750
    %v3752 = vcvt.f32.s32 %v3751
    %v3753 = vcvt.f32.s32 %v3747
    %v3754 = vshll.u32 %v3753, 16
    %v3755 = vadd.s32 %v3754, %v3752
    %v3757 = vrot.slane %v3556, 2
    %v3759 = vadd.f32 %v417, %v3757
    %v3760 = vxor.u32 %v3759, 2147483648
    %v3761 = vmul.f32 %v3760, 1.442695
    %v3762 = vpow.pop %v3761
    %v3763 = vadd.f32 %v3762, 1.0
    %v3764 = vrcp.pop %v3763
    %v3765 = vmul.f32 1.0, %v3764
    %v3766 = vtanh.pop %v3759
    %v3768 = vrot.slane %v3476, 6
    %v3770 = vmul.f32 %v3765, %v3768
    %3772 = vrot.lane.b32.xlu0 %v3766, 32
    %v3773 = vpop.permute.xlu0 %3772
    %v3775 = vmul.f32 %v3765, %v3773
    %3777 = vrot.lane.b32.xlu0 %v3775, 32
    %v3778 = vpop.permute.xlu0 %3777
    %v3780 = vadd.f32 %v3770, %v3778
    %v3781 = vtanh.pop %v3780
    %3783 = vrot.lane.b32.xlu0 %v3781, 32
    %v3784 = vpop.permute.xlu0 %3783
    %v3786 = vmul.f32 %v3765, %v3784
    %v3788 = vrot.slane %v3786, 6
    %3789 = vrot.lane.b32.xlu0 %v3788, 64
    %v3790 = vpop.permute.xlu0 %3789
    %v3791 = vsel %vm321, %v3790, 0
    %3793 = vmatprep.subr.mxu0 %v1544
    %3794 = vmatpush1.msra.mxu0 %v1520
    %3795 = vmatprep.subr.mxu0 %v1545
    %3796 = vmatpush1.msra.mxu0 %v1522
    %3797 = vmatprep.subr.mxu0 %v1546
    %3798 = vmatpush1.msra.mxu0 %v1524
    %3799 = vmatprep.subr.mxu0 %v1547
    %3800 = vmatpush1.msra.mxu0 %v1526
    %3801 = vmatprep.subr.mxu0 0.0
    %3802 = vmatpush1.msra.mxu0 0.0
    %3803 = vmatprep.subr.mxu0 0.0
    %3804 = vmatpush1.msra.mxu0 0.0
    %3805 = vmatprep.subr.mxu0 0.0
    %3806 = vmatpush1.msra.mxu0 0.0
    %3807 = vmatprep.subr.mxu0 0.0
    %3808 = vmatpush1.msra.mxu0 0.0
    %3809 = vmatprep.subr.mxu0 0.0
    %3810 = vmatpush1.msra.mxu0 0.0
    %3811 = vmatprep.subr.mxu0 0.0
    %3812 = vmatpush1.msra.mxu0 0.0
    %3813 = vmatprep.subr.mxu0 0.0
    %3814 = vmatpush1.msra.mxu0 0.0
    %3815 = vmatprep.subr.mxu0 0.0
    %3816 = vmatpush1.msra.mxu0 0.0
    %3817 = vmatprep.subr.mxu0 0.0
    %3818 = vmatpush1.msra.mxu0 0.0
    %3819 = vmatprep.subr.mxu0 0.0
    %3820 = vmatpush1.msra.mxu0 0.0
    %3821 = vmatprep.subr.mxu0 0.0
    %3822 = vmatpush1.msra.mxu0 0.0
    %3823 = vmatprep.subr.mxu0 0.0
    %3824 = vmatpush1.msra.mxu0 0.0
    %3825 = vmatprep.subr.mxu0 0.0
    %3826 = vmatpush1.msra.mxu0 0.0
    %3827 = vmatprep.subr.mxu0 0.0
    %3828 = vmatpush1.msra.mxu0 0.0
    %3829 = vmatprep.subr.mxu0 0.0
    %3830 = vmatpush1.msra.mxu0 0.0
    %3831 = vmatprep.subr.mxu0 0.0
    %3832 = vmatpush1.msra.mxu0 0.0
    %3833 = vmatprep.subr.mxu0 0.0
    %3834 = vmatpush1.msra.mxu0 0.0
    %3835 = vmatprep.subr.mxu0 0.0
    %3836 = vmatpush1.msra.mxu0 0.0
    %3837 = vmatprep.subr.mxu0 0.0
    %3838 = vmatpush1.msra.mxu0 0.0
    %3839 = vmatprep.subr.mxu0 0.0
    %3840 = vmatpush1.msra.mxu0 0.0
    %3841 = vmatprep.subr.mxu0 0.0
    %3842 = vmatpush1.msra.mxu0 0.0
    %3843 = vmatprep.subr.mxu0 0.0
    %3844 = vmatpush1.msra.mxu0 0.0
    %3845 = vmatprep.subr.mxu0 0.0
    %3846 = vmatpush1.msra.mxu0 0.0
    %3847 = vmatprep.subr.mxu0 0.0
    %3848 = vmatpush1.msra.mxu0 0.0
    %3849 = vmatprep.subr.mxu0 0.0
    %3850 = vmatpush1.msra.mxu0 0.0
    %3851 = vmatprep.subr.mxu0 0.0
    %3852 = vmatpush1.msra.mxu0 0.0
    %3853 = vmatprep.subr.mxu0 0.0
    %3854 = vmatpush1.msra.mxu0 0.0
    %3855 = vmatprep.subr.mxu0 0.0
    %3856 = vmatpush1.msra.mxu0 0.0
    %3857 = vmatprep.mubr.f32.mxu0 0.0
    %3858 = vmatmul.mubr.f32.gmra.mrb[0].mxu0 %v3791
    %v3859 = vpop.f32.mrb[0].mxu0
    %v3860 = vpop.f32.mrb[0].mxu0
    %v3861 = vadd.f32 0.0, %v3860
    %3862 = vdwg.mxu0
    %v3863 = vadd.f32 %v3861, %v1736
    %v3864 = vsel %vm1739, %v3863, -inf
    %3865 = vmax.xlane.f32.xlu0 %v3864
    %v3866 = vpop.xlane.xlu0 %3865
    %v3867 = vsub.f32 %v3863, %v3866
    %v3868 = vmul.f32 %v3867, 1.442695
    %v3869 = vpow.pop %v3868
    %3871 = vrot.lane.b32.xlu0 %v3869, 96
    %v3872 = vpop.permute.xlu0 %3871
    %v3874 = vsel %vm1750, %v3872, 0.0
    %3875 = vadd.xlane.f32.xlu0 %v3874
    %v3876 = vpop.xlane.xlu0 %3875
    %v3877 = vrcp.pop %v3876
    %v3878 = vmul.f32 %v3869, %v3877
    %3880 = vrot.lane.b32.xlu0 %v3878, 96
    %v3881 = vpop.permute.xlu0 %3880
    %v3882 = vsel %vm136, %v3881, 0
    %3884 = vmatprep.subr.mxu0 0.0
    %3885 = vmatpush1.msra.mxu0 %v1512
    %3886 = vmatprep.subr.mxu0 0.0
    %3887 = vmatpush1.msra.mxu0 %v1517
    %3888 = vmatprep.subr.mxu0 0.0
    %3889 = vmatpush1.msra.mxu0 0.0
    %3890 = vmatprep.subr.mxu0 0.0
    %3891 = vmatpush1.msra.mxu0 0.0
    %3892 = vmatprep.subr.mxu0 0.0
    %3893 = vmatpush1.msra.mxu0 0.0
    %3894 = vmatprep.subr.mxu0 0.0
    %3895 = vmatpush1.msra.mxu0 0.0
    %3896 = vmatprep.subr.mxu0 0.0
    %3897 = vmatpush1.msra.mxu0 0.0
    %3898 = vmatprep.subr.mxu0 0.0
    %3899 = vmatpush1.msra.mxu0 0.0
    %3900 = vmatprep.subr.mxu0 0.0
    %3901 = vmatpush1.msra.mxu0 0.0
    %3902 = vmatprep.subr.mxu0 0.0
    %3903 = vmatpush1.msra.mxu0 0.0
    %3904 = vmatprep.subr.mxu0 0.0
    %3905 = vmatpush1.msra.mxu0 0.0
    %3906 = vmatprep.subr.mxu0 0.0
    %3907 = vmatpush1.msra.mxu0 0.0
    %3908 = vmatprep.subr.mxu0 0.0
    %3909 = vmatpush1.msra.mxu0 0.0
    %3910 = vmatprep.subr.mxu0 0.0
    %3911 = vmatpush1.msra.mxu0 0.0
    %3912 = vmatprep.subr.mxu0 0.0
    %3913 = vmatpush1.msra.mxu0 0.0
    %3914 = vmatprep.subr.mxu0 0.0
    %3915 = vmatpush1.msra.mxu0 0.0
    %3916 = vmatprep.subr.mxu0 0.0
    %3917 = vmatpush1.msra.mxu0 0.0
    %3918 = vmatprep.subr.mxu0 0.0
    %3919 = vmatpush1.msra.mxu0 0.0
    %3920 = vmatprep.subr.mxu0 0.0
    %3921 = vmatpush1.msra.mxu0 0.0
    %3922 = vmatprep.subr.mxu0 0.0
    %3923 = vmatpush1.msra.mxu0 0.0
    %3924 = vmatprep.subr.mxu0 0.0
    %3925 = vmatpush1.msra.mxu0 0.0
    %3926 = vmatprep.subr.mxu0 0.0
    %3927 = vmatpush1.msra.mxu0 0.0
    %3928 = vmatprep.subr.mxu0 0.0
    %3929 = vmatpush1.msra.mxu0 0.0
    %3930 = vmatprep.subr.mxu0 0.0
    %3931 = vmatpush1.msra.mxu0 0.0
    %3932 = vmatprep.subr.mxu0 0.0
    %3933 = vmatpush1.msra.mxu0 0.0
    %3934 = vmatprep.subr.mxu0 0.0
    %3935 = vmatpush1.msra.mxu0 0.0
    %3936 = vmatprep.subr.mxu0 0.0
    %3937 = vmatpush1.msra.mxu0 0.0
    %3938 = vmatprep.subr.mxu0 0.0
    %3939 = vmatpush1.msra.mxu0 0.0
    %3940 = vmatprep.subr.mxu0 0.0
    %3941 = vmatpush1.msra.mxu0 0.0
    %3942 = vmatprep.subr.mxu0 0.0
    %3943 = vmatpush1.msra.mxu0 0.0
    %3944 = vmatprep.subr.mxu0 0.0
    %3945 = vmatpush1.msra.mxu0 0.0
    %3946 = vmatprep.subr.mxu0 0.0
    %3947 = vmatpush1.msra.mxu0 0.0
    %3948 = vmatprep.mubr.f32.mxu0 0.0
    %3949 = vmatmul.mubr.f32.gmra.mrb[0].mxu0 %v3882
    %v3950 = vpop.f32.mrb[0].mxu0
    %v3951 = vadd.f32 0.0, %v3950
    %v3952 = vpop.f32.mrb[0].mxu0
    %3953 = vdwg.mxu0
    %v3954 = vadd.f32 %v3861, %v3951
    %v3955 = vtanh.pop %v3954
    %v3957 = vsel %vm321, %v3955, 0
    %3959 = vmatprep.subr.mxu0 0.0
    %3960 = vmatpush1.msra.mxu0 %v1548
    %3961 = vmatprep.subr.mxu0 0.0
    %3962 = vmatpush1.msra.mxu0 %v1549
    %3963 = vmatprep.subr.mxu0 0.0
    %3964 = vmatpush1.msra.mxu0 %v1550
    %3965 = vmatprep.subr.mxu0 0.0
    %3966 = vmatpush1.msra.mxu0 %v1551
    %3967 = vmatprep.subr.mxu0 0.0
    %3968 = vmatpush1.msra.mxu0 0.0
    %3969 = vmatprep.subr.mxu0 0.0
    %3970 = vmatpush1.msra.mxu0 0.0
    %3971 = vmatprep.subr.mxu0 0.0
    %3972 = vmatpush1.msra.mxu0 0.0
    %3973 = vmatprep.subr.mxu0 0.0
    %3974 = vmatpush1.msra.mxu0 0.0
    %3975 = vmatprep.subr.mxu0 0.0
    %3976 = vmatpush1.msra.mxu0 0.0
    %3977 = vmatprep.subr.mxu0 0.0
    %3978 = vmatpush1.msra.mxu0 0.0
    %3979 = vmatprep.subr.mxu0 0.0
    %3980 = vmatpush1.msra.mxu0 0.0
    %3981 = vmatprep.subr.mxu0 0.0
    %3982 = vmatpush1.msra.mxu0 0.0
    %3983 = vmatprep.subr.mxu0 0.0
    %3984 = vmatpush1.msra.mxu0 0.0
    %3985 = vmatprep.subr.mxu0 0.0
    %3986 = vmatpush1.msra.mxu0 0.0
    %3987 = vmatprep.subr.mxu0 0.0
    %3988 = vmatpush1.msra.mxu0 0.0
    %3989 = vmatprep.subr.mxu0 0.0
    %3990 = vmatpush1.msra.mxu0 0.0
    %3991 = vmatprep.subr.mxu0 0.0
    %3992 = vmatpush1.msra.mxu0 0.0
    %3993 = vmatprep.subr.mxu0 0.0
    %3994 = vmatpush1.msra.mxu0 0.0
    %3995 = vmatprep.subr.mxu0 0.0
    %3996 = vmatpush1.msra.mxu0 0.0
    %3997 = vmatprep.subr.mxu0 0.0
    %3998 = vmatpush1.msra.mxu0 0.0
    %3999 = vmatprep.subr.mxu0 0.0
    %4000 = vmatpush1.msra.mxu0 0.0
    %4001 = vmatprep.subr.mxu0 0.0
    %4002 = vmatpush1.msra.mxu0 0.0
    %4003 = vmatprep.subr.mxu0 0.0
    %4004 = vmatpush1.msra.mxu0 0.0
    %4005 = vmatprep.subr.mxu0 0.0
    %4006 = vmatpush1.msra.mxu0 0.0
    %4007 = vmatprep.subr.mxu0 0.0
    %4008 = vmatpush1.msra.mxu0 0.0
    %4009 = vmatprep.subr.mxu0 0.0
    %4010 = vmatpush1.msra.mxu0 0.0
    %4011 = vmatprep.subr.mxu0 0.0
    %4012 = vmatpush1.msra.mxu0 0.0
    %4013 = vmatprep.subr.mxu0 0.0
    %4014 = vmatpush1.msra.mxu0 0.0
    %4015 = vmatprep.subr.mxu0 0.0
    %4016 = vmatpush1.msra.mxu0 0.0
    %4017 = vmatprep.subr.mxu0 0.0
    %4018 = vmatpush1.msra.mxu0 0.0
    %4019 = vmatprep.subr.mxu0 0.0
    %4020 = vmatpush1.msra.mxu0 0.0
    %4021 = vmatprep.subr.mxu0 0.0
    %4022 = vmatpush1.msra.mxu0 0.0
    %4023 = vmatprep.mubr.f32.mxu0 0.0
    %4024 = vmatmul.mubr.f32.gmra.mrb[0].mxu0 %v3957
    %v4025 = vpop.f32.mrb[0].mxu0
    %v4026 = vadd.f32 %v1557, %v4025
    %v4027 = vpop.f32.mrb[0].mxu0
    %4028 = vdwg.mxu0
    %v4029 = vsel %vm1750, %v4026, -inf
    %4030 = vmax.xlane.f32.xlu0 %v4029
    %v4031 = vpop.xlane.xlu0 %4030
    %v4032 = vsub.f32 %v4026, %v4031
    %v4033 = vmul.f32 %v4032, 1.442695
    %v4034 = vpow.pop %v4033
    %v4035 = vsel %vm1750, %v4034, 0.0
    %4036 = vadd.xlane.f32.xlu0 %v4035
    %v4037 = vpop.xlane.xlu0 %4036
    %v4038 = vlog2.pop %v4037
    %v4039 = vmul.f32 %v4038, 0.6931472
    %v4040 = vadd.f32 %v4039, %v4031
    %v4041 = vsub.f32 %v4026, %v4040
    %vm4042 = vcmp.ge.f32.partialorder %v4026, %v4031
    %v4043 = vsel %vm4042, %v105, 16
    %v4044 = vsel %vm1750, %v4043, 2147483647
    %v4045 = vand.u32 %v4044, 65535
    %v4046 = vshra.s32 %v4044, 16
    %v4047 = vcvt.s32.f32 %v4045
    %v4048 = vcvt.s32.f32 %v4046
    %4049 = vmin.xlane.f32.xlu0 %v4048
    %v4050 = vpop.xlane.xlu0 %4049
    %vm4051 = vcmp.eq.f32.partialorder %v4048, %v4050
    %v4052 = vsel %vm4051, %v4047, inf
    %4053 = vmin.xlane.f32.xlu0 %v4052
    %v4054 = vpop.xlane.xlu0 %4053
    %v4055 = vcvt.f32.s32 %v4054
    %v4056 = vcvt.f32.s32 %v4050
    %v4057 = vshll.u32 %v4056, 16
    %v4058 = vadd.s32 %v4057, %v4055
    %4060 = vrot.lane.b32.xlu0 %v2222, 16
    %v4061 = vpop.permute.xlu0 %4060
    %4064 = vrot.lane.b32.xlu0 %v2526, 32
    %v4065 = vpop.permute.xlu0 %4064
    %4068 = vrot.lane.b32.xlu0 %v2830, 48
    %v4069 = vpop.permute.xlu0 %4068
    %4072 = vrot.lane.b32.xlu0 %v3130, 64
    %v4073 = vpop.permute.xlu0 %4072
    %4076 = vrot.lane.b32.xlu0 %v3434, 80
    %v4077 = vpop.permute.xlu0 %4076
    %4080 = vrot.lane.b32.xlu0 %v3738, 96
    %v4081 = vpop.permute.xlu0 %4080
    %4084 = vrot.lane.b32.xlu0 %v4041, 112
    %v4085 = vpop.permute.xlu0 %4084
    %v4087 = vsel %vm136, %v1918, %v4061
    %v4088 = vsel %vm321, %v4087, %v4065
    %vm4089 = vcmask 392192
    %v4090 = vsel %vm4089, %v4088, %v4069
    %vm4091 = vcmask 523264
    %v4092 = vsel %vm4091, %v4090, %v4073
    %vm4093 = vcmask 654336
    %v4094 = vsel %vm4093, %v4092, %v4077
    %vm4095 = vcmask 785408
    %v4096 = vsel %vm4095, %v4094, %v4081
    %vm4097 = vcmask 916480
    %v4098 = vsel %vm4097, %v4096, %v4085
    %4099 = vst [vmem:[%s15] sm:$0x3] %v4098
    %vm4100 = vcmask 7168
    %v4101 = vsel %vm4100, %v1935, %v2239
    %vm4102 = vcmask 15360
    %v4103 = vsel %vm4102, %v4101, %v2543
    %vm4104 = vcmask 23552
    %v4105 = vsel %vm4104, %v4103, %v2847
    %vm4106 = vcmask 31744
    %v4107 = vsel %vm4106, %v4105, %v3147
    %vm4108 = vcmask 39936
    %v4109 = vsel %vm4108, %v4107, %v3451
    %vm4110 = vcmask 48128
    %v4111 = vsel %vm4110, %v4109, %v3755
    %vm4112 = vcmask 56320
    %v4113 = vsel %vm4112, %v4111, %v4058
    %vm4114 = vcmask 58368
    %4115 = vst.msk [vmem:[#allocation11] sm:$0x3] %vm4114, %v4113
    // Predicated region
    $region74: #{gains_forward.1} parent=1 // pred_check
      _
    $region75: #{gains_forward.1} parent=1 // pred_check_branch
      %4117 = sbr.rel (0) target = $region77
    $region76: #{gains_forward.1} parent=1 // pred_region
      _
    $region77: #{gains_forward.1} parent=1 // pred_fallthru
      _
    // Predicated region
    $region78: #{gains_forward.1} parent=1 // pred_check
      _
    $region79: #{gains_forward.1} parent=1 // pred_check_branch
      %4119 = sbr.rel (0) target = $region81
    $region80: #{gains_forward.1} parent=1 // pred_region
      _
    $region81: #{gains_forward.1} parent=1 // pred_fallthru
      _
    // Predicated region
    $region82: #{gains_forward.1} parent=1 // pred_check
      _
    $region83: #{gains_forward.1} parent=1 // pred_check_branch
      %4121 = sbr.rel (0) target = $region85
    $region84: #{gains_forward.1} parent=1 // pred_region
      %s4123 = ssub.s32 32, 32
      %4124 = vsyncadd [#allocation5], %s4123
      %s4126 = sshll.u32 [#allocation11], 4
      %s4127 = int_to_ptr.vmem [resolvable:$true] %s4126
      %4129 = dma.vmem_to_hbm [thread:$0]  %s4127, 32, %s16, [#allocation5]
    $region85: #{gains_forward.1} parent=1 // pred_fallthru
      _
    // Predicated region
    $region86: #{gains_forward.1} parent=1 // pred_check
      _
    $region87: #{gains_forward.1} parent=1 // pred_check_branch
      %4131 = sbr.rel (0) target = $region89
    $region88: #{gains_forward.1} parent=1 // pred_region
      _
    $region89: #{gains_forward.1} parent=1 // pred_fallthru
      _
    // Predicated region
    $region90: #{gains_forward.1} parent=1 // pred_check
      _
    $region91: #{gains_forward.1} parent=1 // pred_check_branch
      %4133 = sbr.rel (0) target = $region93
    $region92: #{gains_forward.1} parent=1 // pred_region
      _
    $region93: #{gains_forward.1} parent=1 // pred_fallthru
      _
    // Predicated region
    $region94: #{gains_forward.1} parent=1 // pred_check
      _
    $region95: #{gains_forward.1} parent=1 // pred_check_branch
      %4135 = sbr.rel (0) target = $region97
    $region96: #{gains_forward.1} parent=1 // pred_region
      %4136 = dma.done [#allocation5], 32
    $region97: #{gains_forward.1} parent=1 // pred_fallthru
      _
    %4137 = vsyncpa [#allocation4], 1
    %4138 = vsyncpa [#allocation7], 1
    %4139 = vsyncpa [#allocation10], 1
    %4140 = vsyncpa [#allocation5], 1

</llo_original>
